<compile_context>
chip_gen: v7x
topology: tpu7x:2x2x1
jax: 0.10.0
libtpu: 0.0.40
codegen_flags: <defaults>
</compile_context>

<pallas_src>
import jax
import jax.numpy as jnp
from jax.experimental import pallas as pl
from jax.experimental.pallas import tpu as pltpu


def _round_up(n, m):
    return ((n + m - 1) // m) * m


# ----------------------------------------------------------------------------
# Pallas kernel: whole DeepFM forward for one batch tile (batch on lanes).
# ----------------------------------------------------------------------------
def deepfm_kernel(x_ref, wbig_ref, w1p_ref, w2p_ref, out_ref):
    xt = x_ref[...]                         # [F+1, TB]  (last row is constant 1)
    R1 = w1p_ref.shape[1]                   # 8-aligned flat-embedding block height
    H2p = w2p_ref.shape[0]                  # 8-aligned dnn output height
    rows = wbig_ref.shape[0]                # R1 + EB + 8

    # One fused front matmul (HIGHEST precision: feeds the cancellation-prone FM term).
    big = jnp.dot(wbig_ref[...], xt,
                  preferred_element_type=jnp.float32,
                  precision=jax.lax.Precision.HIGHEST)    # [rows, TB]

    flat = big[:R1]                         # flat embeds + ones row + zero pad (8-aligned)
    sum_emb = big[R1:rows - 8]              # per-dim embedding sums, zero padded (8-aligned)
    fm_first = big[rows - 8:rows]           # FM first-order in row 0, zero pad below

    # FM second-order: 0.5 * (sum_d (sum_i e_id)^2 - sum_{i,d} e_id^2)
    sq_of_sums = jnp.sum(sum_emb * sum_emb, axis=0, keepdims=True)        # [1, TB]
    sum_of_sqs = jnp.sum(flat * flat, axis=0, keepdims=True) - 1.0        # drop ones row
    fm_second = 0.5 * (sq_of_sums - sum_of_sqs)                           # [1, TB]

    # DNN tower (biases folded into the matmuls via the ones row carried in `flat`).
    h1 = jnp.maximum(
        jnp.dot(w1p_ref[...], flat, preferred_element_type=jnp.float32), 0.0)   # [H1p, TB]
    h2 = jnp.maximum(
        jnp.dot(w2p_ref[...], h1, preferred_element_type=jnp.float32), 0.0)     # [H2p, TB]

    out_ref[:H2p, :] = h2                                   # rows 0:H2 valid, rest zeros
    out_ref[H2p:, :] = fm_first + fm_second                 # row 0 valid, rest scratch


# ----------------------------------------------------------------------------
# Wrapper
# ----------------------------------------------------------------------------
def deepfm_pallas(x, kparams, dnn_out_dim, *, tb=1024):
    w_big, w1p, w2p = kparams
    B, F = x.shape
    H2 = dnn_out_dim
    H2p = w2p.shape[0]

    n_tiles = pl.cdiv(B, tb)
    Bp = n_tiles * tb

    # Batch on lanes, constant-1 row appended for bias folding, zero-padded tail tile.
    x_aug = jnp.concatenate([x, jnp.ones((B, 1), x.dtype)], axis=1).T     # [F+1, B]
    if Bp != B:
        x_aug = jnp.pad(x_aug, ((0, 0), (0, Bp - B)))

    const = lambda i: (0, 0)
    slab = pl.pallas_call(
        deepfm_kernel,
        out_shape=jax.ShapeDtypeStruct((H2p + 8, Bp), jnp.float32),
        grid_spec=pltpu.PrefetchScalarGridSpec(
            num_scalar_prefetch=0,
            grid=(n_tiles,),
            in_specs=[
                pl.BlockSpec((F + 1, tb), lambda i: (0, i)),   # x^T, batch tiled on lanes
                pl.BlockSpec(w_big.shape, const),              # fused front matrix
                pl.BlockSpec(w1p.shape, const),                # dnn layer 1 (+bias col)
                pl.BlockSpec(w2p.shape, const),                # dnn layer 2 (+bias col)
            ],
            out_specs=pl.BlockSpec((H2p + 8, tb), lambda i: (0, i)),
        ),
        compiler_params=pltpu.CompilerParams(
            dimension_semantics=("parallel",),       # 2 tiles shard across v7x's 2 TCs
            vmem_limit_bytes=32 * 1024 * 1024),      # explicit: catches OOM if scaled up
    )(x_aug, w_big, w1p, w2p)

    # Stitch [fm_first + fm_second, dnn_out] in the wrapper (pure layout plumbing).
    out = jnp.concatenate([slab[H2p:H2p + 1].T, slab[:H2].T], axis=1)     # [Bp, 1+H2]
    return out[:B]


# ----------------------------------------------------------------------------
# Deterministic parameter init (shapes follow the PyTorch __init__)
# ----------------------------------------------------------------------------
def init_params(key, feat_size, embedding_size, hidden_dims, num_continuous):
    D = feat_size - num_continuous
    E = embedding_size
    C = num_continuous
    ks = jax.random.split(key, 10)
    s = 0.1
    raw = {
        "emb": jax.random.normal(ks[0], (D, 2, E), jnp.float32) * s,    # D tables [2, E]
        "wc":  jax.random.normal(ks[1], (E * C, C), jnp.float32) * s,   # Linear(C, E*C)
        "bc":  jax.random.normal(ks[2], (E * C,), jnp.float32) * s,
        "wf":  jax.random.normal(ks[3], (1, feat_size), jnp.float32) * s,   # Linear(F, 1)
        "bf":  jax.random.normal(ks[4], (1,), jnp.float32) * s,
        "w1":  jax.random.normal(ks[5], (hidden_dims[0], feat_size * E), jnp.float32) * s,
        "b1":  jax.random.normal(ks[6], (hidden_dims[0],), jnp.float32) * s,
        "w2":  jax.random.normal(ks[7], (hidden_dims[1], hidden_dims[0]), jnp.float32) * s,
        "b2":  jax.random.normal(ks[8], (hidden_dims[1],), jnp.float32) * s,
        # TODO(synk): dnn_fc (Linear(hidden_dims[-1], 1)) is defined in __init__ but
        # never used in forward(), so it is intentionally not materialized here.
    }
    return raw


def pack_for_kernel(raw, feat_size, embedding_size, num_continuous):
    F = feat_size
    E = embedding_size
    C = num_continuous
    D = F - C
    FE = F * E
    K = F + 1                                          # +1: constant-1 column for biases
    # TODO(synk): num_discrete == 0 branch of forward() is not handled (D > 0 assumed).
    # Precondition: discrete features are exactly {0, 1} (nn.Embedding(2, E)), so the
    # lookup is the affine map e0 + idx * (e1 - e0).
    tables = raw["emb"]                                # [D, 2, E]
    e0 = tables[:, 0, :]                               # [D, E]
    diff = tables[:, 1, :] - tables[:, 0, :]           # [D, E]

    # ---- Block A: flat embeddings (feature-major / dim-minor) + ones row + pad ----
    w_disc = (diff[:, :, None] *
              jnp.eye(D, dtype=jnp.float32)[:, None, :]).reshape(D * E, D)
    w_embed = jnp.zeros((FE, K), jnp.float32)
    w_embed = w_embed.at[:D * E, :D].set(w_disc)
    w_embed = w_embed.at[D * E:, D:F].set(raw["wc"])
    b_embed = jnp.concatenate([e0.reshape(D * E), raw["bc"]])            # [FE]
    w_embed = w_embed.at[:, F].set(b_embed)                              # bias column

    ones_row = jnp.zeros((1, K), jnp.float32).at[0, F].set(1.0)          # emits 1.0 row
    R1 = _round_up(FE + 1, 8)
    blk_a = jnp.concatenate(
        [w_embed, ones_row, jnp.zeros((R1 - FE - 1, K), jnp.float32)], axis=0)

    # ---- Block B: per-embedding-dim sums for FM second order (8-aligned) ----------
    w_sum = w_embed.reshape(F, E, K).sum(axis=0)                         # [E, K]
    EB = _round_up(E, 8)
    blk_b = jnp.concatenate([w_sum, jnp.zeros((EB - E, K), jnp.float32)], axis=0)

    # ---- Block C: FM first-order row (8-aligned) -----------------------------------
    fm_row = jnp.concatenate([raw["wf"], raw["bf"].reshape(1, 1)], axis=1)   # [1, K]
    blk_c = jnp.concatenate([fm_row, jnp.zeros((7, K), jnp.float32)], axis=0)

    w_big = jnp.concatenate([blk_a, blk_b, blk_c], axis=0)               # [R1+EB+8, K]

    # ---- DNN layer 1: bias folded via the ones row of block A; emits its own ones --
    H1 = raw["w1"].shape[0]
    H1p = _round_up(H1 + 1, 8)
    w1p = jnp.zeros((H1p, R1), jnp.float32)
    w1p = w1p.at[:H1, :FE].set(raw["w1"])
    w1p = w1p.at[:H1, FE].set(raw["b1"])      # bias column hits the ones row of `flat`
    w1p = w1p.at[H1, FE].set(1.0)             # row H1 of h1 becomes relu(1) = 1

    # ---- DNN layer 2: bias folded via the ones row of h1 ---------------------------
    H2 = raw["w2"].shape[0]
    H2p = _round_up(H2, 8)
    w2p = jnp.zeros((H2p, H1p), jnp.float32)
    w2p = w2p.at[:H2, :H1].set(raw["w2"])
    w2p = w2p.at[:H2, H1].set(raw["b2"])

    return w_big, w1p, w2p


# ----------------------------------------------------------------------------
# Pure-JAX reference that mirrors the PyTorch forward literally
# ----------------------------------------------------------------------------
def deepfm_ref(x, raw, feat_size, embedding_size, num_continuous):
    D = feat_size - num_continuous
    E = embedding_size
    B = x.shape[0]
    idx = x[:, :D].astype(jnp.int32)
    cont = x[:, D:]
    disc = jnp.stack([raw["emb"][i][idx[:, i]] for i in range(D)], axis=1)   # [B, D, E]
    cont_emb = (cont @ raw["wc"].T + raw["bc"]).reshape(B, num_continuous, E)
    all_emb = jnp.concatenate([disc, cont_emb], axis=1)                      # [B, F, E]
    fm_first = x @ raw["wf"].T + raw["bf"]
    terms = []
    n = all_emb.shape[1]
    for i in range(n):
        for j in range(i + 1, n):
            terms.append(jnp.sum(all_emb[:, i] * all_emb[:, j], axis=1, keepdims=True))
    fm_second = jnp.sum(jnp.concatenate(terms, axis=1), axis=1, keepdims=True)
    flat = all_emb.reshape(B, -1)
    h1 = jax.nn.relu(flat @ raw["w1"].T + raw["b1"])
    h2 = jax.nn.relu(h1 @ raw["w2"].T + raw["b2"])
    return jnp.concatenate([fm_first + fm_second, h2], axis=1)


# ----------------------------------------------------------------------------
if __name__ == "__main__":
    feat_size = 6
    embedding_size = 4
    hidden_dims = (64, 32)
    num_continuous = 2
    num_discrete = feat_size - num_continuous
    B = 2000          # NOT a multiple of tb -> exercises the zero-padded tail tile
    tb = 1024         # 2 grid steps: amortizes per-step overhead, still feeds 2 v7x TCs

    key = jax.random.PRNGKey(0)
    k_disc, k_cont, k_params = jax.random.split(key, 3)

    # Discrete features are 0/1 floats (the module calls .long() on them),
    # continuous features are gaussian.
    disc = jax.random.bernoulli(k_disc, 0.5, (B, num_discrete)).astype(jnp.float32)
    cont = jax.random.normal(k_cont, (B, num_continuous), jnp.float32)
    x = jnp.concatenate([disc, cont], axis=1)                     # [B, feat_size]
    # Precondition of the affine-select embedding trick: discrete values in {0, 1}.
    assert bool(jnp.all((disc == 0.0) | (disc == 1.0)))

    raw = init_params(k_params, feat_size, embedding_size, hidden_dims, num_continuous)
    kparams = pack_for_kernel(raw, feat_size, embedding_size, num_continuous)

    out = deepfm_pallas(x, kparams, hidden_dims[-1], tb=tb)
    out = jax.block_until_ready(out)

    ref = deepfm_ref(x, raw, feat_size, embedding_size, num_continuous)
    assert out.shape == (B, 1 + hidden_dims[-1]), out.shape
    # Tolerance accounts for default (single-pass bf16) MXU precision on the two DNN
    # matmuls; the FM path now uses HIGHEST precision and an exact identity.
    if not jnp.allclose(out, ref, atol=1e-2, rtol=1e-2):
        raise AssertionError("Pallas DeepFM output mismatch vs reference")

    print("KERNEL_OK")
</pallas_src>

<mosaic_0001>
module attributes {stable_mosaic.version = 11 : i64} {
  func.func @deepfm_kernel(%arg0: i32, %arg1: memref<7x1024xf32, #tpu.memory_space<vmem>>, %arg2: memref<48x7xf32, #tpu.memory_space<vmem>>, %arg3: memref<72x32xf32, #tpu.memory_space<vmem>>, %arg4: memref<32x72xf32, #tpu.memory_space<vmem>>, %arg5: memref<40x1024xf32, #tpu.memory_space<vmem>>) attributes {dimension_semantics = [#tpu.dimension_semantics<parallel>], iteration_bounds = array<i64: 2>, scalar_prefetch = 0 : i64, scratch_operands = 0 : i64, tpu.core_type = #tpu.core_type<tc>, window_params = [{transform_indices = @transform_0, window_bounds = array<i64: 7, 1024>}, {pipeline_mode = #tpu.pipeline_mode<synchronous>, transform_indices = @transform_1, window_bounds = array<i64: 48, 7>}, {pipeline_mode = #tpu.pipeline_mode<synchronous>, transform_indices = @transform_2, window_bounds = array<i64: 72, 32>}, {pipeline_mode = #tpu.pipeline_mode<synchronous>, transform_indices = @transform_3, window_bounds = array<i64: 32, 72>}, {transform_indices = @transform_4, window_bounds = array<i64: 40, 1024>}]} {
    %c0 = arith.constant 0 : index
    %c0_0 = arith.constant 0 : index
    %0 = vector.load %arg1[%c0, %c0_0] : memref<7x1024xf32, #tpu.memory_space<vmem>>, vector<7x1024xf32>
    %c0_1 = arith.constant 0 : index
    %c0_2 = arith.constant 0 : index
    %1 = vector.load %arg2[%c0_1, %c0_2] : memref<48x7xf32, #tpu.memory_space<vmem>>, vector<48x7xf32>
    %cst = arith.constant dense<0.000000e+00> : vector<48x1024xf32>
    %2 = tpu.matmul %1, %0, %cst {dimension_numbers = #tpu.dot_dimension_numbers<[1], [0], [0], [1], [0, 0, 1, 1], [], []>, precision = #tpu.contract_precision<fp32>} : vector<48x7xf32>, vector<7x1024xf32>, vector<48x1024xf32> -> vector<48x1024xf32>
    %3 = vector.extract_strided_slice %2 {offsets = [0, 0], sizes = [32, 1024], strides = [1, 1]} : vector<48x1024xf32> to vector<32x1024xf32>
    %4 = vector.extract_strided_slice %2 {offsets = [32, 0], sizes = [8, 1024], strides = [1, 1]} : vector<48x1024xf32> to vector<8x1024xf32>
    %5 = vector.extract_strided_slice %2 {offsets = [40, 0], sizes = [8, 1024], strides = [1, 1]} : vector<48x1024xf32> to vector<8x1024xf32>
    %6 = arith.mulf %4, %4 : vector<8x1024xf32>
    %cst_3 = arith.constant dense<0.000000e+00> : vector<1024xf32>
    %7 = vector.multi_reduction <add>, %6, %cst_3 [0] : vector<8x1024xf32> to vector<1024xf32>
    %8 = vector.shape_cast %7 : vector<1024xf32> to vector<1x1024xf32>
    %9 = arith.mulf %3, %3 : vector<32x1024xf32>
    %cst_4 = arith.constant dense<0.000000e+00> : vector<1024xf32>
    %10 = vector.multi_reduction <add>, %9, %cst_4 [0] : vector<32x1024xf32> to vector<1024xf32>
    %11 = vector.shape_cast %10 : vector<1024xf32> to vector<1x1024xf32>
    %cst_5 = arith.constant 1.000000e+00 : f32
    %12 = vector.broadcast %cst_5 : f32 to vector<1x1024xf32>
    %13 = arith.subf %11, %12 : vector<1x1024xf32>
    %14 = arith.subf %8, %13 : vector<1x1024xf32>
    %cst_6 = arith.constant 5.000000e-01 : f32
    %15 = vector.broadcast %cst_6 : f32 to vector<1x1024xf32>
    %16 = arith.mulf %15, %14 : vector<1x1024xf32>
    %c0_7 = arith.constant 0 : index
    %c0_8 = arith.constant 0 : index
    %17 = vector.load %arg3[%c0_7, %c0_8] : memref<72x32xf32, #tpu.memory_space<vmem>>, vector<72x32xf32>
    %cst_9 = arith.constant dense<0.000000e+00> : vector<72x1024xf32>
    %18 = tpu.matmul %17, %3, %cst_9 {dimension_numbers = #tpu.dot_dimension_numbers<[1], [0], [0], [1], [0, 0, 1, 1], [], []>} : vector<72x32xf32>, vector<32x1024xf32>, vector<72x1024xf32> -> vector<72x1024xf32>
    %cst_10 = arith.constant 0.000000e+00 : f32
    %19 = vector.broadcast %cst_10 : f32 to vector<72x1024xf32>
    %20 = arith.maximumf %18, %19 : vector<72x1024xf32>
    %c0_11 = arith.constant 0 : index
    %c0_12 = arith.constant 0 : index
    %21 = vector.load %arg4[%c0_11, %c0_12] : memref<32x72xf32, #tpu.memory_space<vmem>>, vector<32x72xf32>
    %cst_13 = arith.constant dense<0.000000e+00> : vector<32x1024xf32>
    %22 = tpu.matmul %21, %20, %cst_13 {dimension_numbers = #tpu.dot_dimension_numbers<[1], [0], [0], [1], [0, 0, 1, 1], [], []>} : vector<32x72xf32>, vector<72x1024xf32>, vector<32x1024xf32> -> vector<32x1024xf32>
    %cst_14 = arith.constant 0.000000e+00 : f32
    %23 = vector.broadcast %cst_14 : f32 to vector<32x1024xf32>
    %24 = arith.maximumf %22, %23 : vector<32x1024xf32>
    %c0_15 = arith.constant 0 : index
    %c0_16 = arith.constant 0 : index
    %25 = vector.load %arg5[%c0_15, %c0_16] : memref<40x1024xf32, #tpu.memory_space<vmem>>, vector<32x1024xf32>
    tpu.vector_store %arg5[%c0_15, %c0_16], %24 {strides = array<i32>} : memref<40x1024xf32, #tpu.memory_space<vmem>>, vector<32x1024xf32>,
    %26 = vector.broadcast %16 : vector<1x1024xf32> to vector<8x1024xf32>
    %27 = arith.addf %5, %26 : vector<8x1024xf32>
    %c32 = arith.constant 32 : index
    %c0_17 = arith.constant 0 : index
    %28 = vector.load %arg5[%c32, %c0_17] : memref<40x1024xf32, #tpu.memory_space<vmem>>, vector<8x1024xf32>
    tpu.vector_store %arg5[%c32, %c0_17], %27 {strides = array<i32>} : memref<40x1024xf32, #tpu.memory_space<vmem>>, vector<8x1024xf32>,
    return
  }
  func.func @transform_0(%arg0: i32) -> (i32, i32) {
    %c0_i32 = arith.constant 0 : i32
    %c0_i32_0 = arith.constant 0 : i32
    return %c0_i32, %arg0 : i32, i32
  }
  func.func @transform_1(%arg0: i32) -> (i32, i32) {
    %c0_i32 = arith.constant 0 : i32
    %c0_i32_0 = arith.constant 0 : i32
    %c0_i32_1 = arith.constant 0 : i32
    return %c0_i32, %c0_i32_0 : i32, i32
  }
  func.func @transform_2(%arg0: i32) -> (i32, i32) {
    %c0_i32 = arith.constant 0 : i32
    %c0_i32_0 = arith.constant 0 : i32
    %c0_i32_1 = arith.constant 0 : i32
    return %c0_i32, %c0_i32_0 : i32, i32
  }
  func.func @transform_3(%arg0: i32) -> (i32, i32) {
    %c0_i32 = arith.constant 0 : i32
    %c0_i32_0 = arith.constant 0 : i32
    %c0_i32_1 = arith.constant 0 : i32
    return %c0_i32, %c0_i32_0 : i32, i32
  }
  func.func @transform_4(%arg0: i32) -> (i32, i32) {
    %c0_i32 = arith.constant 0 : i32
    %c0_i32_0 = arith.constant 0 : i32
    return %c0_i32, %arg0 : i32, i32
  }
}

</mosaic_0001>

<llo_original>
// kernel: tpu_custom_call.1
$region0: #{tpu_custom_call.1}
  #allocation0 [shape = 'u32[]', space=smem, size = 0x4, offset = 0x4, fixed_abs, tag = 'smem constant byte address 0x4 - core index']
  #allocation1 [shape = 'u32[144,128]{1,0:T(1,128)}', space=vmem, size = 0x12000, scoped, tag = 'internal scratch']
  %s0 = inlined_call_operand.vmem [shape: f32[7,2048], index: 0, kind: input, shape index: {}]
  %s1 = inlined_call_operand.vmem [shape: f32[48,7], index: 1, kind: input, shape index: {}]
  %s2 = inlined_call_operand.vmem [shape: f32[72,32], index: 2, kind: input, shape index: {}]
  %s3 = inlined_call_operand.vmem [shape: f32[32,72], index: 3, kind: input, shape index: {}]
  %s4 = inlined_call_operand.hbm [shape: f32[40,2048], index: 4, kind: output, shape index: {}]
  %s5 = sld [smem:[#allocation0]]
  $region49: #{tpu_custom_call.1} parent=0
    _
  %s7 = ssub.s32 1, %s5
  %s8 = scalar_select 0, %s7, %s5
  $region1: #{tpu_custom_call.1} parent=0
    #allocation2 [shape = 'u8[327680]{0}', space=vmem, size = 0x50000, scoped, tag = 'output window, operand 0']
    #allocation3 [shape = 's32[2]{0}', space=sflag, size = 0x8, scoped, tag = 'scoped memory for tpu_custom_call.1']
    %9 = vsyncpa [#allocation3], 0
    %s10 = scalar_lea.sflag [#allocation3], 1
    %11 = vsyncpa %s10, 0
    loop: start=0, step=1, limit=4
    $region2: #{tpu_custom_call.1} parent=1 // loop_pre_header
      _
    $region3: #{tpu_custom_call.1} parent=1 // loop_header
      %s13 = sphi 0, %s17
      %p14 = scmp.ge.s32.totalorder %s13, 4
      %s23 = sphi 0, %s25
      %s26 = sphi 0, %s23
      %s27 = sphi 0, %s26
      %s43 = sphi 0, %s27
      %s47 = sphi 0, %s47
      %s49 = sphi 0, %s47
      %s50 = sphi 0, %s49
      %s64 = sphi 0, %s50
      %s68 = sphi 0, %s68
      %s70 = sphi 0, %s68
      %s71 = sphi 0, %s70
      %s85 = sphi 0, %s71
      %s89 = sphi 0, %s89
      %s91 = sphi 0, %s89
      %s92 = sphi 0, %s91
      %s106 = sphi 0, %s92
      %s112 = sphi 0, %s114
      %s115 = sphi 0, %s112
      %s116 = sphi 0, %s115
      %s132 = sphi 0, %s116
    $region4: #{tpu_custom_call.1} parent=1 // loop_header_branch
      %16 = sbr.rel (%p14) target = $region8
    $region5: #{tpu_custom_call.1} parent=1 // loop_body
      %s18 = ssub.s32 %s13, 1
      %s19 = ssub.s32 %s13, 2
      %s20 = sadd.s32 %s13, 1
      %s21 = ssub.s32 %s13, %s20
      %p22 = scmp.eq.s32.totalorder %s21, 0
      %s24 = sadd.s32 %s23, 1
      %s25 = scalar_select %p22, %s23, %s24
      %p28 = pneg %p22
      %p29 = scmp.eq.s32.totalorder %s13, 1
      %p30 = por %p28, %p29
      %p31 = scmp.ne.s32.totalorder %s23, %s26
      %p32 = scmp.eq.s32.totalorder %s13, 0
      %p33 = por %p31, %p32
      %p34 = scmp.ne.s32.totalorder %s23, %s26
      %p35 = scmp.eq.s32.totalorder %s18, 1
      %p36 = por %p34, %p35
      %p37 = scmp.ne.s32.totalorder %s26, %s27
      %p38 = scmp.eq.s32.totalorder %s18, 0
      %p39 = por %p37, %p38
      %p40 = scmp.ne.s32.totalorder %s26, %s27
      %p41 = scmp.eq.s32.totalorder %s19, 1
      %p42 = por %p40, %p41
      %p44 = scmp.ne.s32.totalorder %s27, %s43
      %p45 = scmp.eq.s32.totalorder %s19, 0
      %p46 = por %p44, %p45
      %s48 = sadd.s32 %s47, 1
      %p51 = scmp.eq.s32.totalorder %s13, 1
      %p52 = scmp.ne.s32.totalorder %s47, %s49
      %p53 = scmp.eq.s32.totalorder %s13, 0
      %p54 = por %p52, %p53
      %p55 = scmp.ne.s32.totalorder %s47, %s49
      %p56 = scmp.eq.s32.totalorder %s18, 1
      %p57 = por %p55, %p56
      %p58 = scmp.ne.s32.totalorder %s49, %s50
      %p59 = scmp.eq.s32.totalorder %s18, 0
      %p60 = por %p58, %p59
      %p61 = scmp.ne.s32.totalorder %s49, %s50
      %p62 = scmp.eq.s32.totalorder %s19, 1
      %p63 = por %p61, %p62
      %p65 = scmp.ne.s32.totalorder %s50, %s64
      %p66 = scmp.eq.s32.totalorder %s19, 0
      %p67 = por %p65, %p66
      %s69 = sadd.s32 %s68, 1
      %p72 = scmp.eq.s32.totalorder %s13, 1
      %p73 = scmp.ne.s32.totalorder %s68, %s70
      %p74 = scmp.eq.s32.totalorder %s13, 0
      %p75 = por %p73, %p74
      %p76 = scmp.ne.s32.totalorder %s68, %s70
      %p77 = scmp.eq.s32.totalorder %s18, 1
      %p78 = por %p76, %p77
      %p79 = scmp.ne.s32.totalorder %s70, %s71
      %p80 = scmp.eq.s32.totalorder %s18, 0
      %p81 = por %p79, %p80
      %p82 = scmp.ne.s32.totalorder %s70, %s71
      %p83 = scmp.eq.s32.totalorder %s19, 1
      %p84 = por %p82, %p83
      %p86 = scmp.ne.s32.totalorder %s71, %s85
      %p87 = scmp.eq.s32.totalorder %s19, 0
      %p88 = por %p86, %p87
      %s90 = sadd.s32 %s89, 1
      %p93 = scmp.eq.s32.totalorder %s13, 1
      %p94 = scmp.ne.s32.totalorder %s89, %s91
      %p95 = scmp.eq.s32.totalorder %s13, 0
      %p96 = por %p94, %p95
      %p97 = scmp.ne.s32.totalorder %s89, %s91
      %p98 = scmp.eq.s32.totalorder %s18, 1
      %p99 = por %p97, %p98
      %p100 = scmp.ne.s32.totalorder %s91, %s92
      %p101 = scmp.eq.s32.totalorder %s18, 0
      %p102 = por %p100, %p101
      %p103 = scmp.ne.s32.totalorder %s91, %s92
      %p104 = scmp.eq.s32.totalorder %s19, 1
      %p105 = por %p103, %p104
      %p107 = scmp.ne.s32.totalorder %s92, %s106
      %p108 = scmp.eq.s32.totalorder %s19, 0
      %p109 = por %p107, %p108
      %s110 = ssub.s32 %s13, %s20
      %p111 = scmp.eq.s32.totalorder %s110, 0
      %s113 = sadd.s32 %s112, 1
      %s114 = scalar_select %p111, %s112, %s113
      %p117 = pneg %p111
      %p118 = scmp.eq.s32.totalorder %s13, 1
      %p119 = por %p117, %p118
      %p120 = scmp.ne.s32.totalorder %s112, %s115
      %p121 = scmp.eq.s32.totalorder %s13, 0
      %p122 = por %p120, %p121
      %p123 = scmp.ne.s32.totalorder %s112, %s115
      %p124 = scmp.eq.s32.totalorder %s18, 1
      %p125 = por %p123, %p124
      %p126 = scmp.ne.s32.totalorder %s115, %s116
      %p127 = scmp.eq.s32.totalorder %s18, 0
      %p128 = por %p126, %p127
      %p129 = scmp.ne.s32.totalorder %s115, %s116
      %p130 = scmp.eq.s32.totalorder %s19, 1
      %p131 = por %p129, %p130
      %p133 = scmp.ne.s32.totalorder %s116, %s132
      %p134 = scmp.eq.s32.totalorder %s19, 0
      %p135 = por %p133, %p134
      %p136 = scmp.le.s32.totalorder 1, %s13
      %p137 = scmp.lt.s32.totalorder %s13, 3
      %p138 = pnand %p136, %p137
      %p139 = pneg %p138
      // Predicated region
      $region9: #{tpu_custom_call.1} parent=5 // pred_check
        _
      $region10: #{tpu_custom_call.1} parent=5 // pred_check_branch
        %141 = sbr.rel (%p138) target = $region12
      $region11: #{tpu_custom_call.1} parent=5 // pred_region
        %s142 = ssub.s32 %s13, 1
        // Predicated region
        $region13: #{tpu_custom_call.1} parent=11 // pred_check
          %p143 = pneg %p60
        $region14: #{tpu_custom_call.1} parent=11 // pred_check_branch
          %145 = sbr.rel (%p143) target = $region16
        $region15: #{tpu_custom_call.1} parent=11 // pred_region
          _
        $region16: #{tpu_custom_call.1} parent=11 // pred_fallthru
          _
        // Predicated region
        $region17: #{tpu_custom_call.1} parent=11 // pred_check
          %p146 = pneg %p81
        $region18: #{tpu_custom_call.1} parent=11 // pred_check_branch
          %148 = sbr.rel (%p146) target = $region20
        $region19: #{tpu_custom_call.1} parent=11 // pred_region
          _
        $region20: #{tpu_custom_call.1} parent=11 // pred_fallthru
          _
        // Predicated region
        $region21: #{tpu_custom_call.1} parent=11 // pred_check
          %p149 = pneg %p102
        $region22: #{tpu_custom_call.1} parent=11 // pred_check_branch
          %151 = sbr.rel (%p149) target = $region24
        $region23: #{tpu_custom_call.1} parent=11 // pred_region
          _
        $region24: #{tpu_custom_call.1} parent=11 // pred_fallthru
          _
      $region12: #{tpu_custom_call.1} parent=5 // pred_fallthru
        _
      %p152 = scmp.lt.s32.totalorder %s13, 2
      // Predicated region
      $region25: #{tpu_custom_call.1} parent=5 // pred_check
        %p153 = pneg %p152
      $region26: #{tpu_custom_call.1} parent=5 // pred_check_branch
        %155 = sbr.rel (%p153) target = $region28
      $region27: #{tpu_custom_call.1} parent=5 // pred_region
        // Predicated region
        $region29: #{tpu_custom_call.1} parent=27 // pred_check
          %p156 = pneg %p33
        $region30: #{tpu_custom_call.1} parent=27 // pred_check_branch
          %158 = sbr.rel (%p156) target = $region32
        $region31: #{tpu_custom_call.1} parent=27 // pred_region
          %s159 = smul.u32 8, %s13
          %p160 = scmp.lt.s32.totalorder %s159, 15
          %s161 = scalar_select %p160, %s159, 15
          %s162 = smul.addr %s161, 8
          %s163 = scalar_lea.vmem %s0, %s162
          %s164 = smul.u32 8, %s13
        $region32: #{tpu_custom_call.1} parent=27 // pred_fallthru
          _
      $region28: #{tpu_custom_call.1} parent=5 // pred_fallthru
        _
      %p165 = scmp.le.s32.totalorder 1, %s13
      %p166 = scmp.lt.s32.totalorder %s13, 3
      %p167 = pnand %p165, %p166
      %p168 = pneg %p167
      // Predicated region
      $region33: #{tpu_custom_call.1} parent=5 // pred_check
        _
      $region34: #{tpu_custom_call.1} parent=5 // pred_check_branch
        %170 = sbr.rel (%p167) target = $region36
      $region35: #{tpu_custom_call.1} parent=5 // pred_region
        %s171 = ssub.s32 %s13, 1
        %s172 = smul.u32 8, %s18
        %p173 = scmp.lt.s32.totalorder %s172, 15
        %s174 = scalar_select %p173, %s172, 15
        %s175 = smul.addr %s174, 8
        %s176 = scalar_lea.vmem %s0, %s175
        %p177 = pneg %p39
        %p178 = pneg %p36
        %p179 = pneg %p60
        %p180 = pneg %p57
        %p181 = pneg %p81
        %p182 = pneg %p78
        %p183 = pneg %p102
        %p184 = pneg %p99
        %p185 = pneg %p128
        %p186 = pneg %p125
        %s187 = sand.u32 %s115, 1
        %s188 = scalar_lea.sflag [#allocation3], %s187
        %s189 = sand.u32 %s115, 1
        %s190 = smul.addr %s189, 320
        %s191 = scalar_lea.vmem [#allocation2], %s190
        %s192 = smul.u32 8, %s18
        %p193 = scmp.lt.s32.totalorder %s192, 15
        %s194 = scalar_select %p193, %s192, 15
        %s195 = smul.addr %s194, 8
        %s196 = scalar_lea.vmem %s0, %s195
        %s197 = smul.u32 8, %s18
        %s198 = smul.u32 8, %s18
        %v199 = vld [vmem:[%s196] sm:$0x7f]
        %v200 = vld [vmem:[%s196 + $0x8] sm:$0x7f]
        %v201 = vld [vmem:[%s196 + $0x10] sm:$0x7f]
        %v202 = vld [vmem:[%s196 + $0x18] sm:$0x7f]
        %v203 = vld [vmem:[%s196 + $0x20] sm:$0x7f]
        %v204 = vld [vmem:[%s196 + $0x28] sm:$0x7f]
        %v205 = vld [vmem:[%s196 + $0x30] sm:$0x7f]
        %v206 = vld [vmem:[%s196 + $0x38] sm:$0x7f]
        %v207 = vld [vmem:[%s1] sm:$0xff]
        %v208 = vld [vmem:[%s1 + $0x8] sm:$0xff]
        %v209 = vld [vmem:[%s1 + $0x10] sm:$0xff]
        %v210 = vld [vmem:[%s1 + $0x18] sm:$0xff]
        %v211 = vld [vmem:[%s1 + $0x20] sm:$0xff]
        %v212 = vld [vmem:[%s1 + $0x28] sm:$0xff]
        %vm213 = vcmask 56320
        %v215 = vsel %vm213, %v207, 0
        %v218 = vsel %vm213, %v208, 0
        %v221 = vsel %vm213, %v209, 0
        %v224 = vsel %vm213, %v210, 0
        %v227 = vsel %vm213, %v211, 0
        %v230 = vsel %vm213, %v212, 0
        %vm232 = vcmask 1046528
        %v234 = vsel %vm232, %v199, 0
        %v237 = vsel %vm232, %v200, 0
        %v240 = vsel %vm232, %v201, 0
        %v243 = vsel %vm232, %v202, 0
        %v246 = vsel %vm232, %v203, 0
        %v249 = vsel %vm232, %v204, 0
        %v252 = vsel %vm232, %v205, 0
        %v255 = vsel %vm232, %v206, 0
        %v257 = vand.u32 %v237, 4294901760
        %258 = vmatprep.subr.mxu0 %v257
        %v259 = vand.u32 %v234, 4294901760
        %260 = vmatpush1.msra.mxu0 %v259
        %261 = vmatprep.subr.mxu0 0.0
        %262 = vmatpush1.msra.mxu0 0.0
        %263 = vmatprep.subr.mxu0 0.0
        %264 = vmatpush1.msra.mxu0 0.0
        %265 = vmatprep.subr.mxu0 0.0
        %266 = vmatpush1.msra.mxu0 0.0
        %267 = vmatprep.subr.mxu0 0.0
        %268 = vmatpush1.msra.mxu0 0.0
        %269 = vmatprep.subr.mxu0 0.0
        %270 = vmatpush1.msra.mxu0 0.0
        %271 = vmatprep.subr.mxu0 0.0
        %272 = vmatpush1.msra.mxu0 0.0
        %273 = vmatprep.subr.mxu0 0.0
        %274 = vmatpush1.msra.mxu0 0.0
        %275 = vmatprep.subr.mxu0 0.0
        %276 = vmatpush1.msra.mxu0 0.0
        %277 = vmatprep.subr.mxu0 0.0
        %278 = vmatpush1.msra.mxu0 0.0
        %279 = vmatprep.subr.mxu0 0.0
        %280 = vmatpush1.msra.mxu0 0.0
        %281 = vmatprep.subr.mxu0 0.0
        %282 = vmatpush1.msra.mxu0 0.0
        %283 = vmatprep.subr.mxu0 0.0
        %284 = vmatpush1.msra.mxu0 0.0
        %285 = vmatprep.subr.mxu0 0.0
        %286 = vmatpush1.msra.mxu0 0.0
        %287 = vmatprep.subr.mxu0 0.0
        %288 = vmatpush1.msra.mxu0 0.0
        %289 = vmatprep.subr.mxu0 0.0
        %290 = vmatpush1.msra.mxu0 0.0
        %291 = vmatprep.subr.mxu0 0.0
        %292 = vmatpush1.msra.mxu0 0.0
        %293 = vmatprep.subr.mxu0 0.0
        %294 = vmatpush1.msra.mxu0 0.0
        %295 = vmatprep.subr.mxu0 0.0
        %296 = vmatpush1.msra.mxu0 0.0
        %297 = vmatprep.subr.mxu0 0.0
        %298 = vmatpush1.msra.mxu0 0.0
        %299 = vmatprep.subr.mxu0 0.0
        %300 = vmatpush1.msra.mxu0 0.0
        %301 = vmatprep.subr.mxu0 0.0
        %302 = vmatpush1.msra.mxu0 0.0
        %303 = vmatprep.subr.mxu0 0.0
        %304 = vmatpush1.msra.mxu0 0.0
        %305 = vmatprep.subr.mxu0 0.0
        %306 = vmatpush1.msra.mxu0 0.0
        %307 = vmatprep.subr.mxu0 0.0
        %308 = vmatpush1.msra.mxu0 0.0
        %309 = vmatprep.subr.mxu0 0.0
        %310 = vmatpush1.msra.mxu0 0.0
        %311 = vmatprep.subr.mxu0 0.0
        %312 = vmatpush1.msra.mxu0 0.0
        %313 = vmatprep.subr.mxu0 0.0
        %314 = vmatpush1.msra.mxu0 0.0
        %315 = vmatprep.subr.mxu0 0.0
        %316 = vmatpush1.msra.mxu0 0.0
        %317 = vmatprep.subr.mxu0 0.0
        %318 = vmatpush1.msra.mxu0 0.0
        %319 = vmatprep.subr.mxu0 0.0
        %320 = vmatpush1.msra.mxu0 0.0
        %321 = vmatprep.subr.mxu0 0.0
        %322 = vmatpush1.msra.mxu0 0.0
        %323 = vmatprep.mubr.f32.mxu0 0.0
        %v324 = vand.u32 %v215, 4294901760
        %v325 = vsub.f32 %v215, %v324
        %v326 = vand.u32 %v325, 4294901760
        %v327 = vsub.f32 %v325, %v326
        %v328 = vand.u32 %v327, 4294901760
        %329 = vmatmul.mubr.f32.gmra.mrb[0].mxu0 %v328
        %v330 = vpop.f32.mrb[0].mxu0
        %v331 = vadd.f32 0.0, %v330
        %v332 = vpop.f32.mrb[0].mxu0
        %v333 = vadd.f32 0.0, %v332
        %334 = vmatprep.mubr.f32.mxu0 0.0
        %v335 = vand.u32 %v218, 4294901760
        %v336 = vsub.f32 %v218, %v335
        %v337 = vand.u32 %v336, 4294901760
        %v338 = vsub.f32 %v336, %v337
        %v339 = vand.u32 %v338, 4294901760
        %340 = vmatmul.mubr.f32.gmra.mrb[0].mxu0 %v339
        %v341 = vpop.f32.mrb[0].mxu0
        %v342 = vadd.f32 0.0, %v341
        %v343 = vpop.f32.mrb[0].mxu0
        %v344 = vadd.f32 0.0, %v343
        %345 = vmatprep.mubr.f32.mxu0 0.0
        %v346 = vand.u32 %v221, 4294901760
        %v347 = vsub.f32 %v221, %v346
        %v348 = vand.u32 %v347, 4294901760
        %v349 = vsub.f32 %v347, %v348
        %v350 = vand.u32 %v349, 4294901760
        %351 = vmatmul.mubr.f32.gmra.mrb[0].mxu0 %v350
        %v352 = vpop.f32.mrb[0].mxu0
        %v353 = vadd.f32 0.0, %v352
        %v354 = vpop.f32.mrb[0].mxu0
        %v355 = vadd.f32 0.0, %v354
        %356 = vmatprep.mubr.f32.mxu0 0.0
        %v357 = vand.u32 %v224, 4294901760
        %v358 = vsub.f32 %v224, %v357
        %v359 = vand.u32 %v358, 4294901760
        %v360 = vsub.f32 %v358, %v359
        %v361 = vand.u32 %v360, 4294901760
        %362 = vmatmul.mubr.f32.gmra.mrb[0].mxu0 %v361
        %v363 = vpop.f32.mrb[0].mxu0
        %v364 = vadd.f32 0.0, %v363
        %v365 = vpop.f32.mrb[0].mxu0
        %v366 = vadd.f32 0.0, %v365
        %367 = vmatprep.mubr.f32.mxu0 0.0
        %v368 = vand.u32 %v227, 4294901760
        %v369 = vsub.f32 %v227, %v368
        %v370 = vand.u32 %v369, 4294901760
        %v371 = vsub.f32 %v369, %v370
        %v372 = vand.u32 %v371, 4294901760
        %373 = vmatmul.mubr.f32.gmra.mrb[0].mxu0 %v372
        %v374 = vpop.f32.mrb[0].mxu0
        %v375 = vadd.f32 0.0, %v374
        %v376 = vpop.f32.mrb[0].mxu0
        %v377 = vadd.f32 0.0, %v376
        %378 = vmatprep.mubr.f32.mxu0 0.0
        %v379 = vand.u32 %v230, 4294901760
        %v380 = vsub.f32 %v230, %v379
        %v381 = vand.u32 %v380, 4294901760
        %v382 = vsub.f32 %v380, %v381
        %v383 = vand.u32 %v382, 4294901760
        %384 = vmatmul.mubr.f32.gmra.mrb[0].mxu0 %v383
        %v385 = vpop.f32.mrb[0].mxu0
        %v386 = vadd.f32 0.0, %v385
        %v387 = vpop.f32.mrb[0].mxu0
        %v388 = vadd.f32 0.0, %v387
        %389 = vdwg.mxu0
        %v390 = vand.u32 %v237, 4294901760
        %v391 = vsub.f32 %v237, %v390
        %v392 = vand.u32 %v391, 4294901760
        %v393 = vsub.f32 %v391, %v392
        %v394 = vand.u32 %v393, 4294901760
        %395 = vmatprep.subr.mxu0 %v394
        %v396 = vand.u32 %v234, 4294901760
        %v397 = vsub.f32 %v234, %v396
        %v398 = vand.u32 %v397, 4294901760
        %v399 = vsub.f32 %v397, %v398
        %v400 = vand.u32 %v399, 4294901760
        %401 = vmatpush1.msra.mxu0 %v400
        %402 = vmatprep.subr.mxu0 0.0
        %403 = vmatpush1.msra.mxu0 0.0
        %404 = vmatprep.subr.mxu0 0.0
        %405 = vmatpush1.msra.mxu0 0.0
        %406 = vmatprep.subr.mxu0 0.0
        %407 = vmatpush1.msra.mxu0 0.0
        %408 = vmatprep.subr.mxu0 0.0
        %409 = vmatpush1.msra.mxu0 0.0
        %410 = vmatprep.subr.mxu0 0.0
        %411 = vmatpush1.msra.mxu0 0.0
        %412 = vmatprep.subr.mxu0 0.0
        %413 = vmatpush1.msra.mxu0 0.0
        %414 = vmatprep.subr.mxu0 0.0
        %415 = vmatpush1.msra.mxu0 0.0
        %416 = vmatprep.subr.mxu0 0.0
        %417 = vmatpush1.msra.mxu0 0.0
        %418 = vmatprep.subr.mxu0 0.0
        %419 = vmatpush1.msra.mxu0 0.0
        %420 = vmatprep.subr.mxu0 0.0
        %421 = vmatpush1.msra.mxu0 0.0
        %422 = vmatprep.subr.mxu0 0.0
        %423 = vmatpush1.msra.mxu0 0.0
        %424 = vmatprep.subr.mxu0 0.0
        %425 = vmatpush1.msra.mxu0 0.0
        %426 = vmatprep.subr.mxu0 0.0
        %427 = vmatpush1.msra.mxu0 0.0
        %428 = vmatprep.subr.mxu0 0.0
        %429 = vmatpush1.msra.mxu0 0.0
        %430 = vmatprep.subr.mxu0 0.0
        %431 = vmatpush1.msra.mxu0 0.0
        %432 = vmatprep.subr.mxu0 0.0
        %433 = vmatpush1.msra.mxu0 0.0
        %434 = vmatprep.subr.mxu0 0.0
        %435 = vmatpush1.msra.mxu0 0.0
        %436 = vmatprep.subr.mxu0 0.0
        %437 = vmatpush1.msra.mxu0 0.0
        %438 = vmatprep.subr.mxu0 0.0
        %439 = vmatpush1.msra.mxu0 0.0
        %440 = vmatprep.subr.mxu0 0.0
        %441 = vmatpush1.msra.mxu0 0.0
        %442 = vmatprep.subr.mxu0 0.0
        %443 = vmatpush1.msra.mxu0 0.0
        %444 = vmatprep.subr.mxu0 0.0
        %445 = vmatpush1.msra.mxu0 0.0
        %446 = vmatprep.subr.mxu0 0.0
        %447 = vmatpush1.msra.mxu0 0.0
        %448 = vmatprep.subr.mxu0 0.0
        %449 = vmatpush1.msra.mxu0 0.0
        %450 = vmatprep.subr.mxu0 0.0
        %451 = vmatpush1.msra.mxu0 0.0
        %452 = vmatprep.subr.mxu0 0.0
        %453 = vmatpush1.msra.mxu0 0.0
        %454 = vmatprep.subr.mxu0 0.0
        %455 = vmatpush1.msra.mxu0 0.0
        %456 = vmatprep.subr.mxu0 0.0
        %457 = vmatpush1.msra.mxu0 0.0
        %458 = vmatprep.subr.mxu0 0.0
        %459 = vmatpush1.msra.mxu0 0.0
        %460 = vmatprep.subr.mxu0 0.0
        %461 = vmatpush1.msra.mxu0 0.0
        %462 = vmatprep.subr.mxu0 0.0
        %463 = vmatpush1.msra.mxu0 0.0
        %464 = vmatprep.mubr.f32.mxu0 0.0
        %v465 = vand.u32 %v215, 4294901760
        %466 = vmatmul.mubr.f32.gmra.mrb[0].mxu0 %v465
        %v467 = vpop.f32.mrb[0].mxu0
        %v468 = vadd.f32 %v331, %v467
        %v469 = vpop.f32.mrb[0].mxu0
        %v470 = vadd.f32 %v333, %v469
        %471 = vmatprep.mubr.f32.mxu0 0.0
        %v472 = vand.u32 %v218, 4294901760
        %473 = vmatmul.mubr.f32.gmra.mrb[0].mxu0 %v472
        %v474 = vpop.f32.mrb[0].mxu0
        %v475 = vadd.f32 %v342, %v474
        %v476 = vpop.f32.mrb[0].mxu0
        %v477 = vadd.f32 %v344, %v476
        %478 = vmatprep.mubr.f32.mxu0 0.0
        %v479 = vand.u32 %v221, 4294901760
        %480 = vmatmul.mubr.f32.gmra.mrb[0].mxu0 %v479
        %v481 = vpop.f32.mrb[0].mxu0
        %v482 = vadd.f32 %v353, %v481
        %v483 = vpop.f32.mrb[0].mxu0
        %v484 = vadd.f32 %v355, %v483
        %485 = vmatprep.mubr.f32.mxu0 0.0
        %v486 = vand.u32 %v224, 4294901760
        %487 = vmatmul.mubr.f32.gmra.mrb[0].mxu0 %v486
        %v488 = vpop.f32.mrb[0].mxu0
        %v489 = vadd.f32 %v364, %v488
        %v490 = vpop.f32.mrb[0].mxu0
        %v491 = vadd.f32 %v366, %v490
        %492 = vmatprep.mubr.f32.mxu0 0.0
        %v493 = vand.u32 %v227, 4294901760
        %494 = vmatmul.mubr.f32.gmra.mrb[0].mxu0 %v493
        %v495 = vpop.f32.mrb[0].mxu0
        %v496 = vadd.f32 %v375, %v495
        %v497 = vpop.f32.mrb[0].mxu0
        %v498 = vadd.f32 %v377, %v497
        %499 = vmatprep.mubr.f32.mxu0 0.0
        %v500 = vand.u32 %v230, 4294901760
        %501 = vmatmul.mubr.f32.gmra.mrb[0].mxu0 %v500
        %v502 = vpop.f32.mrb[0].mxu0
        %v503 = vadd.f32 %v386, %v502
        %v504 = vpop.f32.mrb[0].mxu0
        %v505 = vadd.f32 %v388, %v504
        %506 = vdwg.mxu0
        %v507 = vand.u32 %v237, 4294901760
        %v508 = vsub.f32 %v237, %v507
        %509 = vmatprep.subr.mxu0 %v508
        %v510 = vand.u32 %v234, 4294901760
        %v511 = vsub.f32 %v234, %v510
        %512 = vmatpush1.msra.mxu0 %v511
        %513 = vmatprep.subr.mxu0 0.0
        %514 = vmatpush1.msra.mxu0 0.0
        %515 = vmatprep.subr.mxu0 0.0
        %516 = vmatpush1.msra.mxu0 0.0
        %517 = vmatprep.subr.mxu0 0.0
        %518 = vmatpush1.msra.mxu0 0.0
        %519 = vmatprep.subr.mxu0 0.0
        %520 = vmatpush1.msra.mxu0 0.0
        %521 = vmatprep.subr.mxu0 0.0
        %522 = vmatpush1.msra.mxu0 0.0
        %523 = vmatprep.subr.mxu0 0.0
        %524 = vmatpush1.msra.mxu0 0.0
        %525 = vmatprep.subr.mxu0 0.0
        %526 = vmatpush1.msra.mxu0 0.0
        %527 = vmatprep.subr.mxu0 0.0
        %528 = vmatpush1.msra.mxu0 0.0
        %529 = vmatprep.subr.mxu0 0.0
        %530 = vmatpush1.msra.mxu0 0.0
        %531 = vmatprep.subr.mxu0 0.0
        %532 = vmatpush1.msra.mxu0 0.0
        %533 = vmatprep.subr.mxu0 0.0
        %534 = vmatpush1.msra.mxu0 0.0
        %535 = vmatprep.subr.mxu0 0.0
        %536 = vmatpush1.msra.mxu0 0.0
        %537 = vmatprep.subr.mxu0 0.0
        %538 = vmatpush1.msra.mxu0 0.0
        %539 = vmatprep.subr.mxu0 0.0
        %540 = vmatpush1.msra.mxu0 0.0
        %541 = vmatprep.subr.mxu0 0.0
        %542 = vmatpush1.msra.mxu0 0.0
        %543 = vmatprep.subr.mxu0 0.0
        %544 = vmatpush1.msra.mxu0 0.0
        %545 = vmatprep.subr.mxu0 0.0
        %546 = vmatpush1.msra.mxu0 0.0
        %547 = vmatprep.subr.mxu0 0.0
        %548 = vmatpush1.msra.mxu0 0.0
        %549 = vmatprep.subr.mxu0 0.0
        %550 = vmatpush1.msra.mxu0 0.0
        %551 = vmatprep.subr.mxu0 0.0
        %552 = vmatpush1.msra.mxu0 0.0
        %553 = vmatprep.subr.mxu0 0.0
        %554 = vmatpush1.msra.mxu0 0.0
        %555 = vmatprep.subr.mxu0 0.0
        %556 = vmatpush1.msra.mxu0 0.0
        %557 = vmatprep.subr.mxu0 0.0
        %558 = vmatpush1.msra.mxu0 0.0
        %559 = vmatprep.subr.mxu0 0.0
        %560 = vmatpush1.msra.mxu0 0.0
        %561 = vmatprep.subr.mxu0 0.0
        %562 = vmatpush1.msra.mxu0 0.0
        %563 = vmatprep.subr.mxu0 0.0
        %564 = vmatpush1.msra.mxu0 0.0
        %565 = vmatprep.subr.mxu0 0.0
        %566 = vmatpush1.msra.mxu0 0.0
        %567 = vmatprep.subr.mxu0 0.0
        %568 = vmatpush1.msra.mxu0 0.0
        %569 = vmatprep.subr.mxu0 0.0
        %570 = vmatpush1.msra.mxu0 0.0
        %571 = vmatprep.subr.mxu0 0.0
        %572 = vmatpush1.msra.mxu0 0.0
        %573 = vmatprep.subr.mxu0 0.0
        %574 = vmatpush1.msra.mxu0 0.0
        %575 = vmatprep.mubr.f32.mxu0 0.0
        %v576 = vand.u32 %v215, 4294901760
        %v577 = vsub.f32 %v215, %v576
        %578 = vmatmul.mubr.f32.gmra.mrb[0].mxu0 %v577
        %v579 = vpop.f32.mrb[0].mxu0
        %v580 = vadd.f32 %v468, %v579
        %v581 = vpop.f32.mrb[0].mxu0
        %v582 = vadd.f32 %v470, %v581
        %583 = vmatprep.mubr.f32.mxu0 0.0
        %v584 = vand.u32 %v218, 4294901760
        %v585 = vsub.f32 %v218, %v584
        %586 = vmatmul.mubr.f32.gmra.mrb[0].mxu0 %v585
        %v587 = vpop.f32.mrb[0].mxu0
        %v588 = vadd.f32 %v475, %v587
        %v589 = vpop.f32.mrb[0].mxu0
        %v590 = vadd.f32 %v477, %v589
        %591 = vmatprep.mubr.f32.mxu0 0.0
        %v592 = vand.u32 %v221, 4294901760
        %v593 = vsub.f32 %v221, %v592
        %594 = vmatmul.mubr.f32.gmra.mrb[0].mxu0 %v593
        %v595 = vpop.f32.mrb[0].mxu0
        %v596 = vadd.f32 %v482, %v595
        %v597 = vpop.f32.mrb[0].mxu0
        %v598 = vadd.f32 %v484, %v597
        %599 = vmatprep.mubr.f32.mxu0 0.0
        %v600 = vand.u32 %v224, 4294901760
        %v601 = vsub.f32 %v224, %v600
        %602 = vmatmul.mubr.f32.gmra.mrb[0].mxu0 %v601
        %v603 = vpop.f32.mrb[0].mxu0
        %v604 = vadd.f32 %v489, %v603
        %v605 = vpop.f32.mrb[0].mxu0
        %v606 = vadd.f32 %v491, %v605
        %607 = vmatprep.mubr.f32.mxu0 0.0
        %v608 = vand.u32 %v227, 4294901760
        %v609 = vsub.f32 %v227, %v608
        %610 = vmatmul.mubr.f32.gmra.mrb[0].mxu0 %v609
        %v611 = vpop.f32.mrb[0].mxu0
        %v612 = vadd.f32 %v496, %v611
        %v613 = vpop.f32.mrb[0].mxu0
        %v614 = vadd.f32 %v498, %v613
        %615 = vmatprep.mubr.f32.mxu0 0.0
        %v616 = vand.u32 %v230, 4294901760
        %v617 = vsub.f32 %v230, %v616
        %618 = vmatmul.mubr.f32.gmra.mrb[0].mxu0 %v617
        %v619 = vpop.f32.mrb[0].mxu0
        %v620 = vadd.f32 %v503, %v619
        %v621 = vpop.f32.mrb[0].mxu0
        %v622 = vadd.f32 %v505, %v621
        %623 = vdwg.mxu0
        %v624 = vand.u32 %v237, 4294901760
        %625 = vmatprep.subr.mxu0 %v624
        %v626 = vand.u32 %v234, 4294901760
        %627 = vmatpush1.msra.mxu0 %v626
        %628 = vmatprep.subr.mxu0 0.0
        %629 = vmatpush1.msra.mxu0 0.0
        %630 = vmatprep.subr.mxu0 0.0
        %631 = vmatpush1.msra.mxu0 0.0
        %632 = vmatprep.subr.mxu0 0.0
        %633 = vmatpush1.msra.mxu0 0.0
        %634 = vmatprep.subr.mxu0 0.0
        %635 = vmatpush1.msra.mxu0 0.0
        %636 = vmatprep.subr.mxu0 0.0
        %637 = vmatpush1.msra.mxu0 0.0
        %638 = vmatprep.subr.mxu0 0.0
        %639 = vmatpush1.msra.mxu0 0.0
        %640 = vmatprep.subr.mxu0 0.0
        %641 = vmatpush1.msra.mxu0 0.0
        %642 = vmatprep.subr.mxu0 0.0
        %643 = vmatpush1.msra.mxu0 0.0
        %644 = vmatprep.subr.mxu0 0.0
        %645 = vmatpush1.msra.mxu0 0.0
        %646 = vmatprep.subr.mxu0 0.0
        %647 = vmatpush1.msra.mxu0 0.0
        %648 = vmatprep.subr.mxu0 0.0
        %649 = vmatpush1.msra.mxu0 0.0
        %650 = vmatprep.subr.mxu0 0.0
        %651 = vmatpush1.msra.mxu0 0.0
        %652 = vmatprep.subr.mxu0 0.0
        %653 = vmatpush1.msra.mxu0 0.0
        %654 = vmatprep.subr.mxu0 0.0
        %655 = vmatpush1.msra.mxu0 0.0
        %656 = vmatprep.subr.mxu0 0.0
        %657 = vmatpush1.msra.mxu0 0.0
        %658 = vmatprep.subr.mxu0 0.0
        %659 = vmatpush1.msra.mxu0 0.0
        %660 = vmatprep.subr.mxu0 0.0
        %661 = vmatpush1.msra.mxu0 0.0
        %662 = vmatprep.subr.mxu0 0.0
        %663 = vmatpush1.msra.mxu0 0.0
        %664 = vmatprep.subr.mxu0 0.0
        %665 = vmatpush1.msra.mxu0 0.0
        %666 = vmatprep.subr.mxu0 0.0
        %667 = vmatpush1.msra.mxu0 0.0
        %668 = vmatprep.subr.mxu0 0.0
        %669 = vmatpush1.msra.mxu0 0.0
        %670 = vmatprep.subr.mxu0 0.0
        %671 = vmatpush1.msra.mxu0 0.0
        %672 = vmatprep.subr.mxu0 0.0
        %673 = vmatpush1.msra.mxu0 0.0
        %674 = vmatprep.subr.mxu0 0.0
        %675 = vmatpush1.msra.mxu0 0.0
        %676 = vmatprep.subr.mxu0 0.0
        %677 = vmatpush1.msra.mxu0 0.0
        %678 = vmatprep.subr.mxu0 0.0
        %679 = vmatpush1.msra.mxu0 0.0
        %680 = vmatprep.subr.mxu0 0.0
        %681 = vmatpush1.msra.mxu0 0.0
        %682 = vmatprep.subr.mxu0 0.0
        %683 = vmatpush1.msra.mxu0 0.0
        %684 = vmatprep.subr.mxu0 0.0
        %685 = vmatpush1.msra.mxu0 0.0
        %686 = vmatprep.subr.mxu0 0.0
        %687 = vmatpush1.msra.mxu0 0.0
        %688 = vmatprep.subr.mxu0 0.0
        %689 = vmatpush1.msra.mxu0 0.0
        %690 = vmatprep.mubr.f32.mxu0 0.0
        %v691 = vand.u32 %v215, 4294901760
        %v692 = vsub.f32 %v215, %v691
        %v693 = vand.u32 %v692, 4294901760
        %694 = vmatmul.mubr.f32.gmra.mrb[0].mxu0 %v693
        %v695 = vpop.f32.mrb[0].mxu0
        %v696 = vadd.f32 %v580, %v695
        %v697 = vpop.f32.mrb[0].mxu0
        %v698 = vadd.f32 %v582, %v697
        %699 = vmatprep.mubr.f32.mxu0 0.0
        %v700 = vand.u32 %v218, 4294901760
        %v701 = vsub.f32 %v218, %v700
        %v702 = vand.u32 %v701, 4294901760
        %703 = vmatmul.mubr.f32.gmra.mrb[0].mxu0 %v702
        %v704 = vpop.f32.mrb[0].mxu0
        %v705 = vadd.f32 %v588, %v704
        %v706 = vpop.f32.mrb[0].mxu0
        %v707 = vadd.f32 %v590, %v706
        %708 = vmatprep.mubr.f32.mxu0 0.0
        %v709 = vand.u32 %v221, 4294901760
        %v710 = vsub.f32 %v221, %v709
        %v711 = vand.u32 %v710, 4294901760
        %712 = vmatmul.mubr.f32.gmra.mrb[0].mxu0 %v711
        %v713 = vpop.f32.mrb[0].mxu0
        %v714 = vadd.f32 %v596, %v713
        %v715 = vpop.f32.mrb[0].mxu0
        %v716 = vadd.f32 %v598, %v715
        %717 = vmatprep.mubr.f32.mxu0 0.0
        %v718 = vand.u32 %v224, 4294901760
        %v719 = vsub.f32 %v224, %v718
        %v720 = vand.u32 %v719, 4294901760
        %721 = vmatmul.mubr.f32.gmra.mrb[0].mxu0 %v720
        %v722 = vpop.f32.mrb[0].mxu0
        %v723 = vadd.f32 %v604, %v722
        %v724 = vpop.f32.mrb[0].mxu0
        %v725 = vadd.f32 %v606, %v724
        %726 = vmatprep.mubr.f32.mxu0 0.0
        %v727 = vand.u32 %v227, 4294901760
        %v728 = vsub.f32 %v227, %v727
        %v729 = vand.u32 %v728, 4294901760
        %730 = vmatmul.mubr.f32.gmra.mrb[0].mxu0 %v729
        %v731 = vpop.f32.mrb[0].mxu0
        %v732 = vadd.f32 %v612, %v731
        %v733 = vpop.f32.mrb[0].mxu0
        %v734 = vadd.f32 %v614, %v733
        %735 = vmatprep.mubr.f32.mxu0 0.0
        %v736 = vand.u32 %v230, 4294901760
        %v737 = vsub.f32 %v230, %v736
        %v738 = vand.u32 %v737, 4294901760
        %739 = vmatmul.mubr.f32.gmra.mrb[0].mxu0 %v738
        %v740 = vpop.f32.mrb[0].mxu0
        %v741 = vadd.f32 %v620, %v740
        %v742 = vpop.f32.mrb[0].mxu0
        %v743 = vadd.f32 %v622, %v742
        %744 = vdwg.mxu0
        %v745 = vand.u32 %v237, 4294901760
        %v746 = vsub.f32 %v237, %v745
        %v747 = vand.u32 %v746, 4294901760
        %748 = vmatprep.subr.mxu0 %v747
        %v749 = vand.u32 %v234, 4294901760
        %v750 = vsub.f32 %v234, %v749
        %v751 = vand.u32 %v750, 4294901760
        %752 = vmatpush1.msra.mxu0 %v751
        %753 = vmatprep.subr.mxu0 0.0
        %754 = vmatpush1.msra.mxu0 0.0
        %755 = vmatprep.subr.mxu0 0.0
        %756 = vmatpush1.msra.mxu0 0.0
        %757 = vmatprep.subr.mxu0 0.0
        %758 = vmatpush1.msra.mxu0 0.0
        %759 = vmatprep.subr.mxu0 0.0
        %760 = vmatpush1.msra.mxu0 0.0
        %761 = vmatprep.subr.mxu0 0.0
        %762 = vmatpush1.msra.mxu0 0.0
        %763 = vmatprep.subr.mxu0 0.0
        %764 = vmatpush1.msra.mxu0 0.0
        %765 = vmatprep.subr.mxu0 0.0
        %766 = vmatpush1.msra.mxu0 0.0
        %767 = vmatprep.subr.mxu0 0.0
        %768 = vmatpush1.msra.mxu0 0.0
        %769 = vmatprep.subr.mxu0 0.0
        %770 = vmatpush1.msra.mxu0 0.0
        %771 = vmatprep.subr.mxu0 0.0
        %772 = vmatpush1.msra.mxu0 0.0
        %773 = vmatprep.subr.mxu0 0.0
        %774 = vmatpush1.msra.mxu0 0.0
        %775 = vmatprep.subr.mxu0 0.0
        %776 = vmatpush1.msra.mxu0 0.0
        %777 = vmatprep.subr.mxu0 0.0
        %778 = vmatpush1.msra.mxu0 0.0
        %779 = vmatprep.subr.mxu0 0.0
        %780 = vmatpush1.msra.mxu0 0.0
        %781 = vmatprep.subr.mxu0 0.0
        %782 = vmatpush1.msra.mxu0 0.0
        %783 = vmatprep.subr.mxu0 0.0
        %784 = vmatpush1.msra.mxu0 0.0
        %785 = vmatprep.subr.mxu0 0.0
        %786 = vmatpush1.msra.mxu0 0.0
        %787 = vmatprep.subr.mxu0 0.0
        %788 = vmatpush1.msra.mxu0 0.0
        %789 = vmatprep.subr.mxu0 0.0
        %790 = vmatpush1.msra.mxu0 0.0
        %791 = vmatprep.subr.mxu0 0.0
        %792 = vmatpush1.msra.mxu0 0.0
        %793 = vmatprep.subr.mxu0 0.0
        %794 = vmatpush1.msra.mxu0 0.0
        %795 = vmatprep.subr.mxu0 0.0
        %796 = vmatpush1.msra.mxu0 0.0
        %797 = vmatprep.subr.mxu0 0.0
        %798 = vmatpush1.msra.mxu0 0.0
        %799 = vmatprep.subr.mxu0 0.0
        %800 = vmatpush1.msra.mxu0 0.0
        %801 = vmatprep.subr.mxu0 0.0
        %802 = vmatpush1.msra.mxu0 0.0
        %803 = vmatprep.subr.mxu0 0.0
        %804 = vmatpush1.msra.mxu0 0.0
        %805 = vmatprep.subr.mxu0 0.0
        %806 = vmatpush1.msra.mxu0 0.0
        %807 = vmatprep.subr.mxu0 0.0
        %808 = vmatpush1.msra.mxu0 0.0
        %809 = vmatprep.subr.mxu0 0.0
        %810 = vmatpush1.msra.mxu0 0.0
        %811 = vmatprep.subr.mxu0 0.0
        %812 = vmatpush1.msra.mxu0 0.0
        %813 = vmatprep.subr.mxu0 0.0
        %814 = vmatpush1.msra.mxu0 0.0
        %815 = vmatprep.mubr.f32.mxu0 0.0
        %v816 = vand.u32 %v215, 4294901760
        %817 = vmatmul.mubr.f32.gmra.mrb[0].mxu0 %v816
        %v818 = vpop.f32.mrb[0].mxu0
        %v819 = vadd.f32 %v696, %v818
        %v820 = vpop.f32.mrb[0].mxu0
        %v821 = vadd.f32 %v698, %v820
        %822 = vmatprep.mubr.f32.mxu0 0.0
        %v823 = vand.u32 %v218, 4294901760
        %824 = vmatmul.mubr.f32.gmra.mrb[0].mxu0 %v823
        %v825 = vpop.f32.mrb[0].mxu0
        %v826 = vadd.f32 %v705, %v825
        %v827 = vpop.f32.mrb[0].mxu0
        %v828 = vadd.f32 %v707, %v827
        %829 = vmatprep.mubr.f32.mxu0 0.0
        %v830 = vand.u32 %v221, 4294901760
        %831 = vmatmul.mubr.f32.gmra.mrb[0].mxu0 %v830
        %v832 = vpop.f32.mrb[0].mxu0
        %v833 = vadd.f32 %v714, %v832
        %v834 = vpop.f32.mrb[0].mxu0
        %v835 = vadd.f32 %v716, %v834
        %836 = vmatprep.mubr.f32.mxu0 0.0
        %v837 = vand.u32 %v224, 4294901760
        %838 = vmatmul.mubr.f32.gmra.mrb[0].mxu0 %v837
        %v839 = vpop.f32.mrb[0].mxu0
        %v840 = vadd.f32 %v723, %v839
        %v841 = vpop.f32.mrb[0].mxu0
        %v842 = vadd.f32 %v725, %v841
        %843 = vmatprep.mubr.f32.mxu0 0.0
        %v844 = vand.u32 %v227, 4294901760
        %845 = vmatmul.mubr.f32.gmra.mrb[0].mxu0 %v844
        %v846 = vpop.f32.mrb[0].mxu0
        %v847 = vadd.f32 %v732, %v846
        %v848 = vpop.f32.mrb[0].mxu0
        %v849 = vadd.f32 %v734, %v848
        %850 = vmatprep.mubr.f32.mxu0 0.0
        %v851 = vand.u32 %v230, 4294901760
        %852 = vmatmul.mubr.f32.gmra.mrb[0].mxu0 %v851
        %v853 = vpop.f32.mrb[0].mxu0
        %v854 = vadd.f32 %v741, %v853
        %v855 = vpop.f32.mrb[0].mxu0
        %v856 = vadd.f32 %v743, %v855
        %857 = vdwg.mxu0
        %v858 = vand.u32 %v237, 4294901760
        %859 = vmatprep.subr.mxu0 %v858
        %v860 = vand.u32 %v234, 4294901760
        %861 = vmatpush1.msra.mxu0 %v860
        %862 = vmatprep.subr.mxu0 0.0
        %863 = vmatpush1.msra.mxu0 0.0
        %864 = vmatprep.subr.mxu0 0.0
        %865 = vmatpush1.msra.mxu0 0.0
        %866 = vmatprep.subr.mxu0 0.0
        %867 = vmatpush1.msra.mxu0 0.0
        %868 = vmatprep.subr.mxu0 0.0
        %869 = vmatpush1.msra.mxu0 0.0
        %870 = vmatprep.subr.mxu0 0.0
        %871 = vmatpush1.msra.mxu0 0.0
        %872 = vmatprep.subr.mxu0 0.0
        %873 = vmatpush1.msra.mxu0 0.0
        %874 = vmatprep.subr.mxu0 0.0
        %875 = vmatpush1.msra.mxu0 0.0
        %876 = vmatprep.subr.mxu0 0.0
        %877 = vmatpush1.msra.mxu0 0.0
        %878 = vmatprep.subr.mxu0 0.0
        %879 = vmatpush1.msra.mxu0 0.0
        %880 = vmatprep.subr.mxu0 0.0
        %881 = vmatpush1.msra.mxu0 0.0
        %882 = vmatprep.subr.mxu0 0.0
        %883 = vmatpush1.msra.mxu0 0.0
        %884 = vmatprep.subr.mxu0 0.0
        %885 = vmatpush1.msra.mxu0 0.0
        %886 = vmatprep.subr.mxu0 0.0
        %887 = vmatpush1.msra.mxu0 0.0
        %888 = vmatprep.subr.mxu0 0.0
        %889 = vmatpush1.msra.mxu0 0.0
        %890 = vmatprep.subr.mxu0 0.0
        %891 = vmatpush1.msra.mxu0 0.0
        %892 = vmatprep.subr.mxu0 0.0
        %893 = vmatpush1.msra.mxu0 0.0
        %894 = vmatprep.subr.mxu0 0.0
        %895 = vmatpush1.msra.mxu0 0.0
        %896 = vmatprep.subr.mxu0 0.0
        %897 = vmatpush1.msra.mxu0 0.0
        %898 = vmatprep.subr.mxu0 0.0
        %899 = vmatpush1.msra.mxu0 0.0
        %900 = vmatprep.subr.mxu0 0.0
        %901 = vmatpush1.msra.mxu0 0.0
        %902 = vmatprep.subr.mxu0 0.0
        %903 = vmatpush1.msra.mxu0 0.0
        %904 = vmatprep.subr.mxu0 0.0
        %905 = vmatpush1.msra.mxu0 0.0
        %906 = vmatprep.subr.mxu0 0.0
        %907 = vmatpush1.msra.mxu0 0.0
        %908 = vmatprep.subr.mxu0 0.0
        %909 = vmatpush1.msra.mxu0 0.0
        %910 = vmatprep.subr.mxu0 0.0
        %911 = vmatpush1.msra.mxu0 0.0
        %912 = vmatprep.subr.mxu0 0.0
        %913 = vmatpush1.msra.mxu0 0.0
        %914 = vmatprep.subr.mxu0 0.0
        %915 = vmatpush1.msra.mxu0 0.0
        %916 = vmatprep.subr.mxu0 0.0
        %917 = vmatpush1.msra.mxu0 0.0
        %918 = vmatprep.subr.mxu0 0.0
        %919 = vmatpush1.msra.mxu0 0.0
        %920 = vmatprep.subr.mxu0 0.0
        %921 = vmatpush1.msra.mxu0 0.0
        %922 = vmatprep.subr.mxu0 0.0
        %923 = vmatpush1.msra.mxu0 0.0
        %924 = vmatprep.mubr.f32.mxu0 0.0
        %v925 = vand.u32 %v215, 4294901760
        %926 = vmatmul.mubr.f32.gmra.mrb[0].mxu0 %v925
        %v927 = vpop.f32.mrb[0].mxu0
        %v928 = vadd.f32 %v819, %v927
        %v929 = vpop.f32.mrb[0].mxu0
        %v930 = vadd.f32 %v821, %v929
        %931 = vmatprep.mubr.f32.mxu0 0.0
        %v932 = vand.u32 %v218, 4294901760
        %933 = vmatmul.mubr.f32.gmra.mrb[0].mxu0 %v932
        %v934 = vpop.f32.mrb[0].mxu0
        %v935 = vadd.f32 %v826, %v934
        %v936 = vpop.f32.mrb[0].mxu0
        %v937 = vadd.f32 %v828, %v936
        %938 = vmatprep.mubr.f32.mxu0 0.0
        %v939 = vand.u32 %v221, 4294901760
        %940 = vmatmul.mubr.f32.gmra.mrb[0].mxu0 %v939
        %v941 = vpop.f32.mrb[0].mxu0
        %v942 = vadd.f32 %v833, %v941
        %v943 = vpop.f32.mrb[0].mxu0
        %v944 = vadd.f32 %v835, %v943
        %945 = vmatprep.mubr.f32.mxu0 0.0
        %v946 = vand.u32 %v224, 4294901760
        %947 = vmatmul.mubr.f32.gmra.mrb[0].mxu0 %v946
        %v948 = vpop.f32.mrb[0].mxu0
        %v949 = vadd.f32 %v840, %v948
        %v950 = vpop.f32.mrb[0].mxu0
        %v951 = vadd.f32 %v842, %v950
        %952 = vmatprep.mubr.f32.mxu0 0.0
        %v953 = vand.u32 %v227, 4294901760
        %954 = vmatmul.mubr.f32.gmra.mrb[0].mxu0 %v953
        %v955 = vpop.f32.mrb[0].mxu0
        %v956 = vadd.f32 %v847, %v955
        %v957 = vpop.f32.mrb[0].mxu0
        %v958 = vadd.f32 %v849, %v957
        %959 = vmatprep.mubr.f32.mxu0 0.0
        %v960 = vand.u32 %v230, 4294901760
        %961 = vmatmul.mubr.f32.gmra.mrb[0].mxu0 %v960
        %v962 = vpop.f32.mrb[0].mxu0
        %v963 = vadd.f32 %v854, %v962
        %v964 = vpop.f32.mrb[0].mxu0
        %v965 = vadd.f32 %v856, %v964
        %966 = vdwg.mxu0
        %v967 = vand.u32 %v243, 4294901760
        %968 = vmatprep.subr.mxu0 %v967
        %v969 = vand.u32 %v240, 4294901760
        %970 = vmatpush1.msra.mxu0 %v969
        %971 = vmatprep.subr.mxu0 0.0
        %972 = vmatpush1.msra.mxu0 0.0
        %973 = vmatprep.subr.mxu0 0.0
        %974 = vmatpush1.msra.mxu0 0.0
        %975 = vmatprep.subr.mxu0 0.0
        %976 = vmatpush1.msra.mxu0 0.0
        %977 = vmatprep.subr.mxu0 0.0
        %978 = vmatpush1.msra.mxu0 0.0
        %979 = vmatprep.subr.mxu0 0.0
        %980 = vmatpush1.msra.mxu0 0.0
        %981 = vmatprep.subr.mxu0 0.0
        %982 = vmatpush1.msra.mxu0 0.0
        %983 = vmatprep.subr.mxu0 0.0
        %984 = vmatpush1.msra.mxu0 0.0
        %985 = vmatprep.subr.mxu0 0.0
        %986 = vmatpush1.msra.mxu0 0.0
        %987 = vmatprep.subr.mxu0 0.0
        %988 = vmatpush1.msra.mxu0 0.0
        %989 = vmatprep.subr.mxu0 0.0
        %990 = vmatpush1.msra.mxu0 0.0
        %991 = vmatprep.subr.mxu0 0.0
        %992 = vmatpush1.msra.mxu0 0.0
        %993 = vmatprep.subr.mxu0 0.0
        %994 = vmatpush1.msra.mxu0 0.0
        %995 = vmatprep.subr.mxu0 0.0
        %996 = vmatpush1.msra.mxu0 0.0
        %997 = vmatprep.subr.mxu0 0.0
        %998 = vmatpush1.msra.mxu0 0.0
        %999 = vmatprep.subr.mxu0 0.0
        %1000 = vmatpush1.msra.mxu0 0.0
        %1001 = vmatprep.subr.mxu0 0.0
        %1002 = vmatpush1.msra.mxu0 0.0
        %1003 = vmatprep.subr.mxu0 0.0
        %1004 = vmatpush1.msra.mxu0 0.0
        %1005 = vmatprep.subr.mxu0 0.0
        %1006 = vmatpush1.msra.mxu0 0.0
        %1007 = vmatprep.subr.mxu0 0.0
        %1008 = vmatpush1.msra.mxu0 0.0
        %1009 = vmatprep.subr.mxu0 0.0
        %1010 = vmatpush1.msra.mxu0 0.0
        %1011 = vmatprep.subr.mxu0 0.0
        %1012 = vmatpush1.msra.mxu0 0.0
        %1013 = vmatprep.subr.mxu0 0.0
        %1014 = vmatpush1.msra.mxu0 0.0
        %1015 = vmatprep.subr.mxu0 0.0
        %1016 = vmatpush1.msra.mxu0 0.0
        %1017 = vmatprep.subr.mxu0 0.0
        %1018 = vmatpush1.msra.mxu0 0.0
        %1019 = vmatprep.subr.mxu0 0.0
        %1020 = vmatpush1.msra.mxu0 0.0
        %1021 = vmatprep.subr.mxu0 0.0
        %1022 = vmatpush1.msra.mxu0 0.0
        %1023 = vmatprep.subr.mxu0 0.0
        %1024 = vmatpush1.msra.mxu0 0.0
        %1025 = vmatprep.subr.mxu0 0.0
        %1026 = vmatpush1.msra.mxu0 0.0
        %1027 = vmatprep.subr.mxu0 0.0
        %1028 = vmatpush1.msra.mxu0 0.0
        %1029 = vmatprep.subr.mxu0 0.0
        %1030 = vmatpush1.msra.mxu0 0.0
        %1031 = vmatprep.subr.mxu0 0.0
        %1032 = vmatpush1.msra.mxu0 0.0
        %1033 = vmatprep.mubr.f32.mxu0 0.0
        %v1034 = vand.u32 %v215, 4294901760
        %v1035 = vsub.f32 %v215, %v1034
        %v1036 = vand.u32 %v1035, 4294901760
        %v1037 = vsub.f32 %v1035, %v1036
        %v1038 = vand.u32 %v1037, 4294901760
        %1039 = vmatmul.mubr.f32.gmra.mrb[0].mxu0 %v1038
        %v1040 = vpop.f32.mrb[0].mxu0
        %v1041 = vadd.f32 0.0, %v1040
        %v1042 = vpop.f32.mrb[0].mxu0
        %v1043 = vadd.f32 0.0, %v1042
        %1044 = vmatprep.mubr.f32.mxu0 0.0
        %v1045 = vand.u32 %v218, 4294901760
        %v1046 = vsub.f32 %v218, %v1045
        %v1047 = vand.u32 %v1046, 4294901760
        %v1048 = vsub.f32 %v1046, %v1047
        %v1049 = vand.u32 %v1048, 4294901760
        %1050 = vmatmul.mubr.f32.gmra.mrb[0].mxu0 %v1049
        %v1051 = vpop.f32.mrb[0].mxu0
        %v1052 = vadd.f32 0.0, %v1051
        %v1053 = vpop.f32.mrb[0].mxu0
        %v1054 = vadd.f32 0.0, %v1053
        %1055 = vmatprep.mubr.f32.mxu0 0.0
        %v1056 = vand.u32 %v221, 4294901760
        %v1057 = vsub.f32 %v221, %v1056
        %v1058 = vand.u32 %v1057, 4294901760
        %v1059 = vsub.f32 %v1057, %v1058
        %v1060 = vand.u32 %v1059, 4294901760
        %1061 = vmatmul.mubr.f32.gmra.mrb[0].mxu0 %v1060
        %v1062 = vpop.f32.mrb[0].mxu0
        %v1063 = vadd.f32 0.0, %v1062
        %v1064 = vpop.f32.mrb[0].mxu0
        %v1065 = vadd.f32 0.0, %v1064
        %1066 = vmatprep.mubr.f32.mxu0 0.0
        %v1067 = vand.u32 %v224, 4294901760
        %v1068 = vsub.f32 %v224, %v1067
        %v1069 = vand.u32 %v1068, 4294901760
        %v1070 = vsub.f32 %v1068, %v1069
        %v1071 = vand.u32 %v1070, 4294901760
        %1072 = vmatmul.mubr.f32.gmra.mrb[0].mxu0 %v1071
        %v1073 = vpop.f32.mrb[0].mxu0
        %v1074 = vadd.f32 0.0, %v1073
        %v1075 = vpop.f32.mrb[0].mxu0
        %v1076 = vadd.f32 0.0, %v1075
        %1077 = vmatprep.mubr.f32.mxu0 0.0
        %v1078 = vand.u32 %v227, 4294901760
        %v1079 = vsub.f32 %v227, %v1078
        %v1080 = vand.u32 %v1079, 4294901760
        %v1081 = vsub.f32 %v1079, %v1080
        %v1082 = vand.u32 %v1081, 4294901760
        %1083 = vmatmul.mubr.f32.gmra.mrb[0].mxu0 %v1082
        %v1084 = vpop.f32.mrb[0].mxu0
        %v1085 = vadd.f32 0.0, %v1084
        %v1086 = vpop.f32.mrb[0].mxu0
        %v1087 = vadd.f32 0.0, %v1086
        %1088 = vmatprep.mubr.f32.mxu0 0.0
        %v1089 = vand.u32 %v230, 4294901760
        %v1090 = vsub.f32 %v230, %v1089
        %v1091 = vand.u32 %v1090, 4294901760
        %v1092 = vsub.f32 %v1090, %v1091
        %v1093 = vand.u32 %v1092, 4294901760
        %1094 = vmatmul.mubr.f32.gmra.mrb[0].mxu0 %v1093
        %v1095 = vpop.f32.mrb[0].mxu0
        %v1096 = vadd.f32 0.0, %v1095
        %v1097 = vpop.f32.mrb[0].mxu0
        %v1098 = vadd.f32 0.0, %v1097
        %1099 = vdwg.mxu0
        %v1100 = vand.u32 %v243, 4294901760
        %v1101 = vsub.f32 %v243, %v1100
        %v1102 = vand.u32 %v1101, 4294901760
        %v1103 = vsub.f32 %v1101, %v1102
        %v1104 = vand.u32 %v1103, 4294901760
        %1105 = vmatprep.subr.mxu0 %v1104
        %v1106 = vand.u32 %v240, 4294901760
        %v1107 = vsub.f32 %v240, %v1106
        %v1108 = vand.u32 %v1107, 4294901760
        %v1109 = vsub.f32 %v1107, %v1108
        %v1110 = vand.u32 %v1109, 4294901760
        %1111 = vmatpush1.msra.mxu0 %v1110
        %1112 = vmatprep.subr.mxu0 0.0
        %1113 = vmatpush1.msra.mxu0 0.0
        %1114 = vmatprep.subr.mxu0 0.0
        %1115 = vmatpush1.msra.mxu0 0.0
        %1116 = vmatprep.subr.mxu0 0.0
        %1117 = vmatpush1.msra.mxu0 0.0
        %1118 = vmatprep.subr.mxu0 0.0
        %1119 = vmatpush1.msra.mxu0 0.0
        %1120 = vmatprep.subr.mxu0 0.0
        %1121 = vmatpush1.msra.mxu0 0.0
        %1122 = vmatprep.subr.mxu0 0.0
        %1123 = vmatpush1.msra.mxu0 0.0
        %1124 = vmatprep.subr.mxu0 0.0
        %1125 = vmatpush1.msra.mxu0 0.0
        %1126 = vmatprep.subr.mxu0 0.0
        %1127 = vmatpush1.msra.mxu0 0.0
        %1128 = vmatprep.subr.mxu0 0.0
        %1129 = vmatpush1.msra.mxu0 0.0
        %1130 = vmatprep.subr.mxu0 0.0
        %1131 = vmatpush1.msra.mxu0 0.0
        %1132 = vmatprep.subr.mxu0 0.0
        %1133 = vmatpush1.msra.mxu0 0.0
        %1134 = vmatprep.subr.mxu0 0.0
        %1135 = vmatpush1.msra.mxu0 0.0
        %1136 = vmatprep.subr.mxu0 0.0
        %1137 = vmatpush1.msra.mxu0 0.0
        %1138 = vmatprep.subr.mxu0 0.0
        %1139 = vmatpush1.msra.mxu0 0.0
        %1140 = vmatprep.subr.mxu0 0.0
        %1141 = vmatpush1.msra.mxu0 0.0
        %1142 = vmatprep.subr.mxu0 0.0
        %1143 = vmatpush1.msra.mxu0 0.0
        %1144 = vmatprep.subr.mxu0 0.0
        %1145 = vmatpush1.msra.mxu0 0.0
        %1146 = vmatprep.subr.mxu0 0.0
        %1147 = vmatpush1.msra.mxu0 0.0
        %1148 = vmatprep.subr.mxu0 0.0
        %1149 = vmatpush1.msra.mxu0 0.0
        %1150 = vmatprep.subr.mxu0 0.0
        %1151 = vmatpush1.msra.mxu0 0.0
        %1152 = vmatprep.subr.mxu0 0.0
        %1153 = vmatpush1.msra.mxu0 0.0
        %1154 = vmatprep.subr.mxu0 0.0
        %1155 = vmatpush1.msra.mxu0 0.0
        %1156 = vmatprep.subr.mxu0 0.0
        %1157 = vmatpush1.msra.mxu0 0.0
        %1158 = vmatprep.subr.mxu0 0.0
        %1159 = vmatpush1.msra.mxu0 0.0
        %1160 = vmatprep.subr.mxu0 0.0
        %1161 = vmatpush1.msra.mxu0 0.0
        %1162 = vmatprep.subr.mxu0 0.0
        %1163 = vmatpush1.msra.mxu0 0.0
        %1164 = vmatprep.subr.mxu0 0.0
        %1165 = vmatpush1.msra.mxu0 0.0
        %1166 = vmatprep.subr.mxu0 0.0
        %1167 = vmatpush1.msra.mxu0 0.0
        %1168 = vmatprep.subr.mxu0 0.0
        %1169 = vmatpush1.msra.mxu0 0.0
        %1170 = vmatprep.subr.mxu0 0.0
        %1171 = vmatpush1.msra.mxu0 0.0
        %1172 = vmatprep.subr.mxu0 0.0
        %1173 = vmatpush1.msra.mxu0 0.0
        %1174 = vmatprep.mubr.f32.mxu0 0.0
        %v1175 = vand.u32 %v215, 4294901760
        %1176 = vmatmul.mubr.f32.gmra.mrb[0].mxu0 %v1175
        %v1177 = vpop.f32.mrb[0].mxu0
        %v1178 = vadd.f32 %v1041, %v1177
        %v1179 = vpop.f32.mrb[0].mxu0
        %v1180 = vadd.f32 %v1043, %v1179
        %1181 = vmatprep.mubr.f32.mxu0 0.0
        %v1182 = vand.u32 %v218, 4294901760
        %1183 = vmatmul.mubr.f32.gmra.mrb[0].mxu0 %v1182
        %v1184 = vpop.f32.mrb[0].mxu0
        %v1185 = vadd.f32 %v1052, %v1184
        %v1186 = vpop.f32.mrb[0].mxu0
        %v1187 = vadd.f32 %v1054, %v1186
        %1188 = vmatprep.mubr.f32.mxu0 0.0
        %v1189 = vand.u32 %v221, 4294901760
        %1190 = vmatmul.mubr.f32.gmra.mrb[0].mxu0 %v1189
        %v1191 = vpop.f32.mrb[0].mxu0
        %v1192 = vadd.f32 %v1063, %v1191
        %v1193 = vpop.f32.mrb[0].mxu0
        %v1194 = vadd.f32 %v1065, %v1193
        %1195 = vmatprep.mubr.f32.mxu0 0.0
        %v1196 = vand.u32 %v224, 4294901760
        %1197 = vmatmul.mubr.f32.gmra.mrb[0].mxu0 %v1196
        %v1198 = vpop.f32.mrb[0].mxu0
        %v1199 = vadd.f32 %v1074, %v1198
        %v1200 = vpop.f32.mrb[0].mxu0
        %v1201 = vadd.f32 %v1076, %v1200
        %1202 = vmatprep.mubr.f32.mxu0 0.0
        %v1203 = vand.u32 %v227, 4294901760
        %1204 = vmatmul.mubr.f32.gmra.mrb[0].mxu0 %v1203
        %v1205 = vpop.f32.mrb[0].mxu0
        %v1206 = vadd.f32 %v1085, %v1205
        %v1207 = vpop.f32.mrb[0].mxu0
        %v1208 = vadd.f32 %v1087, %v1207
        %1209 = vmatprep.mubr.f32.mxu0 0.0
        %v1210 = vand.u32 %v230, 4294901760
        %1211 = vmatmul.mubr.f32.gmra.mrb[0].mxu0 %v1210
        %v1212 = vpop.f32.mrb[0].mxu0
        %v1213 = vadd.f32 %v1096, %v1212
        %v1214 = vpop.f32.mrb[0].mxu0
        %v1215 = vadd.f32 %v1098, %v1214
        %1216 = vdwg.mxu0
        %v1217 = vand.u32 %v243, 4294901760
        %v1218 = vsub.f32 %v243, %v1217
        %1219 = vmatprep.subr.mxu0 %v1218
        %v1220 = vand.u32 %v240, 4294901760
        %v1221 = vsub.f32 %v240, %v1220
        %1222 = vmatpush1.msra.mxu0 %v1221
        %1223 = vmatprep.subr.mxu0 0.0
        %1224 = vmatpush1.msra.mxu0 0.0
        %1225 = vmatprep.subr.mxu0 0.0
        %1226 = vmatpush1.msra.mxu0 0.0
        %1227 = vmatprep.subr.mxu0 0.0
        %1228 = vmatpush1.msra.mxu0 0.0
        %1229 = vmatprep.subr.mxu0 0.0
        %1230 = vmatpush1.msra.mxu0 0.0
        %1231 = vmatprep.subr.mxu0 0.0
        %1232 = vmatpush1.msra.mxu0 0.0
        %1233 = vmatprep.subr.mxu0 0.0
        %1234 = vmatpush1.msra.mxu0 0.0
        %1235 = vmatprep.subr.mxu0 0.0
        %1236 = vmatpush1.msra.mxu0 0.0
        %1237 = vmatprep.subr.mxu0 0.0
        %1238 = vmatpush1.msra.mxu0 0.0
        %1239 = vmatprep.subr.mxu0 0.0
        %1240 = vmatpush1.msra.mxu0 0.0
        %1241 = vmatprep.subr.mxu0 0.0
        %1242 = vmatpush1.msra.mxu0 0.0
        %1243 = vmatprep.subr.mxu0 0.0
        %1244 = vmatpush1.msra.mxu0 0.0
        %1245 = vmatprep.subr.mxu0 0.0
        %1246 = vmatpush1.msra.mxu0 0.0
        %1247 = vmatprep.subr.mxu0 0.0
        %1248 = vmatpush1.msra.mxu0 0.0
        %1249 = vmatprep.subr.mxu0 0.0
        %1250 = vmatpush1.msra.mxu0 0.0
        %1251 = vmatprep.subr.mxu0 0.0
        %1252 = vmatpush1.msra.mxu0 0.0
        %1253 = vmatprep.subr.mxu0 0.0
        %1254 = vmatpush1.msra.mxu0 0.0
        %1255 = vmatprep.subr.mxu0 0.0
        %1256 = vmatpush1.msra.mxu0 0.0
        %1257 = vmatprep.subr.mxu0 0.0
        %1258 = vmatpush1.msra.mxu0 0.0
        %1259 = vmatprep.subr.mxu0 0.0
        %1260 = vmatpush1.msra.mxu0 0.0
        %1261 = vmatprep.subr.mxu0 0.0
        %1262 = vmatpush1.msra.mxu0 0.0
        %1263 = vmatprep.subr.mxu0 0.0
        %1264 = vmatpush1.msra.mxu0 0.0
        %1265 = vmatprep.subr.mxu0 0.0
        %1266 = vmatpush1.msra.mxu0 0.0
        %1267 = vmatprep.subr.mxu0 0.0
        %1268 = vmatpush1.msra.mxu0 0.0
        %1269 = vmatprep.subr.mxu0 0.0
        %1270 = vmatpush1.msra.mxu0 0.0
        %1271 = vmatprep.subr.mxu0 0.0
        %1272 = vmatpush1.msra.mxu0 0.0
        %1273 = vmatprep.subr.mxu0 0.0
        %1274 = vmatpush1.msra.mxu0 0.0
        %1275 = vmatprep.subr.mxu0 0.0
        %1276 = vmatpush1.msra.mxu0 0.0
        %1277 = vmatprep.subr.mxu0 0.0
        %1278 = vmatpush1.msra.mxu0 0.0
        %1279 = vmatprep.subr.mxu0 0.0
        %1280 = vmatpush1.msra.mxu0 0.0
        %1281 = vmatprep.subr.mxu0 0.0
        %1282 = vmatpush1.msra.mxu0 0.0
        %1283 = vmatprep.subr.mxu0 0.0
        %1284 = vmatpush1.msra.mxu0 0.0
        %1285 = vmatprep.mubr.f32.mxu0 0.0
        %v1286 = vand.u32 %v215, 4294901760
        %v1287 = vsub.f32 %v215, %v1286
        %1288 = vmatmul.mubr.f32.gmra.mrb[0].mxu0 %v1287
        %v1289 = vpop.f32.mrb[0].mxu0
        %v1290 = vadd.f32 %v1178, %v1289
        %v1291 = vpop.f32.mrb[0].mxu0
        %v1292 = vadd.f32 %v1180, %v1291
        %1293 = vmatprep.mubr.f32.mxu0 0.0
        %v1294 = vand.u32 %v218, 4294901760
        %v1295 = vsub.f32 %v218, %v1294
        %1296 = vmatmul.mubr.f32.gmra.mrb[0].mxu0 %v1295
        %v1297 = vpop.f32.mrb[0].mxu0
        %v1298 = vadd.f32 %v1185, %v1297
        %v1299 = vpop.f32.mrb[0].mxu0
        %v1300 = vadd.f32 %v1187, %v1299
        %1301 = vmatprep.mubr.f32.mxu0 0.0
        %v1302 = vand.u32 %v221, 4294901760
        %v1303 = vsub.f32 %v221, %v1302
        %1304 = vmatmul.mubr.f32.gmra.mrb[0].mxu0 %v1303
        %v1305 = vpop.f32.mrb[0].mxu0
        %v1306 = vadd.f32 %v1192, %v1305
        %v1307 = vpop.f32.mrb[0].mxu0
        %v1308 = vadd.f32 %v1194, %v1307
        %1309 = vmatprep.mubr.f32.mxu0 0.0
        %v1310 = vand.u32 %v224, 4294901760
        %v1311 = vsub.f32 %v224, %v1310
        %1312 = vmatmul.mubr.f32.gmra.mrb[0].mxu0 %v1311
        %v1313 = vpop.f32.mrb[0].mxu0
        %v1314 = vadd.f32 %v1199, %v1313
        %v1315 = vpop.f32.mrb[0].mxu0
        %v1316 = vadd.f32 %v1201, %v1315
        %1317 = vmatprep.mubr.f32.mxu0 0.0
        %v1318 = vand.u32 %v227, 4294901760
        %v1319 = vsub.f32 %v227, %v1318
        %1320 = vmatmul.mubr.f32.gmra.mrb[0].mxu0 %v1319
        %v1321 = vpop.f32.mrb[0].mxu0
        %v1322 = vadd.f32 %v1206, %v1321
        %v1323 = vpop.f32.mrb[0].mxu0
        %v1324 = vadd.f32 %v1208, %v1323
        %1325 = vmatprep.mubr.f32.mxu0 0.0
        %v1326 = vand.u32 %v230, 4294901760
        %v1327 = vsub.f32 %v230, %v1326
        %1328 = vmatmul.mubr.f32.gmra.mrb[0].mxu0 %v1327
        %v1329 = vpop.f32.mrb[0].mxu0
        %v1330 = vadd.f32 %v1213, %v1329
        %v1331 = vpop.f32.mrb[0].mxu0
        %v1332 = vadd.f32 %v1215, %v1331
        %1333 = vdwg.mxu0
        %v1334 = vand.u32 %v243, 4294901760
        %1335 = vmatprep.subr.mxu0 %v1334
        %v1336 = vand.u32 %v240, 4294901760
        %1337 = vmatpush1.msra.mxu0 %v1336
        %1338 = vmatprep.subr.mxu0 0.0
        %1339 = vmatpush1.msra.mxu0 0.0
        %1340 = vmatprep.subr.mxu0 0.0
        %1341 = vmatpush1.msra.mxu0 0.0
        %1342 = vmatprep.subr.mxu0 0.0
        %1343 = vmatpush1.msra.mxu0 0.0
        %1344 = vmatprep.subr.mxu0 0.0
        %1345 = vmatpush1.msra.mxu0 0.0
        %1346 = vmatprep.subr.mxu0 0.0
        %1347 = vmatpush1.msra.mxu0 0.0
        %1348 = vmatprep.subr.mxu0 0.0
        %1349 = vmatpush1.msra.mxu0 0.0
        %1350 = vmatprep.subr.mxu0 0.0
        %1351 = vmatpush1.msra.mxu0 0.0
        %1352 = vmatprep.subr.mxu0 0.0
        %1353 = vmatpush1.msra.mxu0 0.0
        %1354 = vmatprep.subr.mxu0 0.0
        %1355 = vmatpush1.msra.mxu0 0.0
        %1356 = vmatprep.subr.mxu0 0.0
        %1357 = vmatpush1.msra.mxu0 0.0
        %1358 = vmatprep.subr.mxu0 0.0
        %1359 = vmatpush1.msra.mxu0 0.0
        %1360 = vmatprep.subr.mxu0 0.0
        %1361 = vmatpush1.msra.mxu0 0.0
        %1362 = vmatprep.subr.mxu0 0.0
        %1363 = vmatpush1.msra.mxu0 0.0
        %1364 = vmatprep.subr.mxu0 0.0
        %1365 = vmatpush1.msra.mxu0 0.0
        %1366 = vmatprep.subr.mxu0 0.0
        %1367 = vmatpush1.msra.mxu0 0.0
        %1368 = vmatprep.subr.mxu0 0.0
        %1369 = vmatpush1.msra.mxu0 0.0
        %1370 = vmatprep.subr.mxu0 0.0
        %1371 = vmatpush1.msra.mxu0 0.0
        %1372 = vmatprep.subr.mxu0 0.0
        %1373 = vmatpush1.msra.mxu0 0.0
        %1374 = vmatprep.subr.mxu0 0.0
        %1375 = vmatpush1.msra.mxu0 0.0
        %1376 = vmatprep.subr.mxu0 0.0
        %1377 = vmatpush1.msra.mxu0 0.0
        %1378 = vmatprep.subr.mxu0 0.0
        %1379 = vmatpush1.msra.mxu0 0.0
        %1380 = vmatprep.subr.mxu0 0.0
        %1381 = vmatpush1.msra.mxu0 0.0
        %1382 = vmatprep.subr.mxu0 0.0
        %1383 = vmatpush1.msra.mxu0 0.0
        %1384 = vmatprep.subr.mxu0 0.0
        %1385 = vmatpush1.msra.mxu0 0.0
        %1386 = vmatprep.subr.mxu0 0.0
        %1387 = vmatpush1.msra.mxu0 0.0
        %1388 = vmatprep.subr.mxu0 0.0
        %1389 = vmatpush1.msra.mxu0 0.0
        %1390 = vmatprep.subr.mxu0 0.0
        %1391 = vmatpush1.msra.mxu0 0.0
        %1392 = vmatprep.subr.mxu0 0.0
        %1393 = vmatpush1.msra.mxu0 0.0
        %1394 = vmatprep.subr.mxu0 0.0
        %1395 = vmatpush1.msra.mxu0 0.0
        %1396 = vmatprep.subr.mxu0 0.0
        %1397 = vmatpush1.msra.mxu0 0.0
        %1398 = vmatprep.subr.mxu0 0.0
        %1399 = vmatpush1.msra.mxu0 0.0
        %1400 = vmatprep.mubr.f32.mxu0 0.0
        %v1401 = vand.u32 %v215, 4294901760
        %v1402 = vsub.f32 %v215, %v1401
        %v1403 = vand.u32 %v1402, 4294901760
        %1404 = vmatmul.mubr.f32.gmra.mrb[0].mxu0 %v1403
        %v1405 = vpop.f32.mrb[0].mxu0
        %v1406 = vadd.f32 %v1290, %v1405
        %v1407 = vpop.f32.mrb[0].mxu0
        %v1408 = vadd.f32 %v1292, %v1407
        %1409 = vmatprep.mubr.f32.mxu0 0.0
        %v1410 = vand.u32 %v218, 4294901760
        %v1411 = vsub.f32 %v218, %v1410
        %v1412 = vand.u32 %v1411, 4294901760
        %1413 = vmatmul.mubr.f32.gmra.mrb[0].mxu0 %v1412
        %v1414 = vpop.f32.mrb[0].mxu0
        %v1415 = vadd.f32 %v1298, %v1414
        %v1416 = vpop.f32.mrb[0].mxu0
        %v1417 = vadd.f32 %v1300, %v1416
        %1418 = vmatprep.mubr.f32.mxu0 0.0
        %v1419 = vand.u32 %v221, 4294901760
        %v1420 = vsub.f32 %v221, %v1419
        %v1421 = vand.u32 %v1420, 4294901760
        %1422 = vmatmul.mubr.f32.gmra.mrb[0].mxu0 %v1421
        %v1423 = vpop.f32.mrb[0].mxu0
        %v1424 = vadd.f32 %v1306, %v1423
        %v1425 = vpop.f32.mrb[0].mxu0
        %v1426 = vadd.f32 %v1308, %v1425
        %1427 = vmatprep.mubr.f32.mxu0 0.0
        %v1428 = vand.u32 %v224, 4294901760
        %v1429 = vsub.f32 %v224, %v1428
        %v1430 = vand.u32 %v1429, 4294901760
        %1431 = vmatmul.mubr.f32.gmra.mrb[0].mxu0 %v1430
        %v1432 = vpop.f32.mrb[0].mxu0
        %v1433 = vadd.f32 %v1314, %v1432
        %v1434 = vpop.f32.mrb[0].mxu0
        %v1435 = vadd.f32 %v1316, %v1434
        %1436 = vmatprep.mubr.f32.mxu0 0.0
        %v1437 = vand.u32 %v227, 4294901760
        %v1438 = vsub.f32 %v227, %v1437
        %v1439 = vand.u32 %v1438, 4294901760
        %1440 = vmatmul.mubr.f32.gmra.mrb[0].mxu0 %v1439
        %v1441 = vpop.f32.mrb[0].mxu0
        %v1442 = vadd.f32 %v1322, %v1441
        %v1443 = vpop.f32.mrb[0].mxu0
        %v1444 = vadd.f32 %v1324, %v1443
        %1445 = vmatprep.mubr.f32.mxu0 0.0
        %v1446 = vand.u32 %v230, 4294901760
        %v1447 = vsub.f32 %v230, %v1446
        %v1448 = vand.u32 %v1447, 4294901760
        %1449 = vmatmul.mubr.f32.gmra.mrb[0].mxu0 %v1448
        %v1450 = vpop.f32.mrb[0].mxu0
        %v1451 = vadd.f32 %v1330, %v1450
        %v1452 = vpop.f32.mrb[0].mxu0
        %v1453 = vadd.f32 %v1332, %v1452
        %1454 = vdwg.mxu0
        %v1455 = vand.u32 %v243, 4294901760
        %v1456 = vsub.f32 %v243, %v1455
        %v1457 = vand.u32 %v1456, 4294901760
        %1458 = vmatprep.subr.mxu0 %v1457
        %v1459 = vand.u32 %v240, 4294901760
        %v1460 = vsub.f32 %v240, %v1459
        %v1461 = vand.u32 %v1460, 4294901760
        %1462 = vmatpush1.msra.mxu0 %v1461
        %1463 = vmatprep.subr.mxu0 0.0
        %1464 = vmatpush1.msra.mxu0 0.0
        %1465 = vmatprep.subr.mxu0 0.0
        %1466 = vmatpush1.msra.mxu0 0.0
        %1467 = vmatprep.subr.mxu0 0.0
        %1468 = vmatpush1.msra.mxu0 0.0
        %1469 = vmatprep.subr.mxu0 0.0
        %1470 = vmatpush1.msra.mxu0 0.0
        %1471 = vmatprep.subr.mxu0 0.0
        %1472 = vmatpush1.msra.mxu0 0.0
        %1473 = vmatprep.subr.mxu0 0.0
        %1474 = vmatpush1.msra.mxu0 0.0
        %1475 = vmatprep.subr.mxu0 0.0
        %1476 = vmatpush1.msra.mxu0 0.0
        %1477 = vmatprep.subr.mxu0 0.0
        %1478 = vmatpush1.msra.mxu0 0.0
        %1479 = vmatprep.subr.mxu0 0.0
        %1480 = vmatpush1.msra.mxu0 0.0
        %1481 = vmatprep.subr.mxu0 0.0
        %1482 = vmatpush1.msra.mxu0 0.0
        %1483 = vmatprep.subr.mxu0 0.0
        %1484 = vmatpush1.msra.mxu0 0.0
        %1485 = vmatprep.subr.mxu0 0.0
        %1486 = vmatpush1.msra.mxu0 0.0
        %1487 = vmatprep.subr.mxu0 0.0
        %1488 = vmatpush1.msra.mxu0 0.0
        %1489 = vmatprep.subr.mxu0 0.0
        %1490 = vmatpush1.msra.mxu0 0.0
        %1491 = vmatprep.subr.mxu0 0.0
        %1492 = vmatpush1.msra.mxu0 0.0
        %1493 = vmatprep.subr.mxu0 0.0
        %1494 = vmatpush1.msra.mxu0 0.0
        %1495 = vmatprep.subr.mxu0 0.0
        %1496 = vmatpush1.msra.mxu0 0.0
        %1497 = vmatprep.subr.mxu0 0.0
        %1498 = vmatpush1.msra.mxu0 0.0
        %1499 = vmatprep.subr.mxu0 0.0
        %1500 = vmatpush1.msra.mxu0 0.0
        %1501 = vmatprep.subr.mxu0 0.0
        %1502 = vmatpush1.msra.mxu0 0.0
        %1503 = vmatprep.subr.mxu0 0.0
        %1504 = vmatpush1.msra.mxu0 0.0
        %1505 = vmatprep.subr.mxu0 0.0
        %1506 = vmatpush1.msra.mxu0 0.0
        %1507 = vmatprep.subr.mxu0 0.0
        %1508 = vmatpush1.msra.mxu0 0.0
        %1509 = vmatprep.subr.mxu0 0.0
        %1510 = vmatpush1.msra.mxu0 0.0
        %1511 = vmatprep.subr.mxu0 0.0
        %1512 = vmatpush1.msra.mxu0 0.0
        %1513 = vmatprep.subr.mxu0 0.0
        %1514 = vmatpush1.msra.mxu0 0.0
        %1515 = vmatprep.subr.mxu0 0.0
        %1516 = vmatpush1.msra.mxu0 0.0
        %1517 = vmatprep.subr.mxu0 0.0
        %1518 = vmatpush1.msra.mxu0 0.0
        %1519 = vmatprep.subr.mxu0 0.0
        %1520 = vmatpush1.msra.mxu0 0.0
        %1521 = vmatprep.subr.mxu0 0.0
        %1522 = vmatpush1.msra.mxu0 0.0
        %1523 = vmatprep.subr.mxu0 0.0
        %1524 = vmatpush1.msra.mxu0 0.0
        %1525 = vmatprep.mubr.f32.mxu0 0.0
        %v1526 = vand.u32 %v215, 4294901760
        %1527 = vmatmul.mubr.f32.gmra.mrb[0].mxu0 %v1526
        %v1528 = vpop.f32.mrb[0].mxu0
        %v1529 = vadd.f32 %v1406, %v1528
        %v1530 = vpop.f32.mrb[0].mxu0
        %v1531 = vadd.f32 %v1408, %v1530
        %1532 = vmatprep.mubr.f32.mxu0 0.0
        %v1533 = vand.u32 %v218, 4294901760
        %1534 = vmatmul.mubr.f32.gmra.mrb[0].mxu0 %v1533
        %v1535 = vpop.f32.mrb[0].mxu0
        %v1536 = vadd.f32 %v1415, %v1535
        %v1537 = vpop.f32.mrb[0].mxu0
        %v1538 = vadd.f32 %v1417, %v1537
        %1539 = vmatprep.mubr.f32.mxu0 0.0
        %v1540 = vand.u32 %v221, 4294901760
        %1541 = vmatmul.mubr.f32.gmra.mrb[0].mxu0 %v1540
        %v1542 = vpop.f32.mrb[0].mxu0
        %v1543 = vadd.f32 %v1424, %v1542
        %v1544 = vpop.f32.mrb[0].mxu0
        %v1545 = vadd.f32 %v1426, %v1544
        %1546 = vmatprep.mubr.f32.mxu0 0.0
        %v1547 = vand.u32 %v224, 4294901760
        %1548 = vmatmul.mubr.f32.gmra.mrb[0].mxu0 %v1547
        %v1549 = vpop.f32.mrb[0].mxu0
        %v1550 = vadd.f32 %v1433, %v1549
        %v1551 = vpop.f32.mrb[0].mxu0
        %v1552 = vadd.f32 %v1435, %v1551
        %1553 = vmatprep.mubr.f32.mxu0 0.0
        %v1554 = vand.u32 %v227, 4294901760
        %1555 = vmatmul.mubr.f32.gmra.mrb[0].mxu0 %v1554
        %v1556 = vpop.f32.mrb[0].mxu0
        %v1557 = vadd.f32 %v1442, %v1556
        %v1558 = vpop.f32.mrb[0].mxu0
        %v1559 = vadd.f32 %v1444, %v1558
        %1560 = vmatprep.mubr.f32.mxu0 0.0
        %v1561 = vand.u32 %v230, 4294901760
        %1562 = vmatmul.mubr.f32.gmra.mrb[0].mxu0 %v1561
        %v1563 = vpop.f32.mrb[0].mxu0
        %v1564 = vadd.f32 %v1451, %v1563
        %v1565 = vpop.f32.mrb[0].mxu0
        %v1566 = vadd.f32 %v1453, %v1565
        %1567 = vdwg.mxu0
        %v1568 = vand.u32 %v243, 4294901760
        %1569 = vmatprep.subr.mxu0 %v1568
        %v1570 = vand.u32 %v240, 4294901760
        %1571 = vmatpush1.msra.mxu0 %v1570
        %1572 = vmatprep.subr.mxu0 0.0
        %1573 = vmatpush1.msra.mxu0 0.0
        %1574 = vmatprep.subr.mxu0 0.0
        %1575 = vmatpush1.msra.mxu0 0.0
        %1576 = vmatprep.subr.mxu0 0.0
        %1577 = vmatpush1.msra.mxu0 0.0
        %1578 = vmatprep.subr.mxu0 0.0
        %1579 = vmatpush1.msra.mxu0 0.0
        %1580 = vmatprep.subr.mxu0 0.0
        %1581 = vmatpush1.msra.mxu0 0.0
        %1582 = vmatprep.subr.mxu0 0.0
        %1583 = vmatpush1.msra.mxu0 0.0
        %1584 = vmatprep.subr.mxu0 0.0
        %1585 = vmatpush1.msra.mxu0 0.0
        %1586 = vmatprep.subr.mxu0 0.0
        %1587 = vmatpush1.msra.mxu0 0.0
        %1588 = vmatprep.subr.mxu0 0.0
        %1589 = vmatpush1.msra.mxu0 0.0
        %1590 = vmatprep.subr.mxu0 0.0
        %1591 = vmatpush1.msra.mxu0 0.0
        %1592 = vmatprep.subr.mxu0 0.0
        %1593 = vmatpush1.msra.mxu0 0.0
        %1594 = vmatprep.subr.mxu0 0.0
        %1595 = vmatpush1.msra.mxu0 0.0
        %1596 = vmatprep.subr.mxu0 0.0
        %1597 = vmatpush1.msra.mxu0 0.0
        %1598 = vmatprep.subr.mxu0 0.0
        %1599 = vmatpush1.msra.mxu0 0.0
        %1600 = vmatprep.subr.mxu0 0.0
        %1601 = vmatpush1.msra.mxu0 0.0
        %1602 = vmatprep.subr.mxu0 0.0
        %1603 = vmatpush1.msra.mxu0 0.0
        %1604 = vmatprep.subr.mxu0 0.0
        %1605 = vmatpush1.msra.mxu0 0.0
        %1606 = vmatprep.subr.mxu0 0.0
        %1607 = vmatpush1.msra.mxu0 0.0
        %1608 = vmatprep.subr.mxu0 0.0
        %1609 = vmatpush1.msra.mxu0 0.0
        %1610 = vmatprep.subr.mxu0 0.0
        %1611 = vmatpush1.msra.mxu0 0.0
        %1612 = vmatprep.subr.mxu0 0.0
        %1613 = vmatpush1.msra.mxu0 0.0
        %1614 = vmatprep.subr.mxu0 0.0
        %1615 = vmatpush1.msra.mxu0 0.0
        %1616 = vmatprep.subr.mxu0 0.0
        %1617 = vmatpush1.msra.mxu0 0.0
        %1618 = vmatprep.subr.mxu0 0.0
        %1619 = vmatpush1.msra.mxu0 0.0
        %1620 = vmatprep.subr.mxu0 0.0
        %1621 = vmatpush1.msra.mxu0 0.0
        %1622 = vmatprep.subr.mxu0 0.0
        %1623 = vmatpush1.msra.mxu0 0.0
        %1624 = vmatprep.subr.mxu0 0.0
        %1625 = vmatpush1.msra.mxu0 0.0
        %1626 = vmatprep.subr.mxu0 0.0
        %1627 = vmatpush1.msra.mxu0 0.0
        %1628 = vmatprep.subr.mxu0 0.0
        %1629 = vmatpush1.msra.mxu0 0.0
        %1630 = vmatprep.subr.mxu0 0.0
        %1631 = vmatpush1.msra.mxu0 0.0
        %1632 = vmatprep.subr.mxu0 0.0
        %1633 = vmatpush1.msra.mxu0 0.0
        %1634 = vmatprep.mubr.f32.mxu0 0.0
        %v1635 = vand.u32 %v215, 4294901760
        %1636 = vmatmul.mubr.f32.gmra.mrb[0].mxu0 %v1635
        %v1637 = vpop.f32.mrb[0].mxu0
        %v1638 = vadd.f32 %v1529, %v1637
        %v1639 = vpop.f32.mrb[0].mxu0
        %v1640 = vadd.f32 %v1531, %v1639
        %1641 = vmatprep.mubr.f32.mxu0 0.0
        %v1642 = vand.u32 %v218, 4294901760
        %1643 = vmatmul.mubr.f32.gmra.mrb[0].mxu0 %v1642
        %v1644 = vpop.f32.mrb[0].mxu0
        %v1645 = vadd.f32 %v1536, %v1644
        %v1646 = vpop.f32.mrb[0].mxu0
        %v1647 = vadd.f32 %v1538, %v1646
        %1648 = vmatprep.mubr.f32.mxu0 0.0
        %v1649 = vand.u32 %v221, 4294901760
        %1650 = vmatmul.mubr.f32.gmra.mrb[0].mxu0 %v1649
        %v1651 = vpop.f32.mrb[0].mxu0
        %v1652 = vadd.f32 %v1543, %v1651
        %v1653 = vpop.f32.mrb[0].mxu0
        %v1654 = vadd.f32 %v1545, %v1653
        %1655 = vmatprep.mubr.f32.mxu0 0.0
        %v1656 = vand.u32 %v224, 4294901760
        %1657 = vmatmul.mubr.f32.gmra.mrb[0].mxu0 %v1656
        %v1658 = vpop.f32.mrb[0].mxu0
        %v1659 = vadd.f32 %v1550, %v1658
        %v1660 = vpop.f32.mrb[0].mxu0
        %v1661 = vadd.f32 %v1552, %v1660
        %1662 = vmatprep.mubr.f32.mxu0 0.0
        %v1663 = vand.u32 %v227, 4294901760
        %1664 = vmatmul.mubr.f32.gmra.mrb[0].mxu0 %v1663
        %v1665 = vpop.f32.mrb[0].mxu0
        %v1666 = vadd.f32 %v1557, %v1665
        %v1667 = vpop.f32.mrb[0].mxu0
        %v1668 = vadd.f32 %v1559, %v1667
        %1669 = vmatprep.mubr.f32.mxu0 0.0
        %v1670 = vand.u32 %v230, 4294901760
        %1671 = vmatmul.mubr.f32.gmra.mrb[0].mxu0 %v1670
        %v1672 = vpop.f32.mrb[0].mxu0
        %v1673 = vadd.f32 %v1564, %v1672
        %v1674 = vpop.f32.mrb[0].mxu0
        %v1675 = vadd.f32 %v1566, %v1674
        %1676 = vdwg.mxu0
        %v1677 = vand.u32 %v249, 4294901760
        %1678 = vmatprep.subr.mxu0 %v1677
        %v1679 = vand.u32 %v246, 4294901760
        %1680 = vmatpush1.msra.mxu0 %v1679
        %1681 = vmatprep.subr.mxu0 0.0
        %1682 = vmatpush1.msra.mxu0 0.0
        %1683 = vmatprep.subr.mxu0 0.0
        %1684 = vmatpush1.msra.mxu0 0.0
        %1685 = vmatprep.subr.mxu0 0.0
        %1686 = vmatpush1.msra.mxu0 0.0
        %1687 = vmatprep.subr.mxu0 0.0
        %1688 = vmatpush1.msra.mxu0 0.0
        %1689 = vmatprep.subr.mxu0 0.0
        %1690 = vmatpush1.msra.mxu0 0.0
        %1691 = vmatprep.subr.mxu0 0.0
        %1692 = vmatpush1.msra.mxu0 0.0
        %1693 = vmatprep.subr.mxu0 0.0
        %1694 = vmatpush1.msra.mxu0 0.0
        %1695 = vmatprep.subr.mxu0 0.0
        %1696 = vmatpush1.msra.mxu0 0.0
        %1697 = vmatprep.subr.mxu0 0.0
        %1698 = vmatpush1.msra.mxu0 0.0
        %1699 = vmatprep.subr.mxu0 0.0
        %1700 = vmatpush1.msra.mxu0 0.0
        %1701 = vmatprep.subr.mxu0 0.0
        %1702 = vmatpush1.msra.mxu0 0.0
        %1703 = vmatprep.subr.mxu0 0.0
        %1704 = vmatpush1.msra.mxu0 0.0
        %1705 = vmatprep.subr.mxu0 0.0
        %1706 = vmatpush1.msra.mxu0 0.0
        %1707 = vmatprep.subr.mxu0 0.0
        %1708 = vmatpush1.msra.mxu0 0.0
        %1709 = vmatprep.subr.mxu0 0.0
        %1710 = vmatpush1.msra.mxu0 0.0
        %1711 = vmatprep.subr.mxu0 0.0
        %1712 = vmatpush1.msra.mxu0 0.0
        %1713 = vmatprep.subr.mxu0 0.0
        %1714 = vmatpush1.msra.mxu0 0.0
        %1715 = vmatprep.subr.mxu0 0.0
        %1716 = vmatpush1.msra.mxu0 0.0
        %1717 = vmatprep.subr.mxu0 0.0
        %1718 = vmatpush1.msra.mxu0 0.0
        %1719 = vmatprep.subr.mxu0 0.0
        %1720 = vmatpush1.msra.mxu0 0.0
        %1721 = vmatprep.subr.mxu0 0.0
        %1722 = vmatpush1.msra.mxu0 0.0
        %1723 = vmatprep.subr.mxu0 0.0
        %1724 = vmatpush1.msra.mxu0 0.0
        %1725 = vmatprep.subr.mxu0 0.0
        %1726 = vmatpush1.msra.mxu0 0.0
        %1727 = vmatprep.subr.mxu0 0.0
        %1728 = vmatpush1.msra.mxu0 0.0
        %1729 = vmatprep.subr.mxu0 0.0
        %1730 = vmatpush1.msra.mxu0 0.0
        %1731 = vmatprep.subr.mxu0 0.0
        %1732 = vmatpush1.msra.mxu0 0.0
        %1733 = vmatprep.subr.mxu0 0.0
        %1734 = vmatpush1.msra.mxu0 0.0
        %1735 = vmatprep.subr.mxu0 0.0
        %1736 = vmatpush1.msra.mxu0 0.0
        %1737 = vmatprep.subr.mxu0 0.0
        %1738 = vmatpush1.msra.mxu0 0.0
        %1739 = vmatprep.subr.mxu0 0.0
        %1740 = vmatpush1.msra.mxu0 0.0
        %1741 = vmatprep.subr.mxu0 0.0
        %1742 = vmatpush1.msra.mxu0 0.0
        %1743 = vmatprep.mubr.f32.mxu0 0.0
        %v1744 = vand.u32 %v215, 4294901760
        %v1745 = vsub.f32 %v215, %v1744
        %v1746 = vand.u32 %v1745, 4294901760
        %v1747 = vsub.f32 %v1745, %v1746
        %v1748 = vand.u32 %v1747, 4294901760
        %1749 = vmatmul.mubr.f32.gmra.mrb[0].mxu0 %v1748
        %v1750 = vpop.f32.mrb[0].mxu0
        %v1751 = vadd.f32 0.0, %v1750
        %v1752 = vpop.f32.mrb[0].mxu0
        %v1753 = vadd.f32 0.0, %v1752
        %1754 = vmatprep.mubr.f32.mxu0 0.0
        %v1755 = vand.u32 %v218, 4294901760
        %v1756 = vsub.f32 %v218, %v1755
        %v1757 = vand.u32 %v1756, 4294901760
        %v1758 = vsub.f32 %v1756, %v1757
        %v1759 = vand.u32 %v1758, 4294901760
        %1760 = vmatmul.mubr.f32.gmra.mrb[0].mxu0 %v1759
        %v1761 = vpop.f32.mrb[0].mxu0
        %v1762 = vadd.f32 0.0, %v1761
        %v1763 = vpop.f32.mrb[0].mxu0
        %v1764 = vadd.f32 0.0, %v1763
        %1765 = vmatprep.mubr.f32.mxu0 0.0
        %v1766 = vand.u32 %v221, 4294901760
        %v1767 = vsub.f32 %v221, %v1766
        %v1768 = vand.u32 %v1767, 4294901760
        %v1769 = vsub.f32 %v1767, %v1768
        %v1770 = vand.u32 %v1769, 4294901760
        %1771 = vmatmul.mubr.f32.gmra.mrb[0].mxu0 %v1770
        %v1772 = vpop.f32.mrb[0].mxu0
        %v1773 = vadd.f32 0.0, %v1772
        %v1774 = vpop.f32.mrb[0].mxu0
        %v1775 = vadd.f32 0.0, %v1774
        %1776 = vmatprep.mubr.f32.mxu0 0.0
        %v1777 = vand.u32 %v224, 4294901760
        %v1778 = vsub.f32 %v224, %v1777
        %v1779 = vand.u32 %v1778, 4294901760
        %v1780 = vsub.f32 %v1778, %v1779
        %v1781 = vand.u32 %v1780, 4294901760
        %1782 = vmatmul.mubr.f32.gmra.mrb[0].mxu0 %v1781
        %v1783 = vpop.f32.mrb[0].mxu0
        %v1784 = vadd.f32 0.0, %v1783
        %v1785 = vpop.f32.mrb[0].mxu0
        %v1786 = vadd.f32 0.0, %v1785
        %1787 = vmatprep.mubr.f32.mxu0 0.0
        %v1788 = vand.u32 %v227, 4294901760
        %v1789 = vsub.f32 %v227, %v1788
        %v1790 = vand.u32 %v1789, 4294901760
        %v1791 = vsub.f32 %v1789, %v1790
        %v1792 = vand.u32 %v1791, 4294901760
        %1793 = vmatmul.mubr.f32.gmra.mrb[0].mxu0 %v1792
        %v1794 = vpop.f32.mrb[0].mxu0
        %v1795 = vadd.f32 0.0, %v1794
        %v1796 = vpop.f32.mrb[0].mxu0
        %v1797 = vadd.f32 0.0, %v1796
        %1798 = vmatprep.mubr.f32.mxu0 0.0
        %v1799 = vand.u32 %v230, 4294901760
        %v1800 = vsub.f32 %v230, %v1799
        %v1801 = vand.u32 %v1800, 4294901760
        %v1802 = vsub.f32 %v1800, %v1801
        %v1803 = vand.u32 %v1802, 4294901760
        %1804 = vmatmul.mubr.f32.gmra.mrb[0].mxu0 %v1803
        %v1805 = vpop.f32.mrb[0].mxu0
        %v1806 = vadd.f32 0.0, %v1805
        %v1807 = vpop.f32.mrb[0].mxu0
        %v1808 = vadd.f32 0.0, %v1807
        %1809 = vdwg.mxu0
        %v1810 = vand.u32 %v249, 4294901760
        %v1811 = vsub.f32 %v249, %v1810
        %v1812 = vand.u32 %v1811, 4294901760
        %v1813 = vsub.f32 %v1811, %v1812
        %v1814 = vand.u32 %v1813, 4294901760
        %1815 = vmatprep.subr.mxu0 %v1814
        %v1816 = vand.u32 %v246, 4294901760
        %v1817 = vsub.f32 %v246, %v1816
        %v1818 = vand.u32 %v1817, 4294901760
        %v1819 = vsub.f32 %v1817, %v1818
        %v1820 = vand.u32 %v1819, 4294901760
        %1821 = vmatpush1.msra.mxu0 %v1820
        %1822 = vmatprep.subr.mxu0 0.0
        %1823 = vmatpush1.msra.mxu0 0.0
        %1824 = vmatprep.subr.mxu0 0.0
        %1825 = vmatpush1.msra.mxu0 0.0
        %1826 = vmatprep.subr.mxu0 0.0
        %1827 = vmatpush1.msra.mxu0 0.0
        %1828 = vmatprep.subr.mxu0 0.0
        %1829 = vmatpush1.msra.mxu0 0.0
        %1830 = vmatprep.subr.mxu0 0.0
        %1831 = vmatpush1.msra.mxu0 0.0
        %1832 = vmatprep.subr.mxu0 0.0
        %1833 = vmatpush1.msra.mxu0 0.0
        %1834 = vmatprep.subr.mxu0 0.0
        %1835 = vmatpush1.msra.mxu0 0.0
        %1836 = vmatprep.subr.mxu0 0.0
        %1837 = vmatpush1.msra.mxu0 0.0
        %1838 = vmatprep.subr.mxu0 0.0
        %1839 = vmatpush1.msra.mxu0 0.0
        %1840 = vmatprep.subr.mxu0 0.0
        %1841 = vmatpush1.msra.mxu0 0.0
        %1842 = vmatprep.subr.mxu0 0.0
        %1843 = vmatpush1.msra.mxu0 0.0
        %1844 = vmatprep.subr.mxu0 0.0
        %1845 = vmatpush1.msra.mxu0 0.0
        %1846 = vmatprep.subr.mxu0 0.0
        %1847 = vmatpush1.msra.mxu0 0.0
        %1848 = vmatprep.subr.mxu0 0.0
        %1849 = vmatpush1.msra.mxu0 0.0
        %1850 = vmatprep.subr.mxu0 0.0
        %1851 = vmatpush1.msra.mxu0 0.0
        %1852 = vmatprep.subr.mxu0 0.0
        %1853 = vmatpush1.msra.mxu0 0.0
        %1854 = vmatprep.subr.mxu0 0.0
        %1855 = vmatpush1.msra.mxu0 0.0
        %1856 = vmatprep.subr.mxu0 0.0
        %1857 = vmatpush1.msra.mxu0 0.0
        %1858 = vmatprep.subr.mxu0 0.0
        %1859 = vmatpush1.msra.mxu0 0.0
        %1860 = vmatprep.subr.mxu0 0.0
        %1861 = vmatpush1.msra.mxu0 0.0
        %1862 = vmatprep.subr.mxu0 0.0
        %1863 = vmatpush1.msra.mxu0 0.0
        %1864 = vmatprep.subr.mxu0 0.0
        %1865 = vmatpush1.msra.mxu0 0.0
        %1866 = vmatprep.subr.mxu0 0.0
        %1867 = vmatpush1.msra.mxu0 0.0
        %1868 = vmatprep.subr.mxu0 0.0
        %1869 = vmatpush1.msra.mxu0 0.0
        %1870 = vmatprep.subr.mxu0 0.0
        %1871 = vmatpush1.msra.mxu0 0.0
        %1872 = vmatprep.subr.mxu0 0.0
        %1873 = vmatpush1.msra.mxu0 0.0
        %1874 = vmatprep.subr.mxu0 0.0
        %1875 = vmatpush1.msra.mxu0 0.0
        %1876 = vmatprep.subr.mxu0 0.0
        %1877 = vmatpush1.msra.mxu0 0.0
        %1878 = vmatprep.subr.mxu0 0.0
        %1879 = vmatpush1.msra.mxu0 0.0
        %1880 = vmatprep.subr.mxu0 0.0
        %1881 = vmatpush1.msra.mxu0 0.0
        %1882 = vmatprep.subr.mxu0 0.0
        %1883 = vmatpush1.msra.mxu0 0.0
        %1884 = vmatprep.mubr.f32.mxu0 0.0
        %v1885 = vand.u32 %v215, 4294901760
        %1886 = vmatmul.mubr.f32.gmra.mrb[0].mxu0 %v1885
        %v1887 = vpop.f32.mrb[0].mxu0
        %v1888 = vadd.f32 %v1751, %v1887
        %v1889 = vpop.f32.mrb[0].mxu0
        %v1890 = vadd.f32 %v1753, %v1889
        %1891 = vmatprep.mubr.f32.mxu0 0.0
        %v1892 = vand.u32 %v218, 4294901760
        %1893 = vmatmul.mubr.f32.gmra.mrb[0].mxu0 %v1892
        %v1894 = vpop.f32.mrb[0].mxu0
        %v1895 = vadd.f32 %v1762, %v1894
        %v1896 = vpop.f32.mrb[0].mxu0
        %v1897 = vadd.f32 %v1764, %v1896
        %1898 = vmatprep.mubr.f32.mxu0 0.0
        %v1899 = vand.u32 %v221, 4294901760
        %1900 = vmatmul.mubr.f32.gmra.mrb[0].mxu0 %v1899
        %v1901 = vpop.f32.mrb[0].mxu0
        %v1902 = vadd.f32 %v1773, %v1901
        %v1903 = vpop.f32.mrb[0].mxu0
        %v1904 = vadd.f32 %v1775, %v1903
        %1905 = vmatprep.mubr.f32.mxu0 0.0
        %v1906 = vand.u32 %v224, 4294901760
        %1907 = vmatmul.mubr.f32.gmra.mrb[0].mxu0 %v1906
        %v1908 = vpop.f32.mrb[0].mxu0
        %v1909 = vadd.f32 %v1784, %v1908
        %v1910 = vpop.f32.mrb[0].mxu0
        %v1911 = vadd.f32 %v1786, %v1910
        %1912 = vmatprep.mubr.f32.mxu0 0.0
        %v1913 = vand.u32 %v227, 4294901760
        %1914 = vmatmul.mubr.f32.gmra.mrb[0].mxu0 %v1913
        %v1915 = vpop.f32.mrb[0].mxu0
        %v1916 = vadd.f32 %v1795, %v1915
        %v1917 = vpop.f32.mrb[0].mxu0
        %v1918 = vadd.f32 %v1797, %v1917
        %1919 = vmatprep.mubr.f32.mxu0 0.0
        %v1920 = vand.u32 %v230, 4294901760
        %1921 = vmatmul.mubr.f32.gmra.mrb[0].mxu0 %v1920
        %v1922 = vpop.f32.mrb[0].mxu0
        %v1923 = vadd.f32 %v1806, %v1922
        %v1924 = vpop.f32.mrb[0].mxu0
        %v1925 = vadd.f32 %v1808, %v1924
        %1926 = vdwg.mxu0
        %v1927 = vand.u32 %v249, 4294901760
        %v1928 = vsub.f32 %v249, %v1927
        %1929 = vmatprep.subr.mxu0 %v1928
        %v1930 = vand.u32 %v246, 4294901760
        %v1931 = vsub.f32 %v246, %v1930
        %1932 = vmatpush1.msra.mxu0 %v1931
        %1933 = vmatprep.subr.mxu0 0.0
        %1934 = vmatpush1.msra.mxu0 0.0
        %1935 = vmatprep.subr.mxu0 0.0
        %1936 = vmatpush1.msra.mxu0 0.0
        %1937 = vmatprep.subr.mxu0 0.0
        %1938 = vmatpush1.msra.mxu0 0.0
        %1939 = vmatprep.subr.mxu0 0.0
        %1940 = vmatpush1.msra.mxu0 0.0
        %1941 = vmatprep.subr.mxu0 0.0
        %1942 = vmatpush1.msra.mxu0 0.0
        %1943 = vmatprep.subr.mxu0 0.0
        %1944 = vmatpush1.msra.mxu0 0.0
        %1945 = vmatprep.subr.mxu0 0.0
        %1946 = vmatpush1.msra.mxu0 0.0
        %1947 = vmatprep.subr.mxu0 0.0
        %1948 = vmatpush1.msra.mxu0 0.0
        %1949 = vmatprep.subr.mxu0 0.0
        %1950 = vmatpush1.msra.mxu0 0.0
        %1951 = vmatprep.subr.mxu0 0.0
        %1952 = vmatpush1.msra.mxu0 0.0
        %1953 = vmatprep.subr.mxu0 0.0
        %1954 = vmatpush1.msra.mxu0 0.0
        %1955 = vmatprep.subr.mxu0 0.0
        %1956 = vmatpush1.msra.mxu0 0.0
        %1957 = vmatprep.subr.mxu0 0.0
        %1958 = vmatpush1.msra.mxu0 0.0
        %1959 = vmatprep.subr.mxu0 0.0
        %1960 = vmatpush1.msra.mxu0 0.0
        %1961 = vmatprep.subr.mxu0 0.0
        %1962 = vmatpush1.msra.mxu0 0.0
        %1963 = vmatprep.subr.mxu0 0.0
        %1964 = vmatpush1.msra.mxu0 0.0
        %1965 = vmatprep.subr.mxu0 0.0
        %1966 = vmatpush1.msra.mxu0 0.0
        %1967 = vmatprep.subr.mxu0 0.0
        %1968 = vmatpush1.msra.mxu0 0.0
        %1969 = vmatprep.subr.mxu0 0.0
        %1970 = vmatpush1.msra.mxu0 0.0
        %1971 = vmatprep.subr.mxu0 0.0
        %1972 = vmatpush1.msra.mxu0 0.0
        %1973 = vmatprep.subr.mxu0 0.0
        %1974 = vmatpush1.msra.mxu0 0.0
        %1975 = vmatprep.subr.mxu0 0.0
        %1976 = vmatpush1.msra.mxu0 0.0
        %1977 = vmatprep.subr.mxu0 0.0
        %1978 = vmatpush1.msra.mxu0 0.0
        %1979 = vmatprep.subr.mxu0 0.0
        %1980 = vmatpush1.msra.mxu0 0.0
        %1981 = vmatprep.subr.mxu0 0.0
        %1982 = vmatpush1.msra.mxu0 0.0
        %1983 = vmatprep.subr.mxu0 0.0
        %1984 = vmatpush1.msra.mxu0 0.0
        %1985 = vmatprep.subr.mxu0 0.0
        %1986 = vmatpush1.msra.mxu0 0.0
        %1987 = vmatprep.subr.mxu0 0.0
        %1988 = vmatpush1.msra.mxu0 0.0
        %1989 = vmatprep.subr.mxu0 0.0
        %1990 = vmatpush1.msra.mxu0 0.0
        %1991 = vmatprep.subr.mxu0 0.0
        %1992 = vmatpush1.msra.mxu0 0.0
        %1993 = vmatprep.subr.mxu0 0.0
        %1994 = vmatpush1.msra.mxu0 0.0
        %1995 = vmatprep.mubr.f32.mxu0 0.0
        %v1996 = vand.u32 %v215, 4294901760
        %v1997 = vsub.f32 %v215, %v1996
        %1998 = vmatmul.mubr.f32.gmra.mrb[0].mxu0 %v1997
        %v1999 = vpop.f32.mrb[0].mxu0
        %v2000 = vadd.f32 %v1888, %v1999
        %v2001 = vpop.f32.mrb[0].mxu0
        %v2002 = vadd.f32 %v1890, %v2001
        %2003 = vmatprep.mubr.f32.mxu0 0.0
        %v2004 = vand.u32 %v218, 4294901760
        %v2005 = vsub.f32 %v218, %v2004
        %2006 = vmatmul.mubr.f32.gmra.mrb[0].mxu0 %v2005
        %v2007 = vpop.f32.mrb[0].mxu0
        %v2008 = vadd.f32 %v1895, %v2007
        %v2009 = vpop.f32.mrb[0].mxu0
        %v2010 = vadd.f32 %v1897, %v2009
        %2011 = vmatprep.mubr.f32.mxu0 0.0
        %v2012 = vand.u32 %v221, 4294901760
        %v2013 = vsub.f32 %v221, %v2012
        %2014 = vmatmul.mubr.f32.gmra.mrb[0].mxu0 %v2013
        %v2015 = vpop.f32.mrb[0].mxu0
        %v2016 = vadd.f32 %v1902, %v2015
        %v2017 = vpop.f32.mrb[0].mxu0
        %v2018 = vadd.f32 %v1904, %v2017
        %2019 = vmatprep.mubr.f32.mxu0 0.0
        %v2020 = vand.u32 %v224, 4294901760
        %v2021 = vsub.f32 %v224, %v2020
        %2022 = vmatmul.mubr.f32.gmra.mrb[0].mxu0 %v2021
        %v2023 = vpop.f32.mrb[0].mxu0
        %v2024 = vadd.f32 %v1909, %v2023
        %v2025 = vpop.f32.mrb[0].mxu0
        %v2026 = vadd.f32 %v1911, %v2025
        %2027 = vmatprep.mubr.f32.mxu0 0.0
        %v2028 = vand.u32 %v227, 4294901760
        %v2029 = vsub.f32 %v227, %v2028
        %2030 = vmatmul.mubr.f32.gmra.mrb[0].mxu0 %v2029
        %v2031 = vpop.f32.mrb[0].mxu0
        %v2032 = vadd.f32 %v1916, %v2031
        %v2033 = vpop.f32.mrb[0].mxu0
        %v2034 = vadd.f32 %v1918, %v2033
        %2035 = vmatprep.mubr.f32.mxu0 0.0
        %v2036 = vand.u32 %v230, 4294901760
        %v2037 = vsub.f32 %v230, %v2036
        %2038 = vmatmul.mubr.f32.gmra.mrb[0].mxu0 %v2037
        %v2039 = vpop.f32.mrb[0].mxu0
        %v2040 = vadd.f32 %v1923, %v2039
        %v2041 = vpop.f32.mrb[0].mxu0
        %v2042 = vadd.f32 %v1925, %v2041
        %2043 = vdwg.mxu0
        %v2044 = vand.u32 %v249, 4294901760
        %2045 = vmatprep.subr.mxu0 %v2044
        %v2046 = vand.u32 %v246, 4294901760
        %2047 = vmatpush1.msra.mxu0 %v2046
        %2048 = vmatprep.subr.mxu0 0.0
        %2049 = vmatpush1.msra.mxu0 0.0
        %2050 = vmatprep.subr.mxu0 0.0
        %2051 = vmatpush1.msra.mxu0 0.0
        %2052 = vmatprep.subr.mxu0 0.0
        %2053 = vmatpush1.msra.mxu0 0.0
        %2054 = vmatprep.subr.mxu0 0.0
        %2055 = vmatpush1.msra.mxu0 0.0
        %2056 = vmatprep.subr.mxu0 0.0
        %2057 = vmatpush1.msra.mxu0 0.0
        %2058 = vmatprep.subr.mxu0 0.0
        %2059 = vmatpush1.msra.mxu0 0.0
        %2060 = vmatprep.subr.mxu0 0.0
        %2061 = vmatpush1.msra.mxu0 0.0
        %2062 = vmatprep.subr.mxu0 0.0
        %2063 = vmatpush1.msra.mxu0 0.0
        %2064 = vmatprep.subr.mxu0 0.0
        %2065 = vmatpush1.msra.mxu0 0.0
        %2066 = vmatprep.subr.mxu0 0.0
        %2067 = vmatpush1.msra.mxu0 0.0
        %2068 = vmatprep.subr.mxu0 0.0
        %2069 = vmatpush1.msra.mxu0 0.0
        %2070 = vmatprep.subr.mxu0 0.0
        %2071 = vmatpush1.msra.mxu0 0.0
        %2072 = vmatprep.subr.mxu0 0.0
        %2073 = vmatpush1.msra.mxu0 0.0
        %2074 = vmatprep.subr.mxu0 0.0
        %2075 = vmatpush1.msra.mxu0 0.0
        %2076 = vmatprep.subr.mxu0 0.0
        %2077 = vmatpush1.msra.mxu0 0.0
        %2078 = vmatprep.subr.mxu0 0.0
        %2079 = vmatpush1.msra.mxu0 0.0
        %2080 = vmatprep.subr.mxu0 0.0
        %2081 = vmatpush1.msra.mxu0 0.0
        %2082 = vmatprep.subr.mxu0 0.0
        %2083 = vmatpush1.msra.mxu0 0.0
        %2084 = vmatprep.subr.mxu0 0.0
        %2085 = vmatpush1.msra.mxu0 0.0
        %2086 = vmatprep.subr.mxu0 0.0
        %2087 = vmatpush1.msra.mxu0 0.0
        %2088 = vmatprep.subr.mxu0 0.0
        %2089 = vmatpush1.msra.mxu0 0.0
        %2090 = vmatprep.subr.mxu0 0.0
        %2091 = vmatpush1.msra.mxu0 0.0
        %2092 = vmatprep.subr.mxu0 0.0
        %2093 = vmatpush1.msra.mxu0 0.0
        %2094 = vmatprep.subr.mxu0 0.0
        %2095 = vmatpush1.msra.mxu0 0.0
        %2096 = vmatprep.subr.mxu0 0.0
        %2097 = vmatpush1.msra.mxu0 0.0
        %2098 = vmatprep.subr.mxu0 0.0
        %2099 = vmatpush1.msra.mxu0 0.0
        %2100 = vmatprep.subr.mxu0 0.0
        %2101 = vmatpush1.msra.mxu0 0.0
        %2102 = vmatprep.subr.mxu0 0.0
        %2103 = vmatpush1.msra.mxu0 0.0
        %2104 = vmatprep.subr.mxu0 0.0
        %2105 = vmatpush1.msra.mxu0 0.0
        %2106 = vmatprep.subr.mxu0 0.0
        %2107 = vmatpush1.msra.mxu0 0.0
        %2108 = vmatprep.subr.mxu0 0.0
        %2109 = vmatpush1.msra.mxu0 0.0
        %2110 = vmatprep.mubr.f32.mxu0 0.0
        %v2111 = vand.u32 %v215, 4294901760
        %v2112 = vsub.f32 %v215, %v2111
        %v2113 = vand.u32 %v2112, 4294901760
        %2114 = vmatmul.mubr.f32.gmra.mrb[0].mxu0 %v2113
        %v2115 = vpop.f32.mrb[0].mxu0
        %v2116 = vadd.f32 %v2000, %v2115
        %v2117 = vpop.f32.mrb[0].mxu0
        %v2118 = vadd.f32 %v2002, %v2117
        %2119 = vmatprep.mubr.f32.mxu0 0.0
        %v2120 = vand.u32 %v218, 4294901760
        %v2121 = vsub.f32 %v218, %v2120
        %v2122 = vand.u32 %v2121, 4294901760
        %2123 = vmatmul.mubr.f32.gmra.mrb[0].mxu0 %v2122
        %v2124 = vpop.f32.mrb[0].mxu0
        %v2125 = vadd.f32 %v2008, %v2124
        %v2126 = vpop.f32.mrb[0].mxu0
        %v2127 = vadd.f32 %v2010, %v2126
        %2128 = vmatprep.mubr.f32.mxu0 0.0
        %v2129 = vand.u32 %v221, 4294901760
        %v2130 = vsub.f32 %v221, %v2129
        %v2131 = vand.u32 %v2130, 4294901760
        %2132 = vmatmul.mubr.f32.gmra.mrb[0].mxu0 %v2131
        %v2133 = vpop.f32.mrb[0].mxu0
        %v2134 = vadd.f32 %v2016, %v2133
        %v2135 = vpop.f32.mrb[0].mxu0
        %v2136 = vadd.f32 %v2018, %v2135
        %2137 = vmatprep.mubr.f32.mxu0 0.0
        %v2138 = vand.u32 %v224, 4294901760
        %v2139 = vsub.f32 %v224, %v2138
        %v2140 = vand.u32 %v2139, 4294901760
        %2141 = vmatmul.mubr.f32.gmra.mrb[0].mxu0 %v2140
        %v2142 = vpop.f32.mrb[0].mxu0
        %v2143 = vadd.f32 %v2024, %v2142
        %v2144 = vpop.f32.mrb[0].mxu0
        %v2145 = vadd.f32 %v2026, %v2144
        %2146 = vmatprep.mubr.f32.mxu0 0.0
        %v2147 = vand.u32 %v227, 4294901760
        %v2148 = vsub.f32 %v227, %v2147
        %v2149 = vand.u32 %v2148, 4294901760
        %2150 = vmatmul.mubr.f32.gmra.mrb[0].mxu0 %v2149
        %v2151 = vpop.f32.mrb[0].mxu0
        %v2152 = vadd.f32 %v2032, %v2151
        %v2153 = vpop.f32.mrb[0].mxu0
        %v2154 = vadd.f32 %v2034, %v2153
        %2155 = vmatprep.mubr.f32.mxu0 0.0
        %v2156 = vand.u32 %v230, 4294901760
        %v2157 = vsub.f32 %v230, %v2156
        %v2158 = vand.u32 %v2157, 4294901760
        %2159 = vmatmul.mubr.f32.gmra.mrb[0].mxu0 %v2158
        %v2160 = vpop.f32.mrb[0].mxu0
        %v2161 = vadd.f32 %v2040, %v2160
        %v2162 = vpop.f32.mrb[0].mxu0
        %v2163 = vadd.f32 %v2042, %v2162
        %2164 = vdwg.mxu0
        %v2165 = vand.u32 %v249, 4294901760
        %v2166 = vsub.f32 %v249, %v2165
        %v2167 = vand.u32 %v2166, 4294901760
        %2168 = vmatprep.subr.mxu0 %v2167
        %v2169 = vand.u32 %v246, 4294901760
        %v2170 = vsub.f32 %v246, %v2169
        %v2171 = vand.u32 %v2170, 4294901760
        %2172 = vmatpush1.msra.mxu0 %v2171
        %2173 = vmatprep.subr.mxu0 0.0
        %2174 = vmatpush1.msra.mxu0 0.0
        %2175 = vmatprep.subr.mxu0 0.0
        %2176 = vmatpush1.msra.mxu0 0.0
        %2177 = vmatprep.subr.mxu0 0.0
        %2178 = vmatpush1.msra.mxu0 0.0
        %2179 = vmatprep.subr.mxu0 0.0
        %2180 = vmatpush1.msra.mxu0 0.0
        %2181 = vmatprep.subr.mxu0 0.0
        %2182 = vmatpush1.msra.mxu0 0.0
        %2183 = vmatprep.subr.mxu0 0.0
        %2184 = vmatpush1.msra.mxu0 0.0
        %2185 = vmatprep.subr.mxu0 0.0
        %2186 = vmatpush1.msra.mxu0 0.0
        %2187 = vmatprep.subr.mxu0 0.0
        %2188 = vmatpush1.msra.mxu0 0.0
        %2189 = vmatprep.subr.mxu0 0.0
        %2190 = vmatpush1.msra.mxu0 0.0
        %2191 = vmatprep.subr.mxu0 0.0
        %2192 = vmatpush1.msra.mxu0 0.0
        %2193 = vmatprep.subr.mxu0 0.0
        %2194 = vmatpush1.msra.mxu0 0.0
        %2195 = vmatprep.subr.mxu0 0.0
        %2196 = vmatpush1.msra.mxu0 0.0
        %2197 = vmatprep.subr.mxu0 0.0
        %2198 = vmatpush1.msra.mxu0 0.0
        %2199 = vmatprep.subr.mxu0 0.0
        %2200 = vmatpush1.msra.mxu0 0.0
        %2201 = vmatprep.subr.mxu0 0.0
        %2202 = vmatpush1.msra.mxu0 0.0
        %2203 = vmatprep.subr.mxu0 0.0
        %2204 = vmatpush1.msra.mxu0 0.0
        %2205 = vmatprep.subr.mxu0 0.0
        %2206 = vmatpush1.msra.mxu0 0.0
        %2207 = vmatprep.subr.mxu0 0.0
        %2208 = vmatpush1.msra.mxu0 0.0
        %2209 = vmatprep.subr.mxu0 0.0
        %2210 = vmatpush1.msra.mxu0 0.0
        %2211 = vmatprep.subr.mxu0 0.0
        %2212 = vmatpush1.msra.mxu0 0.0
        %2213 = vmatprep.subr.mxu0 0.0
        %2214 = vmatpush1.msra.mxu0 0.0
        %2215 = vmatprep.subr.mxu0 0.0
        %2216 = vmatpush1.msra.mxu0 0.0
        %2217 = vmatprep.subr.mxu0 0.0
        %2218 = vmatpush1.msra.mxu0 0.0
        %2219 = vmatprep.subr.mxu0 0.0
        %2220 = vmatpush1.msra.mxu0 0.0
        %2221 = vmatprep.subr.mxu0 0.0
        %2222 = vmatpush1.msra.mxu0 0.0
        %2223 = vmatprep.subr.mxu0 0.0
        %2224 = vmatpush1.msra.mxu0 0.0
        %2225 = vmatprep.subr.mxu0 0.0
        %2226 = vmatpush1.msra.mxu0 0.0
        %2227 = vmatprep.subr.mxu0 0.0
        %2228 = vmatpush1.msra.mxu0 0.0
        %2229 = vmatprep.subr.mxu0 0.0
        %2230 = vmatpush1.msra.mxu0 0.0
        %2231 = vmatprep.subr.mxu0 0.0
        %2232 = vmatpush1.msra.mxu0 0.0
        %2233 = vmatprep.subr.mxu0 0.0
        %2234 = vmatpush1.msra.mxu0 0.0
        %2235 = vmatprep.mubr.f32.mxu0 0.0
        %v2236 = vand.u32 %v215, 4294901760
        %2237 = vmatmul.mubr.f32.gmra.mrb[0].mxu0 %v2236
        %v2238 = vpop.f32.mrb[0].mxu0
        %v2239 = vadd.f32 %v2116, %v2238
        %v2240 = vpop.f32.mrb[0].mxu0
        %v2241 = vadd.f32 %v2118, %v2240
        %2242 = vmatprep.mubr.f32.mxu0 0.0
        %v2243 = vand.u32 %v218, 4294901760
        %2244 = vmatmul.mubr.f32.gmra.mrb[0].mxu0 %v2243
        %v2245 = vpop.f32.mrb[0].mxu0
        %v2246 = vadd.f32 %v2125, %v2245
        %v2247 = vpop.f32.mrb[0].mxu0
        %v2248 = vadd.f32 %v2127, %v2247
        %2249 = vmatprep.mubr.f32.mxu0 0.0
        %v2250 = vand.u32 %v221, 4294901760
        %2251 = vmatmul.mubr.f32.gmra.mrb[0].mxu0 %v2250
        %v2252 = vpop.f32.mrb[0].mxu0
        %v2253 = vadd.f32 %v2134, %v2252
        %v2254 = vpop.f32.mrb[0].mxu0
        %v2255 = vadd.f32 %v2136, %v2254
        %2256 = vmatprep.mubr.f32.mxu0 0.0
        %v2257 = vand.u32 %v224, 4294901760
        %2258 = vmatmul.mubr.f32.gmra.mrb[0].mxu0 %v2257
        %v2259 = vpop.f32.mrb[0].mxu0
        %v2260 = vadd.f32 %v2143, %v2259
        %v2261 = vpop.f32.mrb[0].mxu0
        %v2262 = vadd.f32 %v2145, %v2261
        %2263 = vmatprep.mubr.f32.mxu0 0.0
        %v2264 = vand.u32 %v227, 4294901760
        %2265 = vmatmul.mubr.f32.gmra.mrb[0].mxu0 %v2264
        %v2266 = vpop.f32.mrb[0].mxu0
        %v2267 = vadd.f32 %v2152, %v2266
        %v2268 = vpop.f32.mrb[0].mxu0
        %v2269 = vadd.f32 %v2154, %v2268
        %2270 = vmatprep.mubr.f32.mxu0 0.0
        %v2271 = vand.u32 %v230, 4294901760
        %2272 = vmatmul.mubr.f32.gmra.mrb[0].mxu0 %v2271
        %v2273 = vpop.f32.mrb[0].mxu0
        %v2274 = vadd.f32 %v2161, %v2273
        %v2275 = vpop.f32.mrb[0].mxu0
        %v2276 = vadd.f32 %v2163, %v2275
        %2277 = vdwg.mxu0
        %v2278 = vand.u32 %v249, 4294901760
        %2279 = vmatprep.subr.mxu0 %v2278
        %v2280 = vand.u32 %v246, 4294901760
        %2281 = vmatpush1.msra.mxu0 %v2280
        %2282 = vmatprep.subr.mxu0 0.0
        %2283 = vmatpush1.msra.mxu0 0.0
        %2284 = vmatprep.subr.mxu0 0.0
        %2285 = vmatpush1.msra.mxu0 0.0
        %2286 = vmatprep.subr.mxu0 0.0
        %2287 = vmatpush1.msra.mxu0 0.0
        %2288 = vmatprep.subr.mxu0 0.0
        %2289 = vmatpush1.msra.mxu0 0.0
        %2290 = vmatprep.subr.mxu0 0.0
        %2291 = vmatpush1.msra.mxu0 0.0
        %2292 = vmatprep.subr.mxu0 0.0
        %2293 = vmatpush1.msra.mxu0 0.0
        %2294 = vmatprep.subr.mxu0 0.0
        %2295 = vmatpush1.msra.mxu0 0.0
        %2296 = vmatprep.subr.mxu0 0.0
        %2297 = vmatpush1.msra.mxu0 0.0
        %2298 = vmatprep.subr.mxu0 0.0
        %2299 = vmatpush1.msra.mxu0 0.0
        %2300 = vmatprep.subr.mxu0 0.0
        %2301 = vmatpush1.msra.mxu0 0.0
        %2302 = vmatprep.subr.mxu0 0.0
        %2303 = vmatpush1.msra.mxu0 0.0
        %2304 = vmatprep.subr.mxu0 0.0
        %2305 = vmatpush1.msra.mxu0 0.0
        %2306 = vmatprep.subr.mxu0 0.0
        %2307 = vmatpush1.msra.mxu0 0.0
        %2308 = vmatprep.subr.mxu0 0.0
        %2309 = vmatpush1.msra.mxu0 0.0
        %2310 = vmatprep.subr.mxu0 0.0
        %2311 = vmatpush1.msra.mxu0 0.0
        %2312 = vmatprep.subr.mxu0 0.0
        %2313 = vmatpush1.msra.mxu0 0.0
        %2314 = vmatprep.subr.mxu0 0.0
        %2315 = vmatpush1.msra.mxu0 0.0
        %2316 = vmatprep.subr.mxu0 0.0
        %2317 = vmatpush1.msra.mxu0 0.0
        %2318 = vmatprep.subr.mxu0 0.0
        %2319 = vmatpush1.msra.mxu0 0.0
        %2320 = vmatprep.subr.mxu0 0.0
        %2321 = vmatpush1.msra.mxu0 0.0
        %2322 = vmatprep.subr.mxu0 0.0
        %2323 = vmatpush1.msra.mxu0 0.0
        %2324 = vmatprep.subr.mxu0 0.0
        %2325 = vmatpush1.msra.mxu0 0.0
        %2326 = vmatprep.subr.mxu0 0.0
        %2327 = vmatpush1.msra.mxu0 0.0
        %2328 = vmatprep.subr.mxu0 0.0
        %2329 = vmatpush1.msra.mxu0 0.0
        %2330 = vmatprep.subr.mxu0 0.0
        %2331 = vmatpush1.msra.mxu0 0.0
        %2332 = vmatprep.subr.mxu0 0.0
        %2333 = vmatpush1.msra.mxu0 0.0
        %2334 = vmatprep.subr.mxu0 0.0
        %2335 = vmatpush1.msra.mxu0 0.0
        %2336 = vmatprep.subr.mxu0 0.0
        %2337 = vmatpush1.msra.mxu0 0.0
        %2338 = vmatprep.subr.mxu0 0.0
        %2339 = vmatpush1.msra.mxu0 0.0
        %2340 = vmatprep.subr.mxu0 0.0
        %2341 = vmatpush1.msra.mxu0 0.0
        %2342 = vmatprep.subr.mxu0 0.0
        %2343 = vmatpush1.msra.mxu0 0.0
        %2344 = vmatprep.mubr.f32.mxu0 0.0
        %v2345 = vand.u32 %v215, 4294901760
        %2346 = vmatmul.mubr.f32.gmra.mrb[0].mxu0 %v2345
        %v2347 = vpop.f32.mrb[0].mxu0
        %v2348 = vadd.f32 %v2239, %v2347
        %v2349 = vpop.f32.mrb[0].mxu0
        %v2350 = vadd.f32 %v2241, %v2349
        %2351 = vmatprep.mubr.f32.mxu0 0.0
        %v2352 = vand.u32 %v218, 4294901760
        %2353 = vmatmul.mubr.f32.gmra.mrb[0].mxu0 %v2352
        %v2354 = vpop.f32.mrb[0].mxu0
        %v2355 = vadd.f32 %v2246, %v2354
        %v2356 = vpop.f32.mrb[0].mxu0
        %v2357 = vadd.f32 %v2248, %v2356
        %2358 = vmatprep.mubr.f32.mxu0 0.0
        %v2359 = vand.u32 %v221, 4294901760
        %2360 = vmatmul.mubr.f32.gmra.mrb[0].mxu0 %v2359
        %v2361 = vpop.f32.mrb[0].mxu0
        %v2362 = vadd.f32 %v2253, %v2361
        %v2363 = vpop.f32.mrb[0].mxu0
        %v2364 = vadd.f32 %v2255, %v2363
        %2365 = vmatprep.mubr.f32.mxu0 0.0
        %v2366 = vand.u32 %v224, 4294901760
        %2367 = vmatmul.mubr.f32.gmra.mrb[0].mxu0 %v2366
        %v2368 = vpop.f32.mrb[0].mxu0
        %v2369 = vadd.f32 %v2260, %v2368
        %v2370 = vpop.f32.mrb[0].mxu0
        %v2371 = vadd.f32 %v2262, %v2370
        %2372 = vmatprep.mubr.f32.mxu0 0.0
        %v2373 = vand.u32 %v227, 4294901760
        %2374 = vmatmul.mubr.f32.gmra.mrb[0].mxu0 %v2373
        %v2375 = vpop.f32.mrb[0].mxu0
        %v2376 = vadd.f32 %v2267, %v2375
        %v2377 = vpop.f32.mrb[0].mxu0
        %v2378 = vadd.f32 %v2269, %v2377
        %2379 = vmatprep.mubr.f32.mxu0 0.0
        %v2380 = vand.u32 %v230, 4294901760
        %2381 = vmatmul.mubr.f32.gmra.mrb[0].mxu0 %v2380
        %v2382 = vpop.f32.mrb[0].mxu0
        %v2383 = vadd.f32 %v2274, %v2382
        %v2384 = vpop.f32.mrb[0].mxu0
        %v2385 = vadd.f32 %v2276, %v2384
        %2386 = vdwg.mxu0
        %v2387 = vand.u32 %v255, 4294901760
        %2388 = vmatprep.subr.mxu0 %v2387
        %v2389 = vand.u32 %v252, 4294901760
        %2390 = vmatpush1.msra.mxu0 %v2389
        %2391 = vmatprep.subr.mxu0 0.0
        %2392 = vmatpush1.msra.mxu0 0.0
        %2393 = vmatprep.subr.mxu0 0.0
        %2394 = vmatpush1.msra.mxu0 0.0
        %2395 = vmatprep.subr.mxu0 0.0
        %2396 = vmatpush1.msra.mxu0 0.0
        %2397 = vmatprep.subr.mxu0 0.0
        %2398 = vmatpush1.msra.mxu0 0.0
        %2399 = vmatprep.subr.mxu0 0.0
        %2400 = vmatpush1.msra.mxu0 0.0
        %2401 = vmatprep.subr.mxu0 0.0
        %2402 = vmatpush1.msra.mxu0 0.0
        %2403 = vmatprep.subr.mxu0 0.0
        %2404 = vmatpush1.msra.mxu0 0.0
        %2405 = vmatprep.subr.mxu0 0.0
        %2406 = vmatpush1.msra.mxu0 0.0
        %2407 = vmatprep.subr.mxu0 0.0
        %2408 = vmatpush1.msra.mxu0 0.0
        %2409 = vmatprep.subr.mxu0 0.0
        %2410 = vmatpush1.msra.mxu0 0.0
        %2411 = vmatprep.subr.mxu0 0.0
        %2412 = vmatpush1.msra.mxu0 0.0
        %2413 = vmatprep.subr.mxu0 0.0
        %2414 = vmatpush1.msra.mxu0 0.0
        %2415 = vmatprep.subr.mxu0 0.0
        %2416 = vmatpush1.msra.mxu0 0.0
        %2417 = vmatprep.subr.mxu0 0.0
        %2418 = vmatpush1.msra.mxu0 0.0
        %2419 = vmatprep.subr.mxu0 0.0
        %2420 = vmatpush1.msra.mxu0 0.0
        %2421 = vmatprep.subr.mxu0 0.0
        %2422 = vmatpush1.msra.mxu0 0.0
        %2423 = vmatprep.subr.mxu0 0.0
        %2424 = vmatpush1.msra.mxu0 0.0
        %2425 = vmatprep.subr.mxu0 0.0
        %2426 = vmatpush1.msra.mxu0 0.0
        %2427 = vmatprep.subr.mxu0 0.0
        %2428 = vmatpush1.msra.mxu0 0.0
        %2429 = vmatprep.subr.mxu0 0.0
        %2430 = vmatpush1.msra.mxu0 0.0
        %2431 = vmatprep.subr.mxu0 0.0
        %2432 = vmatpush1.msra.mxu0 0.0
        %2433 = vmatprep.subr.mxu0 0.0
        %2434 = vmatpush1.msra.mxu0 0.0
        %2435 = vmatprep.subr.mxu0 0.0
        %2436 = vmatpush1.msra.mxu0 0.0
        %2437 = vmatprep.subr.mxu0 0.0
        %2438 = vmatpush1.msra.mxu0 0.0
        %2439 = vmatprep.subr.mxu0 0.0
        %2440 = vmatpush1.msra.mxu0 0.0
        %2441 = vmatprep.subr.mxu0 0.0
        %2442 = vmatpush1.msra.mxu0 0.0
        %2443 = vmatprep.subr.mxu0 0.0
        %2444 = vmatpush1.msra.mxu0 0.0
        %2445 = vmatprep.subr.mxu0 0.0
        %2446 = vmatpush1.msra.mxu0 0.0
        %2447 = vmatprep.subr.mxu0 0.0
        %2448 = vmatpush1.msra.mxu0 0.0
        %2449 = vmatprep.subr.mxu0 0.0
        %2450 = vmatpush1.msra.mxu0 0.0
        %2451 = vmatprep.subr.mxu0 0.0
        %2452 = vmatpush1.msra.mxu0 0.0
        %2453 = vmatprep.mubr.f32.mxu0 0.0
        %v2454 = vand.u32 %v215, 4294901760
        %v2455 = vsub.f32 %v215, %v2454
        %v2456 = vand.u32 %v2455, 4294901760
        %v2457 = vsub.f32 %v2455, %v2456
        %v2458 = vand.u32 %v2457, 4294901760
        %2459 = vmatmul.mubr.f32.gmra.mrb[0].mxu0 %v2458
        %v2460 = vpop.f32.mrb[0].mxu0
        %v2461 = vadd.f32 0.0, %v2460
        %v2462 = vpop.f32.mrb[0].mxu0
        %v2463 = vadd.f32 0.0, %v2462
        %2464 = vmatprep.mubr.f32.mxu0 0.0
        %v2465 = vand.u32 %v218, 4294901760
        %v2466 = vsub.f32 %v218, %v2465
        %v2467 = vand.u32 %v2466, 4294901760
        %v2468 = vsub.f32 %v2466, %v2467
        %v2469 = vand.u32 %v2468, 4294901760
        %2470 = vmatmul.mubr.f32.gmra.mrb[0].mxu0 %v2469
        %v2471 = vpop.f32.mrb[0].mxu0
        %v2472 = vadd.f32 0.0, %v2471
        %v2473 = vpop.f32.mrb[0].mxu0
        %v2474 = vadd.f32 0.0, %v2473
        %2475 = vmatprep.mubr.f32.mxu0 0.0
        %v2476 = vand.u32 %v221, 4294901760
        %v2477 = vsub.f32 %v221, %v2476
        %v2478 = vand.u32 %v2477, 4294901760
        %v2479 = vsub.f32 %v2477, %v2478
        %v2480 = vand.u32 %v2479, 4294901760
        %2481 = vmatmul.mubr.f32.gmra.mrb[0].mxu0 %v2480
        %v2482 = vpop.f32.mrb[0].mxu0
        %v2483 = vadd.f32 0.0, %v2482
        %v2484 = vpop.f32.mrb[0].mxu0
        %v2485 = vadd.f32 0.0, %v2484
        %2486 = vmatprep.mubr.f32.mxu0 0.0
        %v2487 = vand.u32 %v224, 4294901760
        %v2488 = vsub.f32 %v224, %v2487
        %v2489 = vand.u32 %v2488, 4294901760
        %v2490 = vsub.f32 %v2488, %v2489
        %v2491 = vand.u32 %v2490, 4294901760
        %2492 = vmatmul.mubr.f32.gmra.mrb[0].mxu0 %v2491
        %v2493 = vpop.f32.mrb[0].mxu0
        %v2494 = vadd.f32 0.0, %v2493
        %v2495 = vpop.f32.mrb[0].mxu0
        %v2496 = vadd.f32 0.0, %v2495
        %2497 = vmatprep.mubr.f32.mxu0 0.0
        %v2498 = vand.u32 %v227, 4294901760
        %v2499 = vsub.f32 %v227, %v2498
        %v2500 = vand.u32 %v2499, 4294901760
        %v2501 = vsub.f32 %v2499, %v2500
        %v2502 = vand.u32 %v2501, 4294901760
        %2503 = vmatmul.mubr.f32.gmra.mrb[0].mxu0 %v2502
        %v2504 = vpop.f32.mrb[0].mxu0
        %v2505 = vadd.f32 0.0, %v2504
        %v2506 = vpop.f32.mrb[0].mxu0
        %v2507 = vadd.f32 0.0, %v2506
        %2508 = vmatprep.mubr.f32.mxu0 0.0
        %v2509 = vand.u32 %v230, 4294901760
        %v2510 = vsub.f32 %v230, %v2509
        %v2511 = vand.u32 %v2510, 4294901760
        %v2512 = vsub.f32 %v2510, %v2511
        %v2513 = vand.u32 %v2512, 4294901760
        %2514 = vmatmul.mubr.f32.gmra.mrb[0].mxu0 %v2513
        %v2515 = vpop.f32.mrb[0].mxu0
        %v2516 = vadd.f32 0.0, %v2515
        %v2517 = vpop.f32.mrb[0].mxu0
        %v2518 = vadd.f32 0.0, %v2517
        %2519 = vdwg.mxu0
        %v2520 = vand.u32 %v255, 4294901760
        %v2521 = vsub.f32 %v255, %v2520
        %v2522 = vand.u32 %v2521, 4294901760
        %v2523 = vsub.f32 %v2521, %v2522
        %v2524 = vand.u32 %v2523, 4294901760
        %2525 = vmatprep.subr.mxu0 %v2524
        %v2526 = vand.u32 %v252, 4294901760
        %v2527 = vsub.f32 %v252, %v2526
        %v2528 = vand.u32 %v2527, 4294901760
        %v2529 = vsub.f32 %v2527, %v2528
        %v2530 = vand.u32 %v2529, 4294901760
        %2531 = vmatpush1.msra.mxu0 %v2530
        %2532 = vmatprep.subr.mxu0 0.0
        %2533 = vmatpush1.msra.mxu0 0.0
        %2534 = vmatprep.subr.mxu0 0.0
        %2535 = vmatpush1.msra.mxu0 0.0
        %2536 = vmatprep.subr.mxu0 0.0
        %2537 = vmatpush1.msra.mxu0 0.0
        %2538 = vmatprep.subr.mxu0 0.0
        %2539 = vmatpush1.msra.mxu0 0.0
        %2540 = vmatprep.subr.mxu0 0.0
        %2541 = vmatpush1.msra.mxu0 0.0
        %2542 = vmatprep.subr.mxu0 0.0
        %2543 = vmatpush1.msra.mxu0 0.0
        %2544 = vmatprep.subr.mxu0 0.0
        %2545 = vmatpush1.msra.mxu0 0.0
        %2546 = vmatprep.subr.mxu0 0.0
        %2547 = vmatpush1.msra.mxu0 0.0
        %2548 = vmatprep.subr.mxu0 0.0
        %2549 = vmatpush1.msra.mxu0 0.0
        %2550 = vmatprep.subr.mxu0 0.0
        %2551 = vmatpush1.msra.mxu0 0.0
        %2552 = vmatprep.subr.mxu0 0.0
        %2553 = vmatpush1.msra.mxu0 0.0
        %2554 = vmatprep.subr.mxu0 0.0
        %2555 = vmatpush1.msra.mxu0 0.0
        %2556 = vmatprep.subr.mxu0 0.0
        %2557 = vmatpush1.msra.mxu0 0.0
        %2558 = vmatprep.subr.mxu0 0.0
        %2559 = vmatpush1.msra.mxu0 0.0
        %2560 = vmatprep.subr.mxu0 0.0
        %2561 = vmatpush1.msra.mxu0 0.0
        %2562 = vmatprep.subr.mxu0 0.0
        %2563 = vmatpush1.msra.mxu0 0.0
        %2564 = vmatprep.subr.mxu0 0.0
        %2565 = vmatpush1.msra.mxu0 0.0
        %2566 = vmatprep.subr.mxu0 0.0
        %2567 = vmatpush1.msra.mxu0 0.0
        %2568 = vmatprep.subr.mxu0 0.0
        %2569 = vmatpush1.msra.mxu0 0.0
        %2570 = vmatprep.subr.mxu0 0.0
        %2571 = vmatpush1.msra.mxu0 0.0
        %2572 = vmatprep.subr.mxu0 0.0
        %2573 = vmatpush1.msra.mxu0 0.0
        %2574 = vmatprep.subr.mxu0 0.0
        %2575 = vmatpush1.msra.mxu0 0.0
        %2576 = vmatprep.subr.mxu0 0.0
        %2577 = vmatpush1.msra.mxu0 0.0
        %2578 = vmatprep.subr.mxu0 0.0
        %2579 = vmatpush1.msra.mxu0 0.0
        %2580 = vmatprep.subr.mxu0 0.0
        %2581 = vmatpush1.msra.mxu0 0.0
        %2582 = vmatprep.subr.mxu0 0.0
        %2583 = vmatpush1.msra.mxu0 0.0
        %2584 = vmatprep.subr.mxu0 0.0
        %2585 = vmatpush1.msra.mxu0 0.0
        %2586 = vmatprep.subr.mxu0 0.0
        %2587 = vmatpush1.msra.mxu0 0.0
        %2588 = vmatprep.subr.mxu0 0.0
        %2589 = vmatpush1.msra.mxu0 0.0
        %2590 = vmatprep.subr.mxu0 0.0
        %2591 = vmatpush1.msra.mxu0 0.0
        %2592 = vmatprep.subr.mxu0 0.0
        %2593 = vmatpush1.msra.mxu0 0.0
        %2594 = vmatprep.mubr.f32.mxu0 0.0
        %v2595 = vand.u32 %v215, 4294901760
        %2596 = vmatmul.mubr.f32.gmra.mrb[0].mxu0 %v2595
        %v2597 = vpop.f32.mrb[0].mxu0
        %v2598 = vadd.f32 %v2461, %v2597
        %v2599 = vpop.f32.mrb[0].mxu0
        %v2600 = vadd.f32 %v2463, %v2599
        %2601 = vmatprep.mubr.f32.mxu0 0.0
        %v2602 = vand.u32 %v218, 4294901760
        %2603 = vmatmul.mubr.f32.gmra.mrb[0].mxu0 %v2602
        %v2604 = vpop.f32.mrb[0].mxu0
        %v2605 = vadd.f32 %v2472, %v2604
        %v2606 = vpop.f32.mrb[0].mxu0
        %v2607 = vadd.f32 %v2474, %v2606
        %2608 = vmatprep.mubr.f32.mxu0 0.0
        %v2609 = vand.u32 %v221, 4294901760
        %2610 = vmatmul.mubr.f32.gmra.mrb[0].mxu0 %v2609
        %v2611 = vpop.f32.mrb[0].mxu0
        %v2612 = vadd.f32 %v2483, %v2611
        %v2613 = vpop.f32.mrb[0].mxu0
        %v2614 = vadd.f32 %v2485, %v2613
        %2615 = vmatprep.mubr.f32.mxu0 0.0
        %v2616 = vand.u32 %v224, 4294901760
        %2617 = vmatmul.mubr.f32.gmra.mrb[0].mxu0 %v2616
        %v2618 = vpop.f32.mrb[0].mxu0
        %v2619 = vadd.f32 %v2494, %v2618
        %v2620 = vpop.f32.mrb[0].mxu0
        %v2621 = vadd.f32 %v2496, %v2620
        %2622 = vmatprep.mubr.f32.mxu0 0.0
        %v2623 = vand.u32 %v227, 4294901760
        %2624 = vmatmul.mubr.f32.gmra.mrb[0].mxu0 %v2623
        %v2625 = vpop.f32.mrb[0].mxu0
        %v2626 = vadd.f32 %v2505, %v2625
        %v2627 = vpop.f32.mrb[0].mxu0
        %v2628 = vadd.f32 %v2507, %v2627
        %2629 = vmatprep.mubr.f32.mxu0 0.0
        %v2630 = vand.u32 %v230, 4294901760
        %2631 = vmatmul.mubr.f32.gmra.mrb[0].mxu0 %v2630
        %v2632 = vpop.f32.mrb[0].mxu0
        %v2633 = vadd.f32 %v2516, %v2632
        %v2634 = vpop.f32.mrb[0].mxu0
        %v2635 = vadd.f32 %v2518, %v2634
        %2636 = vdwg.mxu0
        %v2637 = vand.u32 %v255, 4294901760
        %v2638 = vsub.f32 %v255, %v2637
        %2639 = vmatprep.subr.mxu0 %v2638
        %v2640 = vand.u32 %v252, 4294901760
        %v2641 = vsub.f32 %v252, %v2640
        %2642 = vmatpush1.msra.mxu0 %v2641
        %2643 = vmatprep.subr.mxu0 0.0
        %2644 = vmatpush1.msra.mxu0 0.0
        %2645 = vmatprep.subr.mxu0 0.0
        %2646 = vmatpush1.msra.mxu0 0.0
        %2647 = vmatprep.subr.mxu0 0.0
        %2648 = vmatpush1.msra.mxu0 0.0
        %2649 = vmatprep.subr.mxu0 0.0
        %2650 = vmatpush1.msra.mxu0 0.0
        %2651 = vmatprep.subr.mxu0 0.0
        %2652 = vmatpush1.msra.mxu0 0.0
        %2653 = vmatprep.subr.mxu0 0.0
        %2654 = vmatpush1.msra.mxu0 0.0
        %2655 = vmatprep.subr.mxu0 0.0
        %2656 = vmatpush1.msra.mxu0 0.0
        %2657 = vmatprep.subr.mxu0 0.0
        %2658 = vmatpush1.msra.mxu0 0.0
        %2659 = vmatprep.subr.mxu0 0.0
        %2660 = vmatpush1.msra.mxu0 0.0
        %2661 = vmatprep.subr.mxu0 0.0
        %2662 = vmatpush1.msra.mxu0 0.0
        %2663 = vmatprep.subr.mxu0 0.0
        %2664 = vmatpush1.msra.mxu0 0.0
        %2665 = vmatprep.subr.mxu0 0.0
        %2666 = vmatpush1.msra.mxu0 0.0
        %2667 = vmatprep.subr.mxu0 0.0
        %2668 = vmatpush1.msra.mxu0 0.0
        %2669 = vmatprep.subr.mxu0 0.0
        %2670 = vmatpush1.msra.mxu0 0.0
        %2671 = vmatprep.subr.mxu0 0.0
        %2672 = vmatpush1.msra.mxu0 0.0
        %2673 = vmatprep.subr.mxu0 0.0
        %2674 = vmatpush1.msra.mxu0 0.0
        %2675 = vmatprep.subr.mxu0 0.0
        %2676 = vmatpush1.msra.mxu0 0.0
        %2677 = vmatprep.subr.mxu0 0.0
        %2678 = vmatpush1.msra.mxu0 0.0
        %2679 = vmatprep.subr.mxu0 0.0
        %2680 = vmatpush1.msra.mxu0 0.0
        %2681 = vmatprep.subr.mxu0 0.0
        %2682 = vmatpush1.msra.mxu0 0.0
        %2683 = vmatprep.subr.mxu0 0.0
        %2684 = vmatpush1.msra.mxu0 0.0
        %2685 = vmatprep.subr.mxu0 0.0
        %2686 = vmatpush1.msra.mxu0 0.0
        %2687 = vmatprep.subr.mxu0 0.0
        %2688 = vmatpush1.msra.mxu0 0.0
        %2689 = vmatprep.subr.mxu0 0.0
        %2690 = vmatpush1.msra.mxu0 0.0
        %2691 = vmatprep.subr.mxu0 0.0
        %2692 = vmatpush1.msra.mxu0 0.0
        %2693 = vmatprep.subr.mxu0 0.0
        %2694 = vmatpush1.msra.mxu0 0.0
        %2695 = vmatprep.subr.mxu0 0.0
        %2696 = vmatpush1.msra.mxu0 0.0
        %2697 = vmatprep.subr.mxu0 0.0
        %2698 = vmatpush1.msra.mxu0 0.0
        %2699 = vmatprep.subr.mxu0 0.0
        %2700 = vmatpush1.msra.mxu0 0.0
        %2701 = vmatprep.subr.mxu0 0.0
        %2702 = vmatpush1.msra.mxu0 0.0
        %2703 = vmatprep.subr.mxu0 0.0
        %2704 = vmatpush1.msra.mxu0 0.0
        %2705 = vmatprep.mubr.f32.mxu0 0.0
        %v2706 = vand.u32 %v215, 4294901760
        %v2707 = vsub.f32 %v215, %v2706
        %2708 = vmatmul.mubr.f32.gmra.mrb[0].mxu0 %v2707
        %v2709 = vpop.f32.mrb[0].mxu0
        %v2710 = vadd.f32 %v2598, %v2709
        %v2711 = vpop.f32.mrb[0].mxu0
        %v2712 = vadd.f32 %v2600, %v2711
        %2713 = vmatprep.mubr.f32.mxu0 0.0
        %v2714 = vand.u32 %v218, 4294901760
        %v2715 = vsub.f32 %v218, %v2714
        %2716 = vmatmul.mubr.f32.gmra.mrb[0].mxu0 %v2715
        %v2717 = vpop.f32.mrb[0].mxu0
        %v2718 = vadd.f32 %v2605, %v2717
        %v2719 = vpop.f32.mrb[0].mxu0
        %v2720 = vadd.f32 %v2607, %v2719
        %2721 = vmatprep.mubr.f32.mxu0 0.0
        %v2722 = vand.u32 %v221, 4294901760
        %v2723 = vsub.f32 %v221, %v2722
        %2724 = vmatmul.mubr.f32.gmra.mrb[0].mxu0 %v2723
        %v2725 = vpop.f32.mrb[0].mxu0
        %v2726 = vadd.f32 %v2612, %v2725
        %v2727 = vpop.f32.mrb[0].mxu0
        %v2728 = vadd.f32 %v2614, %v2727
        %2729 = vmatprep.mubr.f32.mxu0 0.0
        %v2730 = vand.u32 %v224, 4294901760
        %v2731 = vsub.f32 %v224, %v2730
        %2732 = vmatmul.mubr.f32.gmra.mrb[0].mxu0 %v2731
        %v2733 = vpop.f32.mrb[0].mxu0
        %v2734 = vadd.f32 %v2619, %v2733
        %v2735 = vpop.f32.mrb[0].mxu0
        %v2736 = vadd.f32 %v2621, %v2735
        %2737 = vmatprep.mubr.f32.mxu0 0.0
        %v2738 = vand.u32 %v227, 4294901760
        %v2739 = vsub.f32 %v227, %v2738
        %2740 = vmatmul.mubr.f32.gmra.mrb[0].mxu0 %v2739
        %v2741 = vpop.f32.mrb[0].mxu0
        %v2742 = vadd.f32 %v2626, %v2741
        %v2743 = vpop.f32.mrb[0].mxu0
        %v2744 = vadd.f32 %v2628, %v2743
        %2745 = vmatprep.mubr.f32.mxu0 0.0
        %v2746 = vand.u32 %v230, 4294901760
        %v2747 = vsub.f32 %v230, %v2746
        %2748 = vmatmul.mubr.f32.gmra.mrb[0].mxu0 %v2747
        %v2749 = vpop.f32.mrb[0].mxu0
        %v2750 = vadd.f32 %v2633, %v2749
        %v2751 = vpop.f32.mrb[0].mxu0
        %v2752 = vadd.f32 %v2635, %v2751
        %2753 = vdwg.mxu0
        %v2754 = vand.u32 %v255, 4294901760
        %2755 = vmatprep.subr.mxu0 %v2754
        %v2756 = vand.u32 %v252, 4294901760
        %2757 = vmatpush1.msra.mxu0 %v2756
        %2758 = vmatprep.subr.mxu0 0.0
        %2759 = vmatpush1.msra.mxu0 0.0
        %2760 = vmatprep.subr.mxu0 0.0
        %2761 = vmatpush1.msra.mxu0 0.0
        %2762 = vmatprep.subr.mxu0 0.0
        %2763 = vmatpush1.msra.mxu0 0.0
        %2764 = vmatprep.subr.mxu0 0.0
        %2765 = vmatpush1.msra.mxu0 0.0
        %2766 = vmatprep.subr.mxu0 0.0
        %2767 = vmatpush1.msra.mxu0 0.0
        %2768 = vmatprep.subr.mxu0 0.0
        %2769 = vmatpush1.msra.mxu0 0.0
        %2770 = vmatprep.subr.mxu0 0.0
        %2771 = vmatpush1.msra.mxu0 0.0
        %2772 = vmatprep.subr.mxu0 0.0
        %2773 = vmatpush1.msra.mxu0 0.0
        %2774 = vmatprep.subr.mxu0 0.0
        %2775 = vmatpush1.msra.mxu0 0.0
        %2776 = vmatprep.subr.mxu0 0.0
        %2777 = vmatpush1.msra.mxu0 0.0
        %2778 = vmatprep.subr.mxu0 0.0
        %2779 = vmatpush1.msra.mxu0 0.0
        %2780 = vmatprep.subr.mxu0 0.0
        %2781 = vmatpush1.msra.mxu0 0.0
        %2782 = vmatprep.subr.mxu0 0.0
        %2783 = vmatpush1.msra.mxu0 0.0
        %2784 = vmatprep.subr.mxu0 0.0
        %2785 = vmatpush1.msra.mxu0 0.0
        %2786 = vmatprep.subr.mxu0 0.0
        %2787 = vmatpush1.msra.mxu0 0.0
        %2788 = vmatprep.subr.mxu0 0.0
        %2789 = vmatpush1.msra.mxu0 0.0
        %2790 = vmatprep.subr.mxu0 0.0
        %2791 = vmatpush1.msra.mxu0 0.0
        %2792 = vmatprep.subr.mxu0 0.0
        %2793 = vmatpush1.msra.mxu0 0.0
        %2794 = vmatprep.subr.mxu0 0.0
        %2795 = vmatpush1.msra.mxu0 0.0
        %2796 = vmatprep.subr.mxu0 0.0
        %2797 = vmatpush1.msra.mxu0 0.0
        %2798 = vmatprep.subr.mxu0 0.0
        %2799 = vmatpush1.msra.mxu0 0.0
        %2800 = vmatprep.subr.mxu0 0.0
        %2801 = vmatpush1.msra.mxu0 0.0
        %2802 = vmatprep.subr.mxu0 0.0
        %2803 = vmatpush1.msra.mxu0 0.0
        %2804 = vmatprep.subr.mxu0 0.0
        %2805 = vmatpush1.msra.mxu0 0.0
        %2806 = vmatprep.subr.mxu0 0.0
        %2807 = vmatpush1.msra.mxu0 0.0
        %2808 = vmatprep.subr.mxu0 0.0
        %2809 = vmatpush1.msra.mxu0 0.0
        %2810 = vmatprep.subr.mxu0 0.0
        %2811 = vmatpush1.msra.mxu0 0.0
        %2812 = vmatprep.subr.mxu0 0.0
        %2813 = vmatpush1.msra.mxu0 0.0
        %2814 = vmatprep.subr.mxu0 0.0
        %2815 = vmatpush1.msra.mxu0 0.0
        %2816 = vmatprep.subr.mxu0 0.0
        %2817 = vmatpush1.msra.mxu0 0.0
        %2818 = vmatprep.subr.mxu0 0.0
        %2819 = vmatpush1.msra.mxu0 0.0
        %2820 = vmatprep.mubr.f32.mxu0 0.0
        %v2821 = vand.u32 %v215, 4294901760
        %v2822 = vsub.f32 %v215, %v2821
        %v2823 = vand.u32 %v2822, 4294901760
        %2824 = vmatmul.mubr.f32.gmra.mrb[0].mxu0 %v2823
        %v2825 = vpop.f32.mrb[0].mxu0
        %v2826 = vadd.f32 %v2710, %v2825
        %v2827 = vpop.f32.mrb[0].mxu0
        %v2828 = vadd.f32 %v2712, %v2827
        %2829 = vmatprep.mubr.f32.mxu0 0.0
        %v2830 = vand.u32 %v218, 4294901760
        %v2831 = vsub.f32 %v218, %v2830
        %v2832 = vand.u32 %v2831, 4294901760
        %2833 = vmatmul.mubr.f32.gmra.mrb[0].mxu0 %v2832
        %v2834 = vpop.f32.mrb[0].mxu0
        %v2835 = vadd.f32 %v2718, %v2834
        %v2836 = vpop.f32.mrb[0].mxu0
        %v2837 = vadd.f32 %v2720, %v2836
        %2838 = vmatprep.mubr.f32.mxu0 0.0
        %v2839 = vand.u32 %v221, 4294901760
        %v2840 = vsub.f32 %v221, %v2839
        %v2841 = vand.u32 %v2840, 4294901760
        %2842 = vmatmul.mubr.f32.gmra.mrb[0].mxu0 %v2841
        %v2843 = vpop.f32.mrb[0].mxu0
        %v2844 = vadd.f32 %v2726, %v2843
        %v2845 = vpop.f32.mrb[0].mxu0
        %v2846 = vadd.f32 %v2728, %v2845
        %2847 = vmatprep.mubr.f32.mxu0 0.0
        %v2848 = vand.u32 %v224, 4294901760
        %v2849 = vsub.f32 %v224, %v2848
        %v2850 = vand.u32 %v2849, 4294901760
        %2851 = vmatmul.mubr.f32.gmra.mrb[0].mxu0 %v2850
        %v2852 = vpop.f32.mrb[0].mxu0
        %v2853 = vadd.f32 %v2734, %v2852
        %v2854 = vpop.f32.mrb[0].mxu0
        %v2855 = vadd.f32 %v2736, %v2854
        %2856 = vmatprep.mubr.f32.mxu0 0.0
        %v2857 = vand.u32 %v227, 4294901760
        %v2858 = vsub.f32 %v227, %v2857
        %v2859 = vand.u32 %v2858, 4294901760
        %2860 = vmatmul.mubr.f32.gmra.mrb[0].mxu0 %v2859
        %v2861 = vpop.f32.mrb[0].mxu0
        %v2862 = vadd.f32 %v2742, %v2861
        %v2863 = vpop.f32.mrb[0].mxu0
        %v2864 = vadd.f32 %v2744, %v2863
        %2865 = vmatprep.mubr.f32.mxu0 0.0
        %v2866 = vand.u32 %v230, 4294901760
        %v2867 = vsub.f32 %v230, %v2866
        %v2868 = vand.u32 %v2867, 4294901760
        %2869 = vmatmul.mubr.f32.gmra.mrb[0].mxu0 %v2868
        %v2870 = vpop.f32.mrb[0].mxu0
        %v2871 = vadd.f32 %v2750, %v2870
        %v2872 = vpop.f32.mrb[0].mxu0
        %v2873 = vadd.f32 %v2752, %v2872
        %2874 = vdwg.mxu0
        %v2875 = vand.u32 %v255, 4294901760
        %v2876 = vsub.f32 %v255, %v2875
        %v2877 = vand.u32 %v2876, 4294901760
        %2878 = vmatprep.subr.mxu0 %v2877
        %v2879 = vand.u32 %v252, 4294901760
        %v2880 = vsub.f32 %v252, %v2879
        %v2881 = vand.u32 %v2880, 4294901760
        %2882 = vmatpush1.msra.mxu0 %v2881
        %2883 = vmatprep.subr.mxu0 0.0
        %2884 = vmatpush1.msra.mxu0 0.0
        %2885 = vmatprep.subr.mxu0 0.0
        %2886 = vmatpush1.msra.mxu0 0.0
        %2887 = vmatprep.subr.mxu0 0.0
        %2888 = vmatpush1.msra.mxu0 0.0
        %2889 = vmatprep.subr.mxu0 0.0
        %2890 = vmatpush1.msra.mxu0 0.0
        %2891 = vmatprep.subr.mxu0 0.0
        %2892 = vmatpush1.msra.mxu0 0.0
        %2893 = vmatprep.subr.mxu0 0.0
        %2894 = vmatpush1.msra.mxu0 0.0
        %2895 = vmatprep.subr.mxu0 0.0
        %2896 = vmatpush1.msra.mxu0 0.0
        %2897 = vmatprep.subr.mxu0 0.0
        %2898 = vmatpush1.msra.mxu0 0.0
        %2899 = vmatprep.subr.mxu0 0.0
        %2900 = vmatpush1.msra.mxu0 0.0
        %2901 = vmatprep.subr.mxu0 0.0
        %2902 = vmatpush1.msra.mxu0 0.0
        %2903 = vmatprep.subr.mxu0 0.0
        %2904 = vmatpush1.msra.mxu0 0.0
        %2905 = vmatprep.subr.mxu0 0.0
        %2906 = vmatpush1.msra.mxu0 0.0
        %2907 = vmatprep.subr.mxu0 0.0
        %2908 = vmatpush1.msra.mxu0 0.0
        %2909 = vmatprep.subr.mxu0 0.0
        %2910 = vmatpush1.msra.mxu0 0.0
        %2911 = vmatprep.subr.mxu0 0.0
        %2912 = vmatpush1.msra.mxu0 0.0
        %2913 = vmatprep.subr.mxu0 0.0
        %2914 = vmatpush1.msra.mxu0 0.0
        %2915 = vmatprep.subr.mxu0 0.0
        %2916 = vmatpush1.msra.mxu0 0.0
        %2917 = vmatprep.subr.mxu0 0.0
        %2918 = vmatpush1.msra.mxu0 0.0
        %2919 = vmatprep.subr.mxu0 0.0
        %2920 = vmatpush1.msra.mxu0 0.0
        %2921 = vmatprep.subr.mxu0 0.0
        %2922 = vmatpush1.msra.mxu0 0.0
        %2923 = vmatprep.subr.mxu0 0.0
        %2924 = vmatpush1.msra.mxu0 0.0
        %2925 = vmatprep.subr.mxu0 0.0
        %2926 = vmatpush1.msra.mxu0 0.0
        %2927 = vmatprep.subr.mxu0 0.0
        %2928 = vmatpush1.msra.mxu0 0.0
        %2929 = vmatprep.subr.mxu0 0.0
        %2930 = vmatpush1.msra.mxu0 0.0
        %2931 = vmatprep.subr.mxu0 0.0
        %2932 = vmatpush1.msra.mxu0 0.0
        %2933 = vmatprep.subr.mxu0 0.0
        %2934 = vmatpush1.msra.mxu0 0.0
        %2935 = vmatprep.subr.mxu0 0.0
        %2936 = vmatpush1.msra.mxu0 0.0
        %2937 = vmatprep.subr.mxu0 0.0
        %2938 = vmatpush1.msra.mxu0 0.0
        %2939 = vmatprep.subr.mxu0 0.0
        %2940 = vmatpush1.msra.mxu0 0.0
        %2941 = vmatprep.subr.mxu0 0.0
        %2942 = vmatpush1.msra.mxu0 0.0
        %2943 = vmatprep.subr.mxu0 0.0
        %2944 = vmatpush1.msra.mxu0 0.0
        %2945 = vmatprep.mubr.f32.mxu0 0.0
        %v2946 = vand.u32 %v215, 4294901760
        %2947 = vmatmul.mubr.f32.gmra.mrb[0].mxu0 %v2946
        %v2948 = vpop.f32.mrb[0].mxu0
        %v2949 = vadd.f32 %v2826, %v2948
        %v2950 = vpop.f32.mrb[0].mxu0
        %v2951 = vadd.f32 %v2828, %v2950
        %2952 = vmatprep.mubr.f32.mxu0 0.0
        %v2953 = vand.u32 %v218, 4294901760
        %2954 = vmatmul.mubr.f32.gmra.mrb[0].mxu0 %v2953
        %v2955 = vpop.f32.mrb[0].mxu0
        %v2956 = vadd.f32 %v2835, %v2955
        %v2957 = vpop.f32.mrb[0].mxu0
        %v2958 = vadd.f32 %v2837, %v2957
        %2959 = vmatprep.mubr.f32.mxu0 0.0
        %v2960 = vand.u32 %v221, 4294901760
        %2961 = vmatmul.mubr.f32.gmra.mrb[0].mxu0 %v2960
        %v2962 = vpop.f32.mrb[0].mxu0
        %v2963 = vadd.f32 %v2844, %v2962
        %v2964 = vpop.f32.mrb[0].mxu0
        %v2965 = vadd.f32 %v2846, %v2964
        %2966 = vmatprep.mubr.f32.mxu0 0.0
        %v2967 = vand.u32 %v224, 4294901760
        %2968 = vmatmul.mubr.f32.gmra.mrb[0].mxu0 %v2967
        %v2969 = vpop.f32.mrb[0].mxu0
        %v2970 = vadd.f32 %v2853, %v2969
        %v2971 = vpop.f32.mrb[0].mxu0
        %v2972 = vadd.f32 %v2855, %v2971
        %2973 = vmatprep.mubr.f32.mxu0 0.0
        %v2974 = vand.u32 %v227, 4294901760
        %2975 = vmatmul.mubr.f32.gmra.mrb[0].mxu0 %v2974
        %v2976 = vpop.f32.mrb[0].mxu0
        %v2977 = vadd.f32 %v2862, %v2976
        %v2978 = vpop.f32.mrb[0].mxu0
        %v2979 = vadd.f32 %v2864, %v2978
        %2980 = vmatprep.mubr.f32.mxu0 0.0
        %v2981 = vand.u32 %v230, 4294901760
        %2982 = vmatmul.mubr.f32.gmra.mrb[0].mxu0 %v2981
        %v2983 = vpop.f32.mrb[0].mxu0
        %v2984 = vadd.f32 %v2871, %v2983
        %v2985 = vpop.f32.mrb[0].mxu0
        %v2986 = vadd.f32 %v2873, %v2985
        %2987 = vdwg.mxu0
        %v2988 = vand.u32 %v255, 4294901760
        %2989 = vmatprep.subr.mxu0 %v2988
        %v2990 = vand.u32 %v252, 4294901760
        %2991 = vmatpush1.msra.mxu0 %v2990
        %2992 = vmatprep.subr.mxu0 0.0
        %2993 = vmatpush1.msra.mxu0 0.0
        %2994 = vmatprep.subr.mxu0 0.0
        %2995 = vmatpush1.msra.mxu0 0.0
        %2996 = vmatprep.subr.mxu0 0.0
        %2997 = vmatpush1.msra.mxu0 0.0
        %2998 = vmatprep.subr.mxu0 0.0
        %2999 = vmatpush1.msra.mxu0 0.0
        %3000 = vmatprep.subr.mxu0 0.0
        %3001 = vmatpush1.msra.mxu0 0.0
        %3002 = vmatprep.subr.mxu0 0.0
        %3003 = vmatpush1.msra.mxu0 0.0
        %3004 = vmatprep.subr.mxu0 0.0
        %3005 = vmatpush1.msra.mxu0 0.0
        %3006 = vmatprep.subr.mxu0 0.0
        %3007 = vmatpush1.msra.mxu0 0.0
        %3008 = vmatprep.subr.mxu0 0.0
        %3009 = vmatpush1.msra.mxu0 0.0
        %3010 = vmatprep.subr.mxu0 0.0
        %3011 = vmatpush1.msra.mxu0 0.0
        %3012 = vmatprep.subr.mxu0 0.0
        %3013 = vmatpush1.msra.mxu0 0.0
        %3014 = vmatprep.subr.mxu0 0.0
        %3015 = vmatpush1.msra.mxu0 0.0
        %3016 = vmatprep.subr.mxu0 0.0
        %3017 = vmatpush1.msra.mxu0 0.0
        %3018 = vmatprep.subr.mxu0 0.0
        %3019 = vmatpush1.msra.mxu0 0.0
        %3020 = vmatprep.subr.mxu0 0.0
        %3021 = vmatpush1.msra.mxu0 0.0
        %3022 = vmatprep.subr.mxu0 0.0
        %3023 = vmatpush1.msra.mxu0 0.0
        %3024 = vmatprep.subr.mxu0 0.0
        %3025 = vmatpush1.msra.mxu0 0.0
        %3026 = vmatprep.subr.mxu0 0.0
        %3027 = vmatpush1.msra.mxu0 0.0
        %3028 = vmatprep.subr.mxu0 0.0
        %3029 = vmatpush1.msra.mxu0 0.0
        %3030 = vmatprep.subr.mxu0 0.0
        %3031 = vmatpush1.msra.mxu0 0.0
        %3032 = vmatprep.subr.mxu0 0.0
        %3033 = vmatpush1.msra.mxu0 0.0
        %3034 = vmatprep.subr.mxu0 0.0
        %3035 = vmatpush1.msra.mxu0 0.0
        %3036 = vmatprep.subr.mxu0 0.0
        %3037 = vmatpush1.msra.mxu0 0.0
        %3038 = vmatprep.subr.mxu0 0.0
        %3039 = vmatpush1.msra.mxu0 0.0
        %3040 = vmatprep.subr.mxu0 0.0
        %3041 = vmatpush1.msra.mxu0 0.0
        %3042 = vmatprep.subr.mxu0 0.0
        %3043 = vmatpush1.msra.mxu0 0.0
        %3044 = vmatprep.subr.mxu0 0.0
        %3045 = vmatpush1.msra.mxu0 0.0
        %3046 = vmatprep.subr.mxu0 0.0
        %3047 = vmatpush1.msra.mxu0 0.0
        %3048 = vmatprep.subr.mxu0 0.0
        %3049 = vmatpush1.msra.mxu0 0.0
        %3050 = vmatprep.subr.mxu0 0.0
        %3051 = vmatpush1.msra.mxu0 0.0
        %3052 = vmatprep.subr.mxu0 0.0
        %3053 = vmatpush1.msra.mxu0 0.0
        %3054 = vmatprep.mubr.f32.mxu0 0.0
        %v3055 = vand.u32 %v215, 4294901760
        %3056 = vmatmul.mubr.f32.gmra.mrb[0].mxu0 %v3055
        %v3057 = vpop.f32.mrb[0].mxu0
        %v3058 = vadd.f32 %v2949, %v3057
        %v3059 = vpop.f32.mrb[0].mxu0
        %v3060 = vadd.f32 %v2951, %v3059
        %3061 = vmatprep.mubr.f32.mxu0 0.0
        %v3062 = vand.u32 %v218, 4294901760
        %3063 = vmatmul.mubr.f32.gmra.mrb[0].mxu0 %v3062
        %v3064 = vpop.f32.mrb[0].mxu0
        %v3065 = vadd.f32 %v2956, %v3064
        %v3066 = vpop.f32.mrb[0].mxu0
        %v3067 = vadd.f32 %v2958, %v3066
        %3068 = vmatprep.mubr.f32.mxu0 0.0
        %v3069 = vand.u32 %v221, 4294901760
        %3070 = vmatmul.mubr.f32.gmra.mrb[0].mxu0 %v3069
        %v3071 = vpop.f32.mrb[0].mxu0
        %v3072 = vadd.f32 %v2963, %v3071
        %v3073 = vpop.f32.mrb[0].mxu0
        %v3074 = vadd.f32 %v2965, %v3073
        %3075 = vmatprep.mubr.f32.mxu0 0.0
        %v3076 = vand.u32 %v224, 4294901760
        %3077 = vmatmul.mubr.f32.gmra.mrb[0].mxu0 %v3076
        %v3078 = vpop.f32.mrb[0].mxu0
        %v3079 = vadd.f32 %v2970, %v3078
        %v3080 = vpop.f32.mrb[0].mxu0
        %v3081 = vadd.f32 %v2972, %v3080
        %3082 = vmatprep.mubr.f32.mxu0 0.0
        %v3083 = vand.u32 %v227, 4294901760
        %3084 = vmatmul.mubr.f32.gmra.mrb[0].mxu0 %v3083
        %v3085 = vpop.f32.mrb[0].mxu0
        %v3086 = vadd.f32 %v2977, %v3085
        %v3087 = vpop.f32.mrb[0].mxu0
        %v3088 = vadd.f32 %v2979, %v3087
        %3089 = vmatprep.mubr.f32.mxu0 0.0
        %v3090 = vand.u32 %v230, 4294901760
        %3091 = vmatmul.mubr.f32.gmra.mrb[0].mxu0 %v3090
        %v3092 = vpop.f32.mrb[0].mxu0
        %v3093 = vadd.f32 %v2984, %v3092
        %v3094 = vpop.f32.mrb[0].mxu0
        %v3095 = vadd.f32 %v2986, %v3094
        %3096 = vdwg.mxu0
        %v3097 = vmul.f32 %v956, %v956
        %v3098 = vmul.f32 %v958, %v958
        %v3099 = vmul.f32 %v1666, %v1666
        %v3100 = vmul.f32 %v1668, %v1668
        %v3101 = vmul.f32 %v2376, %v2376
        %v3102 = vmul.f32 %v2378, %v2378
        %v3103 = vmul.f32 %v3086, %v3086
        %v3104 = vmul.f32 %v3088, %v3088
        %v3105 = vrot.slane %v3097, 4
        %v3106 = vadd.f32 %v3097, %v3105
        %v3107 = vrot.slane %v3106, 2
        %v3108 = vadd.f32 %v3106, %v3107
        %v3109 = vrot.slane %v3108, 1
        %v3110 = vadd.f32 %v3108, %v3109
        %v3111 = vrot.slane %v3098, 4
        %v3112 = vadd.f32 %v3098, %v3111
        %v3113 = vrot.slane %v3112, 2
        %v3114 = vadd.f32 %v3112, %v3113
        %v3115 = vrot.slane %v3114, 1
        %v3116 = vadd.f32 %v3114, %v3115
        %v3117 = vrot.slane %v3099, 4
        %v3118 = vadd.f32 %v3099, %v3117
        %v3119 = vrot.slane %v3118, 2
        %v3120 = vadd.f32 %v3118, %v3119
        %v3121 = vrot.slane %v3120, 1
        %v3122 = vadd.f32 %v3120, %v3121
        %v3123 = vrot.slane %v3100, 4
        %v3124 = vadd.f32 %v3100, %v3123
        %v3125 = vrot.slane %v3124, 2
        %v3126 = vadd.f32 %v3124, %v3125
        %v3127 = vrot.slane %v3126, 1
        %v3128 = vadd.f32 %v3126, %v3127
        %v3129 = vrot.slane %v3101, 4
        %v3130 = vadd.f32 %v3101, %v3129
        %v3131 = vrot.slane %v3130, 2
        %v3132 = vadd.f32 %v3130, %v3131
        %v3133 = vrot.slane %v3132, 1
        %v3134 = vadd.f32 %v3132, %v3133
        %v3135 = vrot.slane %v3102, 4
        %v3136 = vadd.f32 %v3102, %v3135
        %v3137 = vrot.slane %v3136, 2
        %v3138 = vadd.f32 %v3136, %v3137
        %v3139 = vrot.slane %v3138, 1
        %v3140 = vadd.f32 %v3138, %v3139
        %v3141 = vrot.slane %v3103, 4
        %v3142 = vadd.f32 %v3103, %v3141
        %v3143 = vrot.slane %v3142, 2
        %v3144 = vadd.f32 %v3142, %v3143
        %v3145 = vrot.slane %v3144, 1
        %v3146 = vadd.f32 %v3144, %v3145
        %v3147 = vrot.slane %v3104, 4
        %v3148 = vadd.f32 %v3104, %v3147
        %v3149 = vrot.slane %v3148, 2
        %v3150 = vadd.f32 %v3148, %v3149
        %v3151 = vrot.slane %v3150, 1
        %v3152 = vadd.f32 %v3150, %v3151
        %v3153 = vmul.f32 %v928, %v928
        %v3154 = vmul.f32 %v930, %v930
        %v3155 = vmul.f32 %v1638, %v1638
        %v3156 = vmul.f32 %v1640, %v1640
        %v3157 = vmul.f32 %v2348, %v2348
        %v3158 = vmul.f32 %v2350, %v2350
        %v3159 = vmul.f32 %v3058, %v3058
        %v3160 = vmul.f32 %v3060, %v3060
        %v3161 = vmul.f32 %v935, %v935
        %v3162 = vmul.f32 %v937, %v937
        %v3163 = vmul.f32 %v1645, %v1645
        %v3164 = vmul.f32 %v1647, %v1647
        %v3165 = vmul.f32 %v2355, %v2355
        %v3166 = vmul.f32 %v2357, %v2357
        %v3167 = vmul.f32 %v3065, %v3065
        %v3168 = vmul.f32 %v3067, %v3067
        %v3169 = vmul.f32 %v942, %v942
        %v3170 = vmul.f32 %v944, %v944
        %v3171 = vmul.f32 %v1652, %v1652
        %v3172 = vmul.f32 %v1654, %v1654
        %v3173 = vmul.f32 %v2362, %v2362
        %v3174 = vmul.f32 %v2364, %v2364
        %v3175 = vmul.f32 %v3072, %v3072
        %v3176 = vmul.f32 %v3074, %v3074
        %v3177 = vmul.f32 %v949, %v949
        %v3178 = vmul.f32 %v951, %v951
        %v3179 = vmul.f32 %v1659, %v1659
        %v3180 = vmul.f32 %v1661, %v1661
        %v3181 = vmul.f32 %v2369, %v2369
        %v3182 = vmul.f32 %v2371, %v2371
        %v3183 = vmul.f32 %v3079, %v3079
        %v3184 = vmul.f32 %v3081, %v3081
        %v3185 = vadd.f32 %v3153, %v3161
        %v3186 = vadd.f32 %v3185, %v3169
        %v3187 = vadd.f32 %v3186, %v3177
        %v3188 = vrot.slane %v3187, 4
        %v3189 = vadd.f32 %v3187, %v3188
        %v3190 = vrot.slane %v3189, 2
        %v3191 = vadd.f32 %v3189, %v3190
        %v3192 = vrot.slane %v3191, 1
        %v3193 = vadd.f32 %v3191, %v3192
        %v3194 = vadd.f32 %v3154, %v3162
        %v3195 = vadd.f32 %v3194, %v3170
        %v3196 = vadd.f32 %v3195, %v3178
        %v3197 = vrot.slane %v3196, 4
        %v3198 = vadd.f32 %v3196, %v3197
        %v3199 = vrot.slane %v3198, 2
        %v3200 = vadd.f32 %v3198, %v3199
        %v3201 = vrot.slane %v3200, 1
        %v3202 = vadd.f32 %v3200, %v3201
        %v3203 = vadd.f32 %v3155, %v3163
        %v3204 = vadd.f32 %v3203, %v3171
        %v3205 = vadd.f32 %v3204, %v3179
        %v3206 = vrot.slane %v3205, 4
        %v3207 = vadd.f32 %v3205, %v3206
        %v3208 = vrot.slane %v3207, 2
        %v3209 = vadd.f32 %v3207, %v3208
        %v3210 = vrot.slane %v3209, 1
        %v3211 = vadd.f32 %v3209, %v3210
        %v3212 = vadd.f32 %v3156, %v3164
        %v3213 = vadd.f32 %v3212, %v3172
        %v3214 = vadd.f32 %v3213, %v3180
        %v3215 = vrot.slane %v3214, 4
        %v3216 = vadd.f32 %v3214, %v3215
        %v3217 = vrot.slane %v3216, 2
        %v3218 = vadd.f32 %v3216, %v3217
        %v3219 = vrot.slane %v3218, 1
        %v3220 = vadd.f32 %v3218, %v3219
        %v3221 = vadd.f32 %v3157, %v3165
        %v3222 = vadd.f32 %v3221, %v3173
        %v3223 = vadd.f32 %v3222, %v3181
        %v3224 = vrot.slane %v3223, 4
        %v3225 = vadd.f32 %v3223, %v3224
        %v3226 = vrot.slane %v3225, 2
        %v3227 = vadd.f32 %v3225, %v3226
        %v3228 = vrot.slane %v3227, 1
        %v3229 = vadd.f32 %v3227, %v3228
        %v3230 = vadd.f32 %v3158, %v3166
        %v3231 = vadd.f32 %v3230, %v3174
        %v3232 = vadd.f32 %v3231, %v3182
        %v3233 = vrot.slane %v3232, 4
        %v3234 = vadd.f32 %v3232, %v3233
        %v3235 = vrot.slane %v3234, 2
        %v3236 = vadd.f32 %v3234, %v3235
        %v3237 = vrot.slane %v3236, 1
        %v3238 = vadd.f32 %v3236, %v3237
        %v3239 = vadd.f32 %v3159, %v3167
        %v3240 = vadd.f32 %v3239, %v3175
        %v3241 = vadd.f32 %v3240, %v3183
        %v3242 = vrot.slane %v3241, 4
        %v3243 = vadd.f32 %v3241, %v3242
        %v3244 = vrot.slane %v3243, 2
        %v3245 = vadd.f32 %v3243, %v3244
        %v3246 = vrot.slane %v3245, 1
        %v3247 = vadd.f32 %v3245, %v3246
        %v3248 = vadd.f32 %v3160, %v3168
        %v3249 = vadd.f32 %v3248, %v3176
        %v3250 = vadd.f32 %v3249, %v3184
        %v3251 = vrot.slane %v3250, 4
        %v3252 = vadd.f32 %v3250, %v3251
        %v3253 = vrot.slane %v3252, 2
        %v3254 = vadd.f32 %v3252, %v3253
        %v3255 = vrot.slane %v3254, 1
        %v3256 = vadd.f32 %v3254, %v3255
        %v3257 = vsub.f32 %v3193, 1.0
        %v3258 = vsub.f32 %v3202, 1.0
        %v3259 = vsub.f32 %v3211, 1.0
        %v3260 = vsub.f32 %v3220, 1.0
        %v3261 = vsub.f32 %v3229, 1.0
        %v3262 = vsub.f32 %v3238, 1.0
        %v3263 = vsub.f32 %v3247, 1.0
        %v3264 = vsub.f32 %v3256, 1.0
        %v3265 = vsub.f32 %v3110, %v3257
        %v3266 = vsub.f32 %v3116, %v3258
        %v3267 = vsub.f32 %v3122, %v3259
        %v3268 = vsub.f32 %v3128, %v3260
        %v3269 = vsub.f32 %v3134, %v3261
        %v3270 = vsub.f32 %v3140, %v3262
        %v3271 = vsub.f32 %v3146, %v3263
        %v3272 = vsub.f32 %v3152, %v3264
        %v3273 = vmul.f32 %v3265, 0.5
        %v3274 = vmul.f32 %v3266, 0.5
        %v3275 = vmul.f32 %v3267, 0.5
        %v3276 = vmul.f32 %v3268, 0.5
        %v3277 = vmul.f32 %v3269, 0.5
        %v3278 = vmul.f32 %v3270, 0.5
        %v3279 = vmul.f32 %v3271, 0.5
        %v3280 = vmul.f32 %v3272, 0.5
        %v3281 = vld [vmem:[%s2] sm:$0xff]
        %v3282 = vld [vmem:[%s2 + $0x8] sm:$0xff]
        %v3283 = vld [vmem:[%s2 + $0x10] sm:$0xff]
        %v3284 = vld [vmem:[%s2 + $0x18] sm:$0xff]
        %v3285 = vld [vmem:[%s2 + $0x20] sm:$0xff]
        %v3286 = vld [vmem:[%s2 + $0x28] sm:$0xff]
        %v3287 = vld [vmem:[%s2 + $0x30] sm:$0xff]
        %v3288 = vld [vmem:[%s2 + $0x38] sm:$0xff]
        %v3289 = vld [vmem:[%s2 + $0x40] sm:$0xff]
        %vm3290 = vcmask 261120
        %v3292 = vsel %vm3290, %v3281, 0
        %v3295 = vsel %vm3290, %v3282, 0
        %v3298 = vsel %vm3290, %v3283, 0
        %v3301 = vsel %vm3290, %v3284, 0
        %v3304 = vsel %vm3290, %v3285, 0
        %v3307 = vsel %vm3290, %v3286, 0
        %v3310 = vsel %vm3290, %v3287, 0
        %v3313 = vsel %vm3290, %v3288, 0
        %v3316 = vsel %vm3290, %v3289, 0
        %3318 = vmatprep.subr.mxu0 %v930
        %3319 = vmatpush1.msra.mxu0 %v928
        %3320 = vmatprep.subr.mxu0 %v937
        %3321 = vmatpush1.msra.mxu0 %v935
        %3322 = vmatprep.subr.mxu0 %v944
        %3323 = vmatpush1.msra.mxu0 %v942
        %3324 = vmatprep.subr.mxu0 %v951
        %3325 = vmatpush1.msra.mxu0 %v949
        %3326 = vmatprep.subr.mxu0 0.0
        %3327 = vmatpush1.msra.mxu0 0.0
        %3328 = vmatprep.subr.mxu0 0.0
        %3329 = vmatpush1.msra.mxu0 0.0
        %3330 = vmatprep.subr.mxu0 0.0
        %3331 = vmatpush1.msra.mxu0 0.0
        %3332 = vmatprep.subr.mxu0 0.0
        %3333 = vmatpush1.msra.mxu0 0.0
        %3334 = vmatprep.subr.mxu0 0.0
        %3335 = vmatpush1.msra.mxu0 0.0
        %3336 = vmatprep.subr.mxu0 0.0
        %3337 = vmatpush1.msra.mxu0 0.0
        %3338 = vmatprep.subr.mxu0 0.0
        %3339 = vmatpush1.msra.mxu0 0.0
        %3340 = vmatprep.subr.mxu0 0.0
        %3341 = vmatpush1.msra.mxu0 0.0
        %3342 = vmatprep.subr.mxu0 0.0
        %3343 = vmatpush1.msra.mxu0 0.0
        %3344 = vmatprep.subr.mxu0 0.0
        %3345 = vmatpush1.msra.mxu0 0.0
        %3346 = vmatprep.subr.mxu0 0.0
        %3347 = vmatpush1.msra.mxu0 0.0
        %3348 = vmatprep.subr.mxu0 0.0
        %3349 = vmatpush1.msra.mxu0 0.0
        %3350 = vmatprep.subr.mxu0 0.0
        %3351 = vmatpush1.msra.mxu0 0.0
        %3352 = vmatprep.subr.mxu0 0.0
        %3353 = vmatpush1.msra.mxu0 0.0
        %3354 = vmatprep.subr.mxu0 0.0
        %3355 = vmatpush1.msra.mxu0 0.0
        %3356 = vmatprep.subr.mxu0 0.0
        %3357 = vmatpush1.msra.mxu0 0.0
        %3358 = vmatprep.subr.mxu0 0.0
        %3359 = vmatpush1.msra.mxu0 0.0
        %3360 = vmatprep.subr.mxu0 0.0
        %3361 = vmatpush1.msra.mxu0 0.0
        %3362 = vmatprep.subr.mxu0 0.0
        %3363 = vmatpush1.msra.mxu0 0.0
        %3364 = vmatprep.subr.mxu0 0.0
        %3365 = vmatpush1.msra.mxu0 0.0
        %3366 = vmatprep.subr.mxu0 0.0
        %3367 = vmatpush1.msra.mxu0 0.0
        %3368 = vmatprep.subr.mxu0 0.0
        %3369 = vmatpush1.msra.mxu0 0.0
        %3370 = vmatprep.subr.mxu0 0.0
        %3371 = vmatpush1.msra.mxu0 0.0
        %3372 = vmatprep.subr.mxu0 0.0
        %3373 = vmatpush1.msra.mxu0 0.0
        %3374 = vmatprep.subr.mxu0 0.0
        %3375 = vmatpush1.msra.mxu0 0.0
        %3376 = vmatprep.subr.mxu0 0.0
        %3377 = vmatpush1.msra.mxu0 0.0
        %3378 = vmatprep.subr.mxu0 0.0
        %3379 = vmatpush1.msra.mxu0 0.0
        %3380 = vmatprep.subr.mxu0 0.0
        %3381 = vmatpush1.msra.mxu0 0.0
        %3382 = vmatprep.mubr.f32.mxu0 0.0
        %3383 = vmatmul.mubr.f32.gmra.mrb[0].mxu0 %v3292
        %v3384 = vpop.f32.mrb[0].mxu0
        %v3385 = vadd.f32 0.0, %v3384
        %v3386 = vpop.f32.mrb[0].mxu0
        %v3387 = vadd.f32 0.0, %v3386
        %3388 = vmatprep.mubr.f32.mxu0 0.0
        %3389 = vmatmul.mubr.f32.gmra.mrb[0].mxu0 %v3295
        %v3390 = vpop.f32.mrb[0].mxu0
        %v3391 = vadd.f32 0.0, %v3390
        %v3392 = vpop.f32.mrb[0].mxu0
        %v3393 = vadd.f32 0.0, %v3392
        %3394 = vmatprep.mubr.f32.mxu0 0.0
        %3395 = vmatmul.mubr.f32.gmra.mrb[0].mxu0 %v3298
        %v3396 = vpop.f32.mrb[0].mxu0
        %v3397 = vadd.f32 0.0, %v3396
        %v3398 = vpop.f32.mrb[0].mxu0
        %v3399 = vadd.f32 0.0, %v3398
        %3400 = vmatprep.mubr.f32.mxu0 0.0
        %3401 = vmatmul.mubr.f32.gmra.mrb[0].mxu0 %v3301
        %v3402 = vpop.f32.mrb[0].mxu0
        %v3403 = vadd.f32 0.0, %v3402
        %v3404 = vpop.f32.mrb[0].mxu0
        %v3405 = vadd.f32 0.0, %v3404
        %3406 = vmatprep.mubr.f32.mxu0 0.0
        %3407 = vmatmul.mubr.f32.gmra.mrb[0].mxu0 %v3304
        %v3408 = vpop.f32.mrb[0].mxu0
        %v3409 = vadd.f32 0.0, %v3408
        %v3410 = vpop.f32.mrb[0].mxu0
        %v3411 = vadd.f32 0.0, %v3410
        %3412 = vmatprep.mubr.f32.mxu0 0.0
        %3413 = vmatmul.mubr.f32.gmra.mrb[0].mxu0 %v3307
        %v3414 = vpop.f32.mrb[0].mxu0
        %v3415 = vadd.f32 0.0, %v3414
        %v3416 = vpop.f32.mrb[0].mxu0
        %v3417 = vadd.f32 0.0, %v3416
        %3418 = vmatprep.mubr.f32.mxu0 0.0
        %3419 = vmatmul.mubr.f32.gmra.mrb[0].mxu0 %v3310
        %v3420 = vpop.f32.mrb[0].mxu0
        %v3421 = vadd.f32 0.0, %v3420
        %v3422 = vpop.f32.mrb[0].mxu0
        %v3423 = vadd.f32 0.0, %v3422
        %3424 = vmatprep.mubr.f32.mxu0 0.0
        %3425 = vmatmul.mubr.f32.gmra.mrb[0].mxu0 %v3313
        %v3426 = vpop.f32.mrb[0].mxu0
        %v3427 = vadd.f32 0.0, %v3426
        %v3428 = vpop.f32.mrb[0].mxu0
        %v3429 = vadd.f32 0.0, %v3428
        %3430 = vmatprep.mubr.f32.mxu0 0.0
        %3431 = vmatmul.mubr.f32.gmra.mrb[0].mxu0 %v3316
        %v3432 = vpop.f32.mrb[0].mxu0
        %v3433 = vadd.f32 0.0, %v3432
        %v3434 = vpop.f32.mrb[0].mxu0
        %v3435 = vadd.f32 0.0, %v3434
        %3436 = vdwg.mxu0
        %3437 = vmatprep.subr.mxu0 %v1640
        %3438 = vmatpush1.msra.mxu0 %v1638
        %3439 = vmatprep.subr.mxu0 %v1647
        %3440 = vmatpush1.msra.mxu0 %v1645
        %3441 = vmatprep.subr.mxu0 %v1654
        %3442 = vmatpush1.msra.mxu0 %v1652
        %3443 = vmatprep.subr.mxu0 %v1661
        %3444 = vmatpush1.msra.mxu0 %v1659
        %3445 = vmatprep.subr.mxu0 0.0
        %3446 = vmatpush1.msra.mxu0 0.0
        %3447 = vmatprep.subr.mxu0 0.0
        %3448 = vmatpush1.msra.mxu0 0.0
        %3449 = vmatprep.subr.mxu0 0.0
        %3450 = vmatpush1.msra.mxu0 0.0
        %3451 = vmatprep.subr.mxu0 0.0
        %3452 = vmatpush1.msra.mxu0 0.0
        %3453 = vmatprep.subr.mxu0 0.0
        %3454 = vmatpush1.msra.mxu0 0.0
        %3455 = vmatprep.subr.mxu0 0.0
        %3456 = vmatpush1.msra.mxu0 0.0
        %3457 = vmatprep.subr.mxu0 0.0
        %3458 = vmatpush1.msra.mxu0 0.0
        %3459 = vmatprep.subr.mxu0 0.0
        %3460 = vmatpush1.msra.mxu0 0.0
        %3461 = vmatprep.subr.mxu0 0.0
        %3462 = vmatpush1.msra.mxu0 0.0
        %3463 = vmatprep.subr.mxu0 0.0
        %3464 = vmatpush1.msra.mxu0 0.0
        %3465 = vmatprep.subr.mxu0 0.0
        %3466 = vmatpush1.msra.mxu0 0.0
        %3467 = vmatprep.subr.mxu0 0.0
        %3468 = vmatpush1.msra.mxu0 0.0
        %3469 = vmatprep.subr.mxu0 0.0
        %3470 = vmatpush1.msra.mxu0 0.0
        %3471 = vmatprep.subr.mxu0 0.0
        %3472 = vmatpush1.msra.mxu0 0.0
        %3473 = vmatprep.subr.mxu0 0.0
        %3474 = vmatpush1.msra.mxu0 0.0
        %3475 = vmatprep.subr.mxu0 0.0
        %3476 = vmatpush1.msra.mxu0 0.0
        %3477 = vmatprep.subr.mxu0 0.0
        %3478 = vmatpush1.msra.mxu0 0.0
        %3479 = vmatprep.subr.mxu0 0.0
        %3480 = vmatpush1.msra.mxu0 0.0
        %3481 = vmatprep.subr.mxu0 0.0
        %3482 = vmatpush1.msra.mxu0 0.0
        %3483 = vmatprep.subr.mxu0 0.0
        %3484 = vmatpush1.msra.mxu0 0.0
        %3485 = vmatprep.subr.mxu0 0.0
        %3486 = vmatpush1.msra.mxu0 0.0
        %3487 = vmatprep.subr.mxu0 0.0
        %3488 = vmatpush1.msra.mxu0 0.0
        %3489 = vmatprep.subr.mxu0 0.0
        %3490 = vmatpush1.msra.mxu0 0.0
        %3491 = vmatprep.subr.mxu0 0.0
        %3492 = vmatpush1.msra.mxu0 0.0
        %3493 = vmatprep.subr.mxu0 0.0
        %3494 = vmatpush1.msra.mxu0 0.0
        %3495 = vmatprep.subr.mxu0 0.0
        %3496 = vmatpush1.msra.mxu0 0.0
        %3497 = vmatprep.subr.mxu0 0.0
        %3498 = vmatpush1.msra.mxu0 0.0
        %3499 = vmatprep.subr.mxu0 0.0
        %3500 = vmatpush1.msra.mxu0 0.0
        %3501 = vmatprep.mubr.f32.mxu0 0.0
        %3502 = vmatmul.mubr.f32.gmra.mrb[0].mxu0 %v3292
        %v3503 = vpop.f32.mrb[0].mxu0
        %v3504 = vadd.f32 0.0, %v3503
        %v3505 = vpop.f32.mrb[0].mxu0
        %v3506 = vadd.f32 0.0, %v3505
        %3507 = vmatprep.mubr.f32.mxu0 0.0
        %3508 = vmatmul.mubr.f32.gmra.mrb[0].mxu0 %v3295
        %v3509 = vpop.f32.mrb[0].mxu0
        %v3510 = vadd.f32 0.0, %v3509
        %v3511 = vpop.f32.mrb[0].mxu0
        %v3512 = vadd.f32 0.0, %v3511
        %3513 = vmatprep.mubr.f32.mxu0 0.0
        %3514 = vmatmul.mubr.f32.gmra.mrb[0].mxu0 %v3298
        %v3515 = vpop.f32.mrb[0].mxu0
        %v3516 = vadd.f32 0.0, %v3515
        %v3517 = vpop.f32.mrb[0].mxu0
        %v3518 = vadd.f32 0.0, %v3517
        %3519 = vmatprep.mubr.f32.mxu0 0.0
        %3520 = vmatmul.mubr.f32.gmra.mrb[0].mxu0 %v3301
        %v3521 = vpop.f32.mrb[0].mxu0
        %v3522 = vadd.f32 0.0, %v3521
        %v3523 = vpop.f32.mrb[0].mxu0
        %v3524 = vadd.f32 0.0, %v3523
        %3525 = vmatprep.mubr.f32.mxu0 0.0
        %3526 = vmatmul.mubr.f32.gmra.mrb[0].mxu0 %v3304
        %v3527 = vpop.f32.mrb[0].mxu0
        %v3528 = vadd.f32 0.0, %v3527
        %v3529 = vpop.f32.mrb[0].mxu0
        %v3530 = vadd.f32 0.0, %v3529
        %3531 = vmatprep.mubr.f32.mxu0 0.0
        %3532 = vmatmul.mubr.f32.gmra.mrb[0].mxu0 %v3307
        %v3533 = vpop.f32.mrb[0].mxu0
        %v3534 = vadd.f32 0.0, %v3533
        %v3535 = vpop.f32.mrb[0].mxu0
        %v3536 = vadd.f32 0.0, %v3535
        %3537 = vmatprep.mubr.f32.mxu0 0.0
        %3538 = vmatmul.mubr.f32.gmra.mrb[0].mxu0 %v3310
        %v3539 = vpop.f32.mrb[0].mxu0
        %v3540 = vadd.f32 0.0, %v3539
        %v3541 = vpop.f32.mrb[0].mxu0
        %v3542 = vadd.f32 0.0, %v3541
        %3543 = vmatprep.mubr.f32.mxu0 0.0
        %3544 = vmatmul.mubr.f32.gmra.mrb[0].mxu0 %v3313
        %v3545 = vpop.f32.mrb[0].mxu0
        %v3546 = vadd.f32 0.0, %v3545
        %v3547 = vpop.f32.mrb[0].mxu0
        %v3548 = vadd.f32 0.0, %v3547
        %3549 = vmatprep.mubr.f32.mxu0 0.0
        %3550 = vmatmul.mubr.f32.gmra.mrb[0].mxu0 %v3316
        %v3551 = vpop.f32.mrb[0].mxu0
        %v3552 = vadd.f32 0.0, %v3551
        %v3553 = vpop.f32.mrb[0].mxu0
        %v3554 = vadd.f32 0.0, %v3553
        %3555 = vdwg.mxu0
        %3556 = vmatprep.subr.mxu0 %v2350
        %3557 = vmatpush1.msra.mxu0 %v2348
        %3558 = vmatprep.subr.mxu0 %v2357
        %3559 = vmatpush1.msra.mxu0 %v2355
        %3560 = vmatprep.subr.mxu0 %v2364
        %3561 = vmatpush1.msra.mxu0 %v2362
        %3562 = vmatprep.subr.mxu0 %v2371
        %3563 = vmatpush1.msra.mxu0 %v2369
        %3564 = vmatprep.subr.mxu0 0.0
        %3565 = vmatpush1.msra.mxu0 0.0
        %3566 = vmatprep.subr.mxu0 0.0
        %3567 = vmatpush1.msra.mxu0 0.0
        %3568 = vmatprep.subr.mxu0 0.0
        %3569 = vmatpush1.msra.mxu0 0.0
        %3570 = vmatprep.subr.mxu0 0.0
        %3571 = vmatpush1.msra.mxu0 0.0
        %3572 = vmatprep.subr.mxu0 0.0
        %3573 = vmatpush1.msra.mxu0 0.0
        %3574 = vmatprep.subr.mxu0 0.0
        %3575 = vmatpush1.msra.mxu0 0.0
        %3576 = vmatprep.subr.mxu0 0.0
        %3577 = vmatpush1.msra.mxu0 0.0
        %3578 = vmatprep.subr.mxu0 0.0
        %3579 = vmatpush1.msra.mxu0 0.0
        %3580 = vmatprep.subr.mxu0 0.0
        %3581 = vmatpush1.msra.mxu0 0.0
        %3582 = vmatprep.subr.mxu0 0.0
        %3583 = vmatpush1.msra.mxu0 0.0
        %3584 = vmatprep.subr.mxu0 0.0
        %3585 = vmatpush1.msra.mxu0 0.0
        %3586 = vmatprep.subr.mxu0 0.0
        %3587 = vmatpush1.msra.mxu0 0.0
        %3588 = vmatprep.subr.mxu0 0.0
        %3589 = vmatpush1.msra.mxu0 0.0
        %3590 = vmatprep.subr.mxu0 0.0
        %3591 = vmatpush1.msra.mxu0 0.0
        %3592 = vmatprep.subr.mxu0 0.0
        %3593 = vmatpush1.msra.mxu0 0.0
        %3594 = vmatprep.subr.mxu0 0.0
        %3595 = vmatpush1.msra.mxu0 0.0
        %3596 = vmatprep.subr.mxu0 0.0
        %3597 = vmatpush1.msra.mxu0 0.0
        %3598 = vmatprep.subr.mxu0 0.0
        %3599 = vmatpush1.msra.mxu0 0.0
        %3600 = vmatprep.subr.mxu0 0.0
        %3601 = vmatpush1.msra.mxu0 0.0
        %3602 = vmatprep.subr.mxu0 0.0
        %3603 = vmatpush1.msra.mxu0 0.0
        %3604 = vmatprep.subr.mxu0 0.0
        %3605 = vmatpush1.msra.mxu0 0.0
        %3606 = vmatprep.subr.mxu0 0.0
        %3607 = vmatpush1.msra.mxu0 0.0
        %3608 = vmatprep.subr.mxu0 0.0
        %3609 = vmatpush1.msra.mxu0 0.0
        %3610 = vmatprep.subr.mxu0 0.0
        %3611 = vmatpush1.msra.mxu0 0.0
        %3612 = vmatprep.subr.mxu0 0.0
        %3613 = vmatpush1.msra.mxu0 0.0
        %3614 = vmatprep.subr.mxu0 0.0
        %3615 = vmatpush1.msra.mxu0 0.0
        %3616 = vmatprep.subr.mxu0 0.0
        %3617 = vmatpush1.msra.mxu0 0.0
        %3618 = vmatprep.subr.mxu0 0.0
        %3619 = vmatpush1.msra.mxu0 0.0
        %3620 = vmatprep.mubr.f32.mxu0 0.0
        %3621 = vmatmul.mubr.f32.gmra.mrb[0].mxu0 %v3292
        %v3622 = vpop.f32.mrb[0].mxu0
        %v3623 = vadd.f32 0.0, %v3622
        %v3624 = vpop.f32.mrb[0].mxu0
        %v3625 = vadd.f32 0.0, %v3624
        %3626 = vmatprep.mubr.f32.mxu0 0.0
        %3627 = vmatmul.mubr.f32.gmra.mrb[0].mxu0 %v3295
        %v3628 = vpop.f32.mrb[0].mxu0
        %v3629 = vadd.f32 0.0, %v3628
        %v3630 = vpop.f32.mrb[0].mxu0
        %v3631 = vadd.f32 0.0, %v3630
        %3632 = vmatprep.mubr.f32.mxu0 0.0
        %3633 = vmatmul.mubr.f32.gmra.mrb[0].mxu0 %v3298
        %v3634 = vpop.f32.mrb[0].mxu0
        %v3635 = vadd.f32 0.0, %v3634
        %v3636 = vpop.f32.mrb[0].mxu0
        %v3637 = vadd.f32 0.0, %v3636
        %3638 = vmatprep.mubr.f32.mxu0 0.0
        %3639 = vmatmul.mubr.f32.gmra.mrb[0].mxu0 %v3301
        %v3640 = vpop.f32.mrb[0].mxu0
        %v3641 = vadd.f32 0.0, %v3640
        %v3642 = vpop.f32.mrb[0].mxu0
        %v3643 = vadd.f32 0.0, %v3642
        %3644 = vmatprep.mubr.f32.mxu0 0.0
        %3645 = vmatmul.mubr.f32.gmra.mrb[0].mxu0 %v3304
        %v3646 = vpop.f32.mrb[0].mxu0
        %v3647 = vadd.f32 0.0, %v3646
        %v3648 = vpop.f32.mrb[0].mxu0
        %v3649 = vadd.f32 0.0, %v3648
        %3650 = vmatprep.mubr.f32.mxu0 0.0
        %3651 = vmatmul.mubr.f32.gmra.mrb[0].mxu0 %v3307
        %v3652 = vpop.f32.mrb[0].mxu0
        %v3653 = vadd.f32 0.0, %v3652
        %v3654 = vpop.f32.mrb[0].mxu0
        %v3655 = vadd.f32 0.0, %v3654
        %3656 = vmatprep.mubr.f32.mxu0 0.0
        %3657 = vmatmul.mubr.f32.gmra.mrb[0].mxu0 %v3310
        %v3658 = vpop.f32.mrb[0].mxu0
        %v3659 = vadd.f32 0.0, %v3658
        %v3660 = vpop.f32.mrb[0].mxu0
        %v3661 = vadd.f32 0.0, %v3660
        %3662 = vmatprep.mubr.f32.mxu0 0.0
        %3663 = vmatmul.mubr.f32.gmra.mrb[0].mxu0 %v3313
        %v3664 = vpop.f32.mrb[0].mxu0
        %v3665 = vadd.f32 0.0, %v3664
        %v3666 = vpop.f32.mrb[0].mxu0
        %v3667 = vadd.f32 0.0, %v3666
        %3668 = vmatprep.mubr.f32.mxu0 0.0
        %3669 = vmatmul.mubr.f32.gmra.mrb[0].mxu0 %v3316
        %v3670 = vpop.f32.mrb[0].mxu0
        %v3671 = vadd.f32 0.0, %v3670
        %v3672 = vpop.f32.mrb[0].mxu0
        %v3673 = vadd.f32 0.0, %v3672
        %3674 = vdwg.mxu0
        %3675 = vmatprep.subr.mxu0 %v3060
        %3676 = vmatpush1.msra.mxu0 %v3058
        %3677 = vmatprep.subr.mxu0 %v3067
        %3678 = vmatpush1.msra.mxu0 %v3065
        %3679 = vmatprep.subr.mxu0 %v3074
        %3680 = vmatpush1.msra.mxu0 %v3072
        %3681 = vmatprep.subr.mxu0 %v3081
        %3682 = vmatpush1.msra.mxu0 %v3079
        %3683 = vmatprep.subr.mxu0 0.0
        %3684 = vmatpush1.msra.mxu0 0.0
        %3685 = vmatprep.subr.mxu0 0.0
        %3686 = vmatpush1.msra.mxu0 0.0
        %3687 = vmatprep.subr.mxu0 0.0
        %3688 = vmatpush1.msra.mxu0 0.0
        %3689 = vmatprep.subr.mxu0 0.0
        %3690 = vmatpush1.msra.mxu0 0.0
        %3691 = vmatprep.subr.mxu0 0.0
        %3692 = vmatpush1.msra.mxu0 0.0
        %3693 = vmatprep.subr.mxu0 0.0
        %3694 = vmatpush1.msra.mxu0 0.0
        %3695 = vmatprep.subr.mxu0 0.0
        %3696 = vmatpush1.msra.mxu0 0.0
        %3697 = vmatprep.subr.mxu0 0.0
        %3698 = vmatpush1.msra.mxu0 0.0
        %3699 = vmatprep.subr.mxu0 0.0
        %3700 = vmatpush1.msra.mxu0 0.0
        %3701 = vmatprep.subr.mxu0 0.0
        %3702 = vmatpush1.msra.mxu0 0.0
        %3703 = vmatprep.subr.mxu0 0.0
        %3704 = vmatpush1.msra.mxu0 0.0
        %3705 = vmatprep.subr.mxu0 0.0
        %3706 = vmatpush1.msra.mxu0 0.0
        %3707 = vmatprep.subr.mxu0 0.0
        %3708 = vmatpush1.msra.mxu0 0.0
        %3709 = vmatprep.subr.mxu0 0.0
        %3710 = vmatpush1.msra.mxu0 0.0
        %3711 = vmatprep.subr.mxu0 0.0
        %3712 = vmatpush1.msra.mxu0 0.0
        %3713 = vmatprep.subr.mxu0 0.0
        %3714 = vmatpush1.msra.mxu0 0.0
        %3715 = vmatprep.subr.mxu0 0.0
        %3716 = vmatpush1.msra.mxu0 0.0
        %3717 = vmatprep.subr.mxu0 0.0
        %3718 = vmatpush1.msra.mxu0 0.0
        %3719 = vmatprep.subr.mxu0 0.0
        %3720 = vmatpush1.msra.mxu0 0.0
        %3721 = vmatprep.subr.mxu0 0.0
        %3722 = vmatpush1.msra.mxu0 0.0
        %3723 = vmatprep.subr.mxu0 0.0
        %3724 = vmatpush1.msra.mxu0 0.0
        %3725 = vmatprep.subr.mxu0 0.0
        %3726 = vmatpush1.msra.mxu0 0.0
        %3727 = vmatprep.subr.mxu0 0.0
        %3728 = vmatpush1.msra.mxu0 0.0
        %3729 = vmatprep.subr.mxu0 0.0
        %3730 = vmatpush1.msra.mxu0 0.0
        %3731 = vmatprep.subr.mxu0 0.0
        %3732 = vmatpush1.msra.mxu0 0.0
        %3733 = vmatprep.subr.mxu0 0.0
        %3734 = vmatpush1.msra.mxu0 0.0
        %3735 = vmatprep.subr.mxu0 0.0
        %3736 = vmatpush1.msra.mxu0 0.0
        %3737 = vmatprep.subr.mxu0 0.0
        %3738 = vmatpush1.msra.mxu0 0.0
        %3739 = vmatprep.mubr.f32.mxu0 0.0
        %3740 = vmatmul.mubr.f32.gmra.mrb[0].mxu0 %v3292
        %v3741 = vpop.f32.mrb[0].mxu0
        %v3742 = vadd.f32 0.0, %v3741
        %v3743 = vpop.f32.mrb[0].mxu0
        %v3744 = vadd.f32 0.0, %v3743
        %3745 = vmatprep.mubr.f32.mxu0 0.0
        %3746 = vmatmul.mubr.f32.gmra.mrb[0].mxu0 %v3295
        %v3747 = vpop.f32.mrb[0].mxu0
        %v3748 = vadd.f32 0.0, %v3747
        %v3749 = vpop.f32.mrb[0].mxu0
        %v3750 = vadd.f32 0.0, %v3749
        %3751 = vmatprep.mubr.f32.mxu0 0.0
        %3752 = vmatmul.mubr.f32.gmra.mrb[0].mxu0 %v3298
        %v3753 = vpop.f32.mrb[0].mxu0
        %v3754 = vadd.f32 0.0, %v3753
        %v3755 = vpop.f32.mrb[0].mxu0
        %v3756 = vadd.f32 0.0, %v3755
        %3757 = vmatprep.mubr.f32.mxu0 0.0
        %3758 = vmatmul.mubr.f32.gmra.mrb[0].mxu0 %v3301
        %v3759 = vpop.f32.mrb[0].mxu0
        %v3760 = vadd.f32 0.0, %v3759
        %v3761 = vpop.f32.mrb[0].mxu0
        %v3762 = vadd.f32 0.0, %v3761
        %3763 = vmatprep.mubr.f32.mxu0 0.0
        %3764 = vmatmul.mubr.f32.gmra.mrb[0].mxu0 %v3304
        %v3765 = vpop.f32.mrb[0].mxu0
        %v3766 = vadd.f32 0.0, %v3765
        %v3767 = vpop.f32.mrb[0].mxu0
        %v3768 = vadd.f32 0.0, %v3767
        %3769 = vmatprep.mubr.f32.mxu0 0.0
        %3770 = vmatmul.mubr.f32.gmra.mrb[0].mxu0 %v3307
        %v3771 = vpop.f32.mrb[0].mxu0
        %v3772 = vadd.f32 0.0, %v3771
        %v3773 = vpop.f32.mrb[0].mxu0
        %v3774 = vadd.f32 0.0, %v3773
        %3775 = vmatprep.mubr.f32.mxu0 0.0
        %3776 = vmatmul.mubr.f32.gmra.mrb[0].mxu0 %v3310
        %v3777 = vpop.f32.mrb[0].mxu0
        %v3778 = vadd.f32 0.0, %v3777
        %v3779 = vpop.f32.mrb[0].mxu0
        %v3780 = vadd.f32 0.0, %v3779
        %3781 = vmatprep.mubr.f32.mxu0 0.0
        %3782 = vmatmul.mubr.f32.gmra.mrb[0].mxu0 %v3313
        %v3783 = vpop.f32.mrb[0].mxu0
        %v3784 = vadd.f32 0.0, %v3783
        %v3785 = vpop.f32.mrb[0].mxu0
        %v3786 = vadd.f32 0.0, %v3785
        %3787 = vmatprep.mubr.f32.mxu0 0.0
        %3788 = vmatmul.mubr.f32.gmra.mrb[0].mxu0 %v3316
        %v3789 = vpop.f32.mrb[0].mxu0
        %v3790 = vadd.f32 0.0, %v3789
        %v3791 = vpop.f32.mrb[0].mxu0
        %v3792 = vadd.f32 0.0, %v3791
        %3793 = vdwg.mxu0
        %v3794 = vmax.f32 %v3385, 0.0
        %v3795 = vmax.f32 %v3387, 0.0
        %v3796 = vmax.f32 %v3504, 0.0
        %v3797 = vmax.f32 %v3506, 0.0
        %v3798 = vmax.f32 %v3623, 0.0
        %v3799 = vmax.f32 %v3625, 0.0
        %v3800 = vmax.f32 %v3742, 0.0
        %v3801 = vmax.f32 %v3744, 0.0
        %v3802 = vmax.f32 %v3391, 0.0
        %v3803 = vmax.f32 %v3393, 0.0
        %v3804 = vmax.f32 %v3510, 0.0
        %v3805 = vmax.f32 %v3512, 0.0
        %v3806 = vmax.f32 %v3629, 0.0
        %v3807 = vmax.f32 %v3631, 0.0
        %v3808 = vmax.f32 %v3748, 0.0
        %v3809 = vmax.f32 %v3750, 0.0
        %v3810 = vmax.f32 %v3397, 0.0
        %v3811 = vmax.f32 %v3399, 0.0
        %v3812 = vmax.f32 %v3516, 0.0
        %v3813 = vmax.f32 %v3518, 0.0
        %v3814 = vmax.f32 %v3635, 0.0
        %v3815 = vmax.f32 %v3637, 0.0
        %v3816 = vmax.f32 %v3754, 0.0
        %v3817 = vmax.f32 %v3756, 0.0
        %v3818 = vmax.f32 %v3403, 0.0
        %v3819 = vmax.f32 %v3405, 0.0
        %v3820 = vmax.f32 %v3522, 0.0
        %v3821 = vmax.f32 %v3524, 0.0
        %v3822 = vmax.f32 %v3641, 0.0
        %v3823 = vmax.f32 %v3643, 0.0
        %v3824 = vmax.f32 %v3760, 0.0
        %v3825 = vmax.f32 %v3762, 0.0
        %v3826 = vmax.f32 %v3409, 0.0
        %v3827 = vmax.f32 %v3411, 0.0
        %v3828 = vmax.f32 %v3528, 0.0
        %v3829 = vmax.f32 %v3530, 0.0
        %v3830 = vmax.f32 %v3647, 0.0
        %v3831 = vmax.f32 %v3649, 0.0
        %v3832 = vmax.f32 %v3766, 0.0
        %v3833 = vmax.f32 %v3768, 0.0
        %v3834 = vmax.f32 %v3415, 0.0
        %v3835 = vmax.f32 %v3417, 0.0
        %v3836 = vmax.f32 %v3534, 0.0
        %v3837 = vmax.f32 %v3536, 0.0
        %v3838 = vmax.f32 %v3653, 0.0
        %v3839 = vmax.f32 %v3655, 0.0
        %v3840 = vmax.f32 %v3772, 0.0
        %v3841 = vmax.f32 %v3774, 0.0
        %v3842 = vmax.f32 %v3421, 0.0
        %v3843 = vmax.f32 %v3423, 0.0
        %v3844 = vmax.f32 %v3540, 0.0
        %v3845 = vmax.f32 %v3542, 0.0
        %v3846 = vmax.f32 %v3659, 0.0
        %v3847 = vmax.f32 %v3661, 0.0
        %v3848 = vmax.f32 %v3778, 0.0
        %v3849 = vmax.f32 %v3780, 0.0
        %v3850 = vmax.f32 %v3427, 0.0
        %v3851 = vmax.f32 %v3429, 0.0
        %v3852 = vmax.f32 %v3546, 0.0
        %v3853 = vmax.f32 %v3548, 0.0
        %v3854 = vmax.f32 %v3665, 0.0
        %v3855 = vmax.f32 %v3667, 0.0
        %v3856 = vmax.f32 %v3784, 0.0
        %v3857 = vmax.f32 %v3786, 0.0
        %v3858 = vmax.f32 %v3433, 0.0
        %v3859 = vmax.f32 %v3435, 0.0
        %v3860 = vmax.f32 %v3552, 0.0
        %v3861 = vmax.f32 %v3554, 0.0
        %v3862 = vmax.f32 %v3671, 0.0
        %v3863 = vmax.f32 %v3673, 0.0
        %v3864 = vmax.f32 %v3790, 0.0
        %v3865 = vmax.f32 %v3792, 0.0
        %v3866 = vld [vmem:[%s3] sm:$0xff]
        %v3867 = vld [vmem:[%s3 + $0x8] sm:$0xff]
        %v3868 = vld [vmem:[%s3 + $0x10] sm:$0xff]
        %v3869 = vld [vmem:[%s3 + $0x18] sm:$0xff]
        %vm3870 = vcmask 588800
        %v3872 = vsel %vm3870, %v3866, 0
        %v3875 = vsel %vm3870, %v3867, 0
        %v3878 = vsel %vm3870, %v3868, 0
        %v3881 = vsel %vm3870, %v3869, 0
        %3883 = vmatprep.subr.mxu0 %v3795
        %3884 = vmatpush1.msra.mxu0 %v3794
        %3885 = vmatprep.subr.mxu0 %v3803
        %3886 = vmatpush1.msra.mxu0 %v3802
        %3887 = vmatprep.subr.mxu0 %v3811
        %3888 = vmatpush1.msra.mxu0 %v3810
        %3889 = vmatprep.subr.mxu0 %v3819
        %3890 = vmatpush1.msra.mxu0 %v3818
        %3891 = vmatprep.subr.mxu0 %v3827
        %3892 = vmatpush1.msra.mxu0 %v3826
        %3893 = vmatprep.subr.mxu0 %v3835
        %3894 = vmatpush1.msra.mxu0 %v3834
        %3895 = vmatprep.subr.mxu0 %v3843
        %3896 = vmatpush1.msra.mxu0 %v3842
        %3897 = vmatprep.subr.mxu0 %v3851
        %3898 = vmatpush1.msra.mxu0 %v3850
        %3899 = vmatprep.subr.mxu0 %v3859
        %3900 = vmatpush1.msra.mxu0 %v3858
        %3901 = vmatprep.subr.mxu0 0.0
        %3902 = vmatpush1.msra.mxu0 0.0
        %3903 = vmatprep.subr.mxu0 0.0
        %3904 = vmatpush1.msra.mxu0 0.0
        %3905 = vmatprep.subr.mxu0 0.0
        %3906 = vmatpush1.msra.mxu0 0.0
        %3907 = vmatprep.subr.mxu0 0.0
        %3908 = vmatpush1.msra.mxu0 0.0
        %3909 = vmatprep.subr.mxu0 0.0
        %3910 = vmatpush1.msra.mxu0 0.0
        %3911 = vmatprep.subr.mxu0 0.0
        %3912 = vmatpush1.msra.mxu0 0.0
        %3913 = vmatprep.subr.mxu0 0.0
        %3914 = vmatpush1.msra.mxu0 0.0
        %3915 = vmatprep.subr.mxu0 0.0
        %3916 = vmatpush1.msra.mxu0 0.0
        %3917 = vmatprep.subr.mxu0 0.0
        %3918 = vmatpush1.msra.mxu0 0.0
        %3919 = vmatprep.subr.mxu0 0.0
        %3920 = vmatpush1.msra.mxu0 0.0
        %3921 = vmatprep.subr.mxu0 0.0
        %3922 = vmatpush1.msra.mxu0 0.0
        %3923 = vmatprep.subr.mxu0 0.0
        %3924 = vmatpush1.msra.mxu0 0.0
        %3925 = vmatprep.subr.mxu0 0.0
        %3926 = vmatpush1.msra.mxu0 0.0
        %3927 = vmatprep.subr.mxu0 0.0
        %3928 = vmatpush1.msra.mxu0 0.0
        %3929 = vmatprep.subr.mxu0 0.0
        %3930 = vmatpush1.msra.mxu0 0.0
        %3931 = vmatprep.subr.mxu0 0.0
        %3932 = vmatpush1.msra.mxu0 0.0
        %3933 = vmatprep.subr.mxu0 0.0
        %3934 = vmatpush1.msra.mxu0 0.0
        %3935 = vmatprep.subr.mxu0 0.0
        %3936 = vmatpush1.msra.mxu0 0.0
        %3937 = vmatprep.subr.mxu0 0.0
        %3938 = vmatpush1.msra.mxu0 0.0
        %3939 = vmatprep.subr.mxu0 0.0
        %3940 = vmatpush1.msra.mxu0 0.0
        %3941 = vmatprep.subr.mxu0 0.0
        %3942 = vmatpush1.msra.mxu0 0.0
        %3943 = vmatprep.subr.mxu0 0.0
        %3944 = vmatpush1.msra.mxu0 0.0
        %3945 = vmatprep.subr.mxu0 0.0
        %3946 = vmatpush1.msra.mxu0 0.0
        %3947 = vmatprep.mubr.f32.mxu0 0.0
        %3948 = vmatmul.mubr.f32.gmra.mrb[0].mxu0 %v3872
        %v3949 = vpop.f32.mrb[0].mxu0
        %v3950 = vadd.f32 0.0, %v3949
        %v3951 = vpop.f32.mrb[0].mxu0
        %v3952 = vadd.f32 0.0, %v3951
        %3953 = vmatprep.mubr.f32.mxu0 0.0
        %3954 = vmatmul.mubr.f32.gmra.mrb[0].mxu0 %v3875
        %v3955 = vpop.f32.mrb[0].mxu0
        %v3956 = vadd.f32 0.0, %v3955
        %v3957 = vpop.f32.mrb[0].mxu0
        %v3958 = vadd.f32 0.0, %v3957
        %3959 = vmatprep.mubr.f32.mxu0 0.0
        %3960 = vmatmul.mubr.f32.gmra.mrb[0].mxu0 %v3878
        %v3961 = vpop.f32.mrb[0].mxu0
        %v3962 = vadd.f32 0.0, %v3961
        %v3963 = vpop.f32.mrb[0].mxu0
        %v3964 = vadd.f32 0.0, %v3963
        %3965 = vmatprep.mubr.f32.mxu0 0.0
        %3966 = vmatmul.mubr.f32.gmra.mrb[0].mxu0 %v3881
        %v3967 = vpop.f32.mrb[0].mxu0
        %v3968 = vadd.f32 0.0, %v3967
        %v3969 = vpop.f32.mrb[0].mxu0
        %v3970 = vadd.f32 0.0, %v3969
        %3971 = vdwg.mxu0
        %3972 = vmatprep.subr.mxu0 %v3797
        %3973 = vmatpush1.msra.mxu0 %v3796
        %3974 = vmatprep.subr.mxu0 %v3805
        %3975 = vmatpush1.msra.mxu0 %v3804
        %3976 = vmatprep.subr.mxu0 %v3813
        %3977 = vmatpush1.msra.mxu0 %v3812
        %3978 = vmatprep.subr.mxu0 %v3821
        %3979 = vmatpush1.msra.mxu0 %v3820
        %3980 = vmatprep.subr.mxu0 %v3829
        %3981 = vmatpush1.msra.mxu0 %v3828
        %3982 = vmatprep.subr.mxu0 %v3837
        %3983 = vmatpush1.msra.mxu0 %v3836
        %3984 = vmatprep.subr.mxu0 %v3845
        %3985 = vmatpush1.msra.mxu0 %v3844
        %3986 = vmatprep.subr.mxu0 %v3853
        %3987 = vmatpush1.msra.mxu0 %v3852
        %3988 = vmatprep.subr.mxu0 %v3861
        %3989 = vmatpush1.msra.mxu0 %v3860
        %3990 = vmatprep.subr.mxu0 0.0
        %3991 = vmatpush1.msra.mxu0 0.0
        %3992 = vmatprep.subr.mxu0 0.0
        %3993 = vmatpush1.msra.mxu0 0.0
        %3994 = vmatprep.subr.mxu0 0.0
        %3995 = vmatpush1.msra.mxu0 0.0
        %3996 = vmatprep.subr.mxu0 0.0
        %3997 = vmatpush1.msra.mxu0 0.0
        %3998 = vmatprep.subr.mxu0 0.0
        %3999 = vmatpush1.msra.mxu0 0.0
        %4000 = vmatprep.subr.mxu0 0.0
        %4001 = vmatpush1.msra.mxu0 0.0
        %4002 = vmatprep.subr.mxu0 0.0
        %4003 = vmatpush1.msra.mxu0 0.0
        %4004 = vmatprep.subr.mxu0 0.0
        %4005 = vmatpush1.msra.mxu0 0.0
        %4006 = vmatprep.subr.mxu0 0.0
        %4007 = vmatpush1.msra.mxu0 0.0
        %4008 = vmatprep.subr.mxu0 0.0
        %4009 = vmatpush1.msra.mxu0 0.0
        %4010 = vmatprep.subr.mxu0 0.0
        %4011 = vmatpush1.msra.mxu0 0.0
        %4012 = vmatprep.subr.mxu0 0.0
        %4013 = vmatpush1.msra.mxu0 0.0
        %4014 = vmatprep.subr.mxu0 0.0
        %4015 = vmatpush1.msra.mxu0 0.0
        %4016 = vmatprep.subr.mxu0 0.0
        %4017 = vmatpush1.msra.mxu0 0.0
        %4018 = vmatprep.subr.mxu0 0.0
        %4019 = vmatpush1.msra.mxu0 0.0
        %4020 = vmatprep.subr.mxu0 0.0
        %4021 = vmatpush1.msra.mxu0 0.0
        %4022 = vmatprep.subr.mxu0 0.0
        %4023 = vmatpush1.msra.mxu0 0.0
        %4024 = vmatprep.subr.mxu0 0.0
        %4025 = vmatpush1.msra.mxu0 0.0
        %4026 = vmatprep.subr.mxu0 0.0
        %4027 = vmatpush1.msra.mxu0 0.0
        %4028 = vmatprep.subr.mxu0 0.0
        %4029 = vmatpush1.msra.mxu0 0.0
        %4030 = vmatprep.subr.mxu0 0.0
        %4031 = vmatpush1.msra.mxu0 0.0
        %4032 = vmatprep.subr.mxu0 0.0
        %4033 = vmatpush1.msra.mxu0 0.0
        %4034 = vmatprep.subr.mxu0 0.0
        %4035 = vmatpush1.msra.mxu0 0.0
        %4036 = vmatprep.mubr.f32.mxu0 0.0
        %4037 = vmatmul.mubr.f32.gmra.mrb[0].mxu0 %v3872
        %v4038 = vpop.f32.mrb[0].mxu0
        %v4039 = vadd.f32 0.0, %v4038
        %v4040 = vpop.f32.mrb[0].mxu0
        %v4041 = vadd.f32 0.0, %v4040
        %4042 = vmatprep.mubr.f32.mxu0 0.0
        %4043 = vmatmul.mubr.f32.gmra.mrb[0].mxu0 %v3875
        %v4044 = vpop.f32.mrb[0].mxu0
        %v4045 = vadd.f32 0.0, %v4044
        %v4046 = vpop.f32.mrb[0].mxu0
        %v4047 = vadd.f32 0.0, %v4046
        %4048 = vmatprep.mubr.f32.mxu0 0.0
        %4049 = vmatmul.mubr.f32.gmra.mrb[0].mxu0 %v3878
        %v4050 = vpop.f32.mrb[0].mxu0
        %v4051 = vadd.f32 0.0, %v4050
        %v4052 = vpop.f32.mrb[0].mxu0
        %v4053 = vadd.f32 0.0, %v4052
        %4054 = vmatprep.mubr.f32.mxu0 0.0
        %4055 = vmatmul.mubr.f32.gmra.mrb[0].mxu0 %v3881
        %v4056 = vpop.f32.mrb[0].mxu0
        %v4057 = vadd.f32 0.0, %v4056
        %v4058 = vpop.f32.mrb[0].mxu0
        %v4059 = vadd.f32 0.0, %v4058
        %4060 = vdwg.mxu0
        %4061 = vmatprep.subr.mxu0 %v3799
        %4062 = vmatpush1.msra.mxu0 %v3798
        %4063 = vmatprep.subr.mxu0 %v3807
        %4064 = vmatpush1.msra.mxu0 %v3806
        %4065 = vmatprep.subr.mxu0 %v3815
        %4066 = vmatpush1.msra.mxu0 %v3814
        %4067 = vmatprep.subr.mxu0 %v3823
        %4068 = vmatpush1.msra.mxu0 %v3822
        %4069 = vmatprep.subr.mxu0 %v3831
        %4070 = vmatpush1.msra.mxu0 %v3830
        %4071 = vmatprep.subr.mxu0 %v3839
        %4072 = vmatpush1.msra.mxu0 %v3838
        %4073 = vmatprep.subr.mxu0 %v3847
        %4074 = vmatpush1.msra.mxu0 %v3846
        %4075 = vmatprep.subr.mxu0 %v3855
        %4076 = vmatpush1.msra.mxu0 %v3854
        %4077 = vmatprep.subr.mxu0 %v3863
        %4078 = vmatpush1.msra.mxu0 %v3862
        %4079 = vmatprep.subr.mxu0 0.0
        %4080 = vmatpush1.msra.mxu0 0.0
        %4081 = vmatprep.subr.mxu0 0.0
        %4082 = vmatpush1.msra.mxu0 0.0
        %4083 = vmatprep.subr.mxu0 0.0
        %4084 = vmatpush1.msra.mxu0 0.0
        %4085 = vmatprep.subr.mxu0 0.0
        %4086 = vmatpush1.msra.mxu0 0.0
        %4087 = vmatprep.subr.mxu0 0.0
        %4088 = vmatpush1.msra.mxu0 0.0
        %4089 = vmatprep.subr.mxu0 0.0
        %4090 = vmatpush1.msra.mxu0 0.0
        %4091 = vmatprep.subr.mxu0 0.0
        %4092 = vmatpush1.msra.mxu0 0.0
        %4093 = vmatprep.subr.mxu0 0.0
        %4094 = vmatpush1.msra.mxu0 0.0
        %4095 = vmatprep.subr.mxu0 0.0
        %4096 = vmatpush1.msra.mxu0 0.0
        %4097 = vmatprep.subr.mxu0 0.0
        %4098 = vmatpush1.msra.mxu0 0.0
        %4099 = vmatprep.subr.mxu0 0.0
        %4100 = vmatpush1.msra.mxu0 0.0
        %4101 = vmatprep.subr.mxu0 0.0
        %4102 = vmatpush1.msra.mxu0 0.0
        %4103 = vmatprep.subr.mxu0 0.0
        %4104 = vmatpush1.msra.mxu0 0.0
        %4105 = vmatprep.subr.mxu0 0.0
        %4106 = vmatpush1.msra.mxu0 0.0
        %4107 = vmatprep.subr.mxu0 0.0
        %4108 = vmatpush1.msra.mxu0 0.0
        %4109 = vmatprep.subr.mxu0 0.0
        %4110 = vmatpush1.msra.mxu0 0.0
        %4111 = vmatprep.subr.mxu0 0.0
        %4112 = vmatpush1.msra.mxu0 0.0
        %4113 = vmatprep.subr.mxu0 0.0
        %4114 = vmatpush1.msra.mxu0 0.0
        %4115 = vmatprep.subr.mxu0 0.0
        %4116 = vmatpush1.msra.mxu0 0.0
        %4117 = vmatprep.subr.mxu0 0.0
        %4118 = vmatpush1.msra.mxu0 0.0
        %4119 = vmatprep.subr.mxu0 0.0
        %4120 = vmatpush1.msra.mxu0 0.0
        %4121 = vmatprep.subr.mxu0 0.0
        %4122 = vmatpush1.msra.mxu0 0.0
        %4123 = vmatprep.subr.mxu0 0.0
        %4124 = vmatpush1.msra.mxu0 0.0
        %4125 = vmatprep.mubr.f32.mxu0 0.0
        %4126 = vmatmul.mubr.f32.gmra.mrb[0].mxu0 %v3872
        %v4127 = vpop.f32.mrb[0].mxu0
        %v4128 = vadd.f32 0.0, %v4127
        %v4129 = vpop.f32.mrb[0].mxu0
        %v4130 = vadd.f32 0.0, %v4129
        %4131 = vmatprep.mubr.f32.mxu0 0.0
        %4132 = vmatmul.mubr.f32.gmra.mrb[0].mxu0 %v3875
        %v4133 = vpop.f32.mrb[0].mxu0
        %v4134 = vadd.f32 0.0, %v4133
        %v4135 = vpop.f32.mrb[0].mxu0
        %v4136 = vadd.f32 0.0, %v4135
        %4137 = vmatprep.mubr.f32.mxu0 0.0
        %4138 = vmatmul.mubr.f32.gmra.mrb[0].mxu0 %v3878
        %v4139 = vpop.f32.mrb[0].mxu0
        %v4140 = vadd.f32 0.0, %v4139
        %v4141 = vpop.f32.mrb[0].mxu0
        %v4142 = vadd.f32 0.0, %v4141
        %4143 = vmatprep.mubr.f32.mxu0 0.0
        %4144 = vmatmul.mubr.f32.gmra.mrb[0].mxu0 %v3881
        %v4145 = vpop.f32.mrb[0].mxu0
        %v4146 = vadd.f32 0.0, %v4145
        %v4147 = vpop.f32.mrb[0].mxu0
        %v4148 = vadd.f32 0.0, %v4147
        %4149 = vdwg.mxu0
        %4150 = vmatprep.subr.mxu0 %v3801
        %4151 = vmatpush1.msra.mxu0 %v3800
        %4152 = vmatprep.subr.mxu0 %v3809
        %4153 = vmatpush1.msra.mxu0 %v3808
        %4154 = vmatprep.subr.mxu0 %v3817
        %4155 = vmatpush1.msra.mxu0 %v3816
        %4156 = vmatprep.subr.mxu0 %v3825
        %4157 = vmatpush1.msra.mxu0 %v3824
        %4158 = vmatprep.subr.mxu0 %v3833
        %4159 = vmatpush1.msra.mxu0 %v3832
        %4160 = vmatprep.subr.mxu0 %v3841
        %4161 = vmatpush1.msra.mxu0 %v3840
        %4162 = vmatprep.subr.mxu0 %v3849
        %4163 = vmatpush1.msra.mxu0 %v3848
        %4164 = vmatprep.subr.mxu0 %v3857
        %4165 = vmatpush1.msra.mxu0 %v3856
        %4166 = vmatprep.subr.mxu0 %v3865
        %4167 = vmatpush1.msra.mxu0 %v3864
        %4168 = vmatprep.subr.mxu0 0.0
        %4169 = vmatpush1.msra.mxu0 0.0
        %4170 = vmatprep.subr.mxu0 0.0
        %4171 = vmatpush1.msra.mxu0 0.0
        %4172 = vmatprep.subr.mxu0 0.0
        %4173 = vmatpush1.msra.mxu0 0.0
        %4174 = vmatprep.subr.mxu0 0.0
        %4175 = vmatpush1.msra.mxu0 0.0
        %4176 = vmatprep.subr.mxu0 0.0
        %4177 = vmatpush1.msra.mxu0 0.0
        %4178 = vmatprep.subr.mxu0 0.0
        %4179 = vmatpush1.msra.mxu0 0.0
        %4180 = vmatprep.subr.mxu0 0.0
        %4181 = vmatpush1.msra.mxu0 0.0
        %4182 = vmatprep.subr.mxu0 0.0
        %4183 = vmatpush1.msra.mxu0 0.0
        %4184 = vmatprep.subr.mxu0 0.0
        %4185 = vmatpush1.msra.mxu0 0.0
        %4186 = vmatprep.subr.mxu0 0.0
        %4187 = vmatpush1.msra.mxu0 0.0
        %4188 = vmatprep.subr.mxu0 0.0
        %4189 = vmatpush1.msra.mxu0 0.0
        %4190 = vmatprep.subr.mxu0 0.0
        %4191 = vmatpush1.msra.mxu0 0.0
        %4192 = vmatprep.subr.mxu0 0.0
        %4193 = vmatpush1.msra.mxu0 0.0
        %4194 = vmatprep.subr.mxu0 0.0
        %4195 = vmatpush1.msra.mxu0 0.0
        %4196 = vmatprep.subr.mxu0 0.0
        %4197 = vmatpush1.msra.mxu0 0.0
        %4198 = vmatprep.subr.mxu0 0.0
        %4199 = vmatpush1.msra.mxu0 0.0
        %4200 = vmatprep.subr.mxu0 0.0
        %4201 = vmatpush1.msra.mxu0 0.0
        %4202 = vmatprep.subr.mxu0 0.0
        %4203 = vmatpush1.msra.mxu0 0.0
        %4204 = vmatprep.subr.mxu0 0.0
        %4205 = vmatpush1.msra.mxu0 0.0
        %4206 = vmatprep.subr.mxu0 0.0
        %4207 = vmatpush1.msra.mxu0 0.0
        %4208 = vmatprep.subr.mxu0 0.0
        %4209 = vmatpush1.msra.mxu0 0.0
        %4210 = vmatprep.subr.mxu0 0.0
        %4211 = vmatpush1.msra.mxu0 0.0
        %4212 = vmatprep.subr.mxu0 0.0
        %4213 = vmatpush1.msra.mxu0 0.0
        %4214 = vmatprep.mubr.f32.mxu0 0.0
        %4215 = vmatmul.mubr.f32.gmra.mrb[0].mxu0 %v3872
        %v4216 = vpop.f32.mrb[0].mxu0
        %v4217 = vadd.f32 0.0, %v4216
        %v4218 = vpop.f32.mrb[0].mxu0
        %v4219 = vadd.f32 0.0, %v4218
        %4220 = vmatprep.mubr.f32.mxu0 0.0
        %4221 = vmatmul.mubr.f32.gmra.mrb[0].mxu0 %v3875
        %v4222 = vpop.f32.mrb[0].mxu0
        %v4223 = vadd.f32 0.0, %v4222
        %v4224 = vpop.f32.mrb[0].mxu0
        %v4225 = vadd.f32 0.0, %v4224
        %4226 = vmatprep.mubr.f32.mxu0 0.0
        %4227 = vmatmul.mubr.f32.gmra.mrb[0].mxu0 %v3878
        %v4228 = vpop.f32.mrb[0].mxu0
        %v4229 = vadd.f32 0.0, %v4228
        %v4230 = vpop.f32.mrb[0].mxu0
        %v4231 = vadd.f32 0.0, %v4230
        %4232 = vmatprep.mubr.f32.mxu0 0.0
        %4233 = vmatmul.mubr.f32.gmra.mrb[0].mxu0 %v3881
        %v4234 = vpop.f32.mrb[0].mxu0
        %v4235 = vadd.f32 0.0, %v4234
        %v4236 = vpop.f32.mrb[0].mxu0
        %v4237 = vadd.f32 0.0, %v4236
        %4238 = vdwg.mxu0
        %v4239 = vmax.f32 %v3950, 0.0
        %v4240 = vmax.f32 %v3952, 0.0
        %v4241 = vmax.f32 %v4039, 0.0
        %v4242 = vmax.f32 %v4041, 0.0
        %v4243 = vmax.f32 %v4128, 0.0
        %v4244 = vmax.f32 %v4130, 0.0
        %v4245 = vmax.f32 %v4217, 0.0
        %v4246 = vmax.f32 %v4219, 0.0
        %v4247 = vmax.f32 %v3956, 0.0
        %v4248 = vmax.f32 %v3958, 0.0
        %v4249 = vmax.f32 %v4045, 0.0
        %v4250 = vmax.f32 %v4047, 0.0
        %v4251 = vmax.f32 %v4134, 0.0
        %v4252 = vmax.f32 %v4136, 0.0
        %v4253 = vmax.f32 %v4223, 0.0
        %v4254 = vmax.f32 %v4225, 0.0
        %v4255 = vmax.f32 %v3962, 0.0
        %v4256 = vmax.f32 %v3964, 0.0
        %v4257 = vmax.f32 %v4051, 0.0
        %v4258 = vmax.f32 %v4053, 0.0
        %v4259 = vmax.f32 %v4140, 0.0
        %v4260 = vmax.f32 %v4142, 0.0
        %v4261 = vmax.f32 %v4229, 0.0
        %v4262 = vmax.f32 %v4231, 0.0
        %v4263 = vmax.f32 %v3968, 0.0
        %v4264 = vmax.f32 %v3970, 0.0
        %v4265 = vmax.f32 %v4057, 0.0
        %v4266 = vmax.f32 %v4059, 0.0
        %v4267 = vmax.f32 %v4146, 0.0
        %v4268 = vmax.f32 %v4148, 0.0
        %v4269 = vmax.f32 %v4235, 0.0
        %v4270 = vmax.f32 %v4237, 0.0
        %4271 = vst [vmem:[%s191] sm:$0xff] %v4239
        %4272 = vst [vmem:[%s191 + $0x8] sm:$0xff] %v4240
        %4273 = vst [vmem:[%s191 + $0x10] sm:$0xff] %v4241
        %4274 = vst [vmem:[%s191 + $0x18] sm:$0xff] %v4242
        %4275 = vst [vmem:[%s191 + $0x20] sm:$0xff] %v4243
        %4276 = vst [vmem:[%s191 + $0x28] sm:$0xff] %v4244
        %4277 = vst [vmem:[%s191 + $0x30] sm:$0xff] %v4245
        %4278 = vst [vmem:[%s191 + $0x38] sm:$0xff] %v4246
        %4279 = vst [vmem:[%s191 + $0x40] sm:$0xff] %v4247
        %4280 = vst [vmem:[%s191 + $0x48] sm:$0xff] %v4248
        %4281 = vst [vmem:[%s191 + $0x50] sm:$0xff] %v4249
        %4282 = vst [vmem:[%s191 + $0x58] sm:$0xff] %v4250
        %4283 = vst [vmem:[%s191 + $0x60] sm:$0xff] %v4251
        %4284 = vst [vmem:[%s191 + $0x68] sm:$0xff] %v4252
        %4285 = vst [vmem:[%s191 + $0x70] sm:$0xff] %v4253
        %4286 = vst [vmem:[%s191 + $0x78] sm:$0xff] %v4254
        %4287 = vst [vmem:[%s191 + $0x80] sm:$0xff] %v4255
        %4288 = vst [vmem:[%s191 + $0x88] sm:$0xff] %v4256
        %4289 = vst [vmem:[%s191 + $0x90] sm:$0xff] %v4257
        %4290 = vst [vmem:[%s191 + $0x98] sm:$0xff] %v4258
        %4291 = vst [vmem:[%s191 + $0xa0] sm:$0xff] %v4259
        %4292 = vst [vmem:[%s191 + $0xa8] sm:$0xff] %v4260
        %4293 = vst [vmem:[%s191 + $0xb0] sm:$0xff] %v4261
        %4294 = vst [vmem:[%s191 + $0xb8] sm:$0xff] %v4262
        %4295 = vst [vmem:[%s191 + $0xc0] sm:$0xff] %v4263
        %4296 = vst [vmem:[%s191 + $0xc8] sm:$0xff] %v4264
        %4297 = vst [vmem:[%s191 + $0xd0] sm:$0xff] %v4265
        %4298 = vst [vmem:[%s191 + $0xd8] sm:$0xff] %v4266
        %4299 = vst [vmem:[%s191 + $0xe0] sm:$0xff] %v4267
        %4300 = vst [vmem:[%s191 + $0xe8] sm:$0xff] %v4268
        %4301 = vst [vmem:[%s191 + $0xf0] sm:$0xff] %v4269
        %4302 = vst [vmem:[%s191 + $0xf8] sm:$0xff] %v4270
        %v4303 = vadd.f32 %v963, %v3273
        %v4304 = vadd.f32 %v965, %v3274
        %v4305 = vadd.f32 %v1673, %v3275
        %v4306 = vadd.f32 %v1675, %v3276
        %v4307 = vadd.f32 %v2383, %v3277
        %v4308 = vadd.f32 %v2385, %v3278
        %v4309 = vadd.f32 %v3093, %v3279
        %v4310 = vadd.f32 %v3095, %v3280
        %4311 = vst [vmem:[%s191 + $0x100] sm:$0xff] %v4303
        %4312 = vst [vmem:[%s191 + $0x108] sm:$0xff] %v4304
        %4313 = vst [vmem:[%s191 + $0x110] sm:$0xff] %v4305
        %4314 = vst [vmem:[%s191 + $0x118] sm:$0xff] %v4306
        %4315 = vst [vmem:[%s191 + $0x120] sm:$0xff] %v4307
        %4316 = vst [vmem:[%s191 + $0x128] sm:$0xff] %v4308
        %4317 = vst [vmem:[%s191 + $0x130] sm:$0xff] %v4309
        %4318 = vst [vmem:[%s191 + $0x138] sm:$0xff] %v4310
        %s4319 = sand.u32 %s115, 1
        %s4320 = scalar_lea.sflag [#allocation3], %s4319
        %s4321 = sand.u32 %s115, 1
        %s4322 = smul.addr %s4321, 320
        %s4323 = scalar_lea.vmem [#allocation2], %s4322
        // Predicated region
        $region37: #{tpu_custom_call.1} parent=35 // pred_check
          %p4324 = pneg %p125
        $region38: #{tpu_custom_call.1} parent=35 // pred_check_branch
          %4326 = sbr.rel (%p4324) target = $region40
        $region39: #{tpu_custom_call.1} parent=35 // pred_region
          %s4327 = smul.u32 8, %s18
          %s4329 = ssub.s32 5120, 5120
          %4330 = vsyncadd %s4320, %s4329
          %s4331 = smul.addr %s4327, 128
          %s4332 = scalar_lea.hbm %s4, %s4331
          %s4333 = sshll.u32 %s4323, 4
          %s4334 = int_to_ptr.vmem [resolvable:$true] %s4333
          %4339 = dma.vmem_to_hbm [thread:$0]  %s4334, 5120, %s4332, %s4320, 1024, 2048, 64
        $region40: #{tpu_custom_call.1} parent=35 // pred_fallthru
          _
      $region36: #{tpu_custom_call.1} parent=5 // pred_fallthru
        _
      %p4340 = scmp.le.s32.totalorder 2, %s13
      // Predicated region
      $region41: #{tpu_custom_call.1} parent=5 // pred_check
        %p4341 = pneg %p4340
      $region42: #{tpu_custom_call.1} parent=5 // pred_check_branch
        %4343 = sbr.rel (%p4341) target = $region44
      $region43: #{tpu_custom_call.1} parent=5 // pred_region
        %s4344 = ssub.s32 %s13, 2
        // Predicated region
        $region45: #{tpu_custom_call.1} parent=43 // pred_check
          %p4345 = pneg %p131
        $region46: #{tpu_custom_call.1} parent=43 // pred_check_branch
          %4347 = sbr.rel (%p4345) target = $region48
        $region47: #{tpu_custom_call.1} parent=43 // pred_region
          %s4348 = sand.u32 %s116, 1
          %s4349 = scalar_lea.sflag [#allocation3], %s4348
          %s4350 = sand.u32 %s116, 1
          %s4351 = smul.addr %s4350, 320
          %s4352 = scalar_lea.vmem [#allocation2], %s4351
          %4353 = dma.done %s4349, 5120
        $region48: #{tpu_custom_call.1} parent=43 // pred_fallthru
          _
      $region44: #{tpu_custom_call.1} parent=5 // pred_fallthru
        _
    $region6: #{tpu_custom_call.1} parent=1 // loop_footer
      %s17 = sadd.s32 1, %s13
    $region7: #{tpu_custom_call.1} parent=1 // loop_footer_branch
      %12 = sbr.rel target = $region3
    $region8: #{tpu_custom_call.1} parent=1 // loop_exit
      _
    %4354 = vsyncpa [#allocation3], 1
    %s4355 = scalar_lea.sflag [#allocation3], 1
    %4356 = vsyncpa %s4355, 1

</llo_original>
